<compile_context>
chip_gen: v6e
topology: v6e:2x2x1
jax: 0.10.0
libtpu: 0.0.40
codegen_flags: <defaults>
</compile_context>

<pallas_src>
import functools

import jax
import jax.numpy as jnp
import numpy as np
from jax import lax
from jax.experimental import pallas as pl
from jax.experimental.pallas import tpu as pltpu


# ------------------------------- helpers ------------------------------------


def _round_up(x, m):
    return (x + m - 1) // m * m


def _largest_divisor_leq(n, target):
    for t in range(min(n, target), 0, -1):
        if n % t == 0:
            return t
    return 1


# ----------------------------- Pallas kernels -------------------------------


def _gru_tile(x_ref, h0_ref, wx_ref, whzr_ref, whg_ref, b_ref,
              y_dst, hT_ref, h_scr, xp_scr):
    """One sequence tile of one GRU layer (grid axis 0 = sequence tiles).

    x_ref   : (tS, Bp, Dxp)  input tile, time-major, zero-padded
    h0_ref  : (Bp, Hp)       initial hidden state (padded)
    wx_ref  : (Dxp, 3*Hp)    concat([Wxz, Wxr, Wxg])  (x @ W layout)
    whzr_ref: (Hp, 2*Hp)     concat([Whz, Whr])
    whg_ref : (Hp, Hp)
    b_ref   : (1, 3*Hp)      concat([bz, br, bg])
    y_dst   : (tS, Bp, Hp)   per-step hidden states (output ref or VMEM scratch)
    hT_ref  : (Bp, Hp)       final hidden state (written at last grid step)
    h_scr   : (Bp, Hp) f32   hidden state carried across grid steps
    xp_scr  : (tS, Bp, 3Hp) f32  hoisted input projections for this tile
    """
    i = pl.program_id(0)

    @pl.when(i == 0)
    def _():
        h_scr[...] = h0_ref[...].astype(jnp.float32)

    tS, Bp, Dxp = x_ref.shape
    Hp = h_scr.shape[-1]

    # Hoisted input-side projection: one wide (tS*Bp, Dxp) @ (Dxp, 3Hp) GEMM.
    xp = jnp.dot(x_ref[...].reshape(tS * Bp, Dxp), wx_ref[...],
                 preferred_element_type=jnp.float32) + b_ref[...]
    xp_scr[...] = xp.reshape(tS, Bp, 3 * Hp)

    whzr = whzr_ref[...]
    whg = whg_ref[...]

    def step(s, h):
        xps = xp_scr[s]                                             # (Bp, 3Hp)
        zr = jnp.dot(h, whzr, preferred_element_type=jnp.float32)   # (Bp, 2Hp)
        z = jax.nn.sigmoid(xps[:, :Hp] + zr[:, :Hp])
        r = jax.nn.sigmoid(xps[:, Hp:2 * Hp] + zr[:, Hp:])
        g = jnp.tanh(xps[:, 2 * Hp:]
                     + jnp.dot(r * h, whg, preferred_element_type=jnp.float32))
        h_new = z * h + (1.0 - z) * g
        y_dst[s] = h_new.astype(y_dst.dtype)
        return h_new

    # Fully unrolled: tS is a small static tile, gives the scheduler visibility.
    h_final = lax.fori_loop(0, tS, step, h_scr[...], unroll=True)
    h_scr[...] = h_final

    @pl.when(i == pl.num_programs(0) - 1)
    def _():
        hT_ref[...] = h_final.astype(hT_ref.dtype)


def _gru_layer_kernel(x_ref, h0_ref, wx_ref, whzr_ref, whg_ref, b_ref,
                      y_ref, hT_ref, h_scr, xp_scr):
    """Non-final GRU layer: emits the per-step hidden states."""
    _gru_tile(x_ref, h0_ref, wx_ref, whzr_ref, whg_ref, b_ref,
              y_ref, hT_ref, h_scr, xp_scr)


def _gru_layer_proj_kernel(x_ref, h0_ref, wx_ref, whzr_ref, whg_ref, b_ref,
                           wy_ref, by_ref, out_ref, hT_ref,
                           h_scr, xp_scr, y_scr):
    """Final GRU layer with the output Linear fused (no HBM round-trip of y)."""
    _gru_tile(x_ref, h0_ref, wx_ref, whzr_ref, whg_ref, b_ref,
              y_scr, hT_ref, h_scr, xp_scr)
    tS, Bp, Hp = y_scr.shape
    Op = out_ref.shape[-1]
    out = (jnp.dot(y_scr[...].reshape(tS * Bp, Hp), wy_ref[...],
                   preferred_element_type=jnp.float32) + by_ref[...])
    out_ref[...] = out.reshape(tS, Bp, Op).astype(out_ref.dtype)


# ------------------------------ pallas_call wrappers -------------------------


def _full_spec(arr):
    nd = arr.ndim
    return pl.BlockSpec(arr.shape, lambda i: (0,) * nd)


_COMPILER_PARAMS = pltpu.CompilerParams(
    dimension_semantics=("arbitrary",),          # sequential recurrence over S
    vmem_limit_bytes=32 * 1024 * 1024,           # explicit; safe on v5e/v6e/v7x
)


def _run_gru_layer(x_tm, h0, wx, whzr, whg, b_all, tS):
    S, Bp, Dxp = x_tm.shape
    Hp = h0.shape[-1]
    return pl.pallas_call(
        _gru_layer_kernel,
        out_shape=(jax.ShapeDtypeStruct((S, Bp, Hp), x_tm.dtype),
                   jax.ShapeDtypeStruct((Bp, Hp), x_tm.dtype)),
        grid_spec=pltpu.PrefetchScalarGridSpec(
            num_scalar_prefetch=0,
            grid=(S // tS,),
            in_specs=[
                pl.BlockSpec((tS, Bp, Dxp), lambda i: (i, 0, 0)),
                _full_spec(h0), _full_spec(wx), _full_spec(whzr),
                _full_spec(whg), _full_spec(b_all),
            ],
            out_specs=(
                pl.BlockSpec((tS, Bp, Hp), lambda i: (i, 0, 0)),
                pl.BlockSpec((Bp, Hp), lambda i: (0, 0)),
            ),
            scratch_shapes=[
                pltpu.VMEM((Bp, Hp), jnp.float32),          # carried h
                pltpu.VMEM((tS, Bp, 3 * Hp), jnp.float32),  # hoisted x-proj
            ],
        ),
        compiler_params=_COMPILER_PARAMS,
    )(x_tm, h0, wx, whzr, whg, b_all)


def _run_gru_layer_proj(x_tm, h0, wx, whzr, whg, b_all, wy, by, tS):
    S, Bp, Dxp = x_tm.shape
    Hp = h0.shape[-1]
    Op = wy.shape[-1]
    return pl.pallas_call(
        _gru_layer_proj_kernel,
        out_shape=(jax.ShapeDtypeStruct((S, Bp, Op), x_tm.dtype),
                   jax.ShapeDtypeStruct((Bp, Hp), x_tm.dtype)),
        grid_spec=pltpu.PrefetchScalarGridSpec(
            num_scalar_prefetch=0,
            grid=(S // tS,),
            in_specs=[
                pl.BlockSpec((tS, Bp, Dxp), lambda i: (i, 0, 0)),
                _full_spec(h0), _full_spec(wx), _full_spec(whzr),
                _full_spec(whg), _full_spec(b_all),
                _full_spec(wy), _full_spec(by),
            ],
            out_specs=(
                pl.BlockSpec((tS, Bp, Op), lambda i: (i, 0, 0)),
                pl.BlockSpec((Bp, Hp), lambda i: (0, 0)),
            ),
            scratch_shapes=[
                pltpu.VMEM((Bp, Hp), jnp.float32),          # carried h
                pltpu.VMEM((tS, Bp, 3 * Hp), jnp.float32),  # hoisted x-proj
                pltpu.VMEM((tS, Bp, Hp), jnp.float32),      # y tile (stays in VMEM)
            ],
        ),
        compiler_params=_COMPILER_PARAMS,
    )(x_tm, h0, wx, whzr, whg, b_all, wy, by)


# --------------------------- weight packing / forward ------------------------


def _pack_layer(lp, dxp, hp):
    """Pack + zero-pad one layer's weights to lane/sublane-aligned shapes."""
    def padw(w):   # (dx, H) -> (dxp, hp)
        return jnp.pad(w, ((0, dxp - w.shape[0]), (0, hp - w.shape[1])))

    def padh(w):   # (H, H) -> (hp, hp)
        return jnp.pad(w, ((0, hp - w.shape[0]), (0, hp - w.shape[1])))

    def padb(b):   # (1, H) -> (1, hp)
        return jnp.pad(b, ((0, 0), (0, hp - b.shape[1])))

    wx = jnp.concatenate([padw(lp['wxz']), padw(lp['wxr']), padw(lp['wxg'])],
                         axis=1)                                   # (dxp, 3hp)
    whzr = jnp.concatenate([padh(lp['whz']), padh(lp['whr'])], axis=1)  # (hp, 2hp)
    whg = padh(lp['whg'])                                          # (hp, hp)
    b_all = jnp.concatenate([padb(lp['bz']), padb(lp['br']), padb(lp['bg'])],
                            axis=1)                                # (1, 3hp)
    return wx, whzr, whg, b_all


@jax.jit
def multilayer_gru_forward(params, x, hidden_state=None):
    """Pallas implementation of MultilayerGRU.forward.

    x:            (B, S, I)
    hidden_state: (B, L, H) or None
    returns (layer_output (B, S, O), hidden_state (B, L, H))
    """
    B, S, I = x.shape
    layers = params['layers']
    n_layers = len(layers)
    H = layers[0]['whg'].shape[0]
    O = params['why_w'].shape[1]
    dtype = x.dtype

    Bp = _round_up(B, 8)       # sublane multiple
    Hp = _round_up(H, 128)     # lane multiple -> lane-dense stores, wide MXU N
    Op = _round_up(O, 128)
    Ip = _round_up(I, 128)
    # Time loop is fully unrolled per grid step -> keep the sequence tile small.
    tS = _largest_divisor_leq(S, 8)

    # Time-major, zero-pad batch (sublanes) and features (lanes).
    x_tm = jnp.transpose(x, (1, 0, 2))
    x_tm = jnp.pad(x_tm, ((0, 0), (0, Bp - B), (0, Ip - I)))

    wy = jnp.pad(params['why_w'], ((0, Hp - H), (0, Op - O)))
    by = jnp.pad(params['why_b'], ((0, 0), (0, Op - O)))

    layer_in = x_tm
    out_tm = None
    finals = []
    # TODO(synk): nn.Dropout between layers not implemented (p=0 / eval => identity).
    for li in range(n_layers):
        dxp = Ip if li == 0 else Hp
        wx, whzr, whg, b_all = _pack_layer(layers[li], dxp, Hp)
        if hidden_state is None:
            h0 = jnp.zeros((Bp, Hp), dtype)
        else:
            h0 = jnp.pad(hidden_state[:, li, :].astype(dtype),
                         ((0, Bp - B), (0, Hp - H)))
        if li == n_layers - 1:
            out_tm, hT = _run_gru_layer_proj(layer_in, h0, wx, whzr, whg, b_all,
                                             wy, by, tS)
        else:
            layer_in, hT = _run_gru_layer(layer_in, h0, wx, whzr, whg, b_all, tS)
        finals.append(hT[:B, :H])

    layer_output = jnp.transpose(out_tm[:, :B, :O], (1, 0, 2))     # (B, S, O)
    hidden_out = jnp.stack(finals, axis=1)                         # (B, L, H)
    return layer_output, hidden_out


# --------------------------- deterministic param init ------------------------


def init_params(key, in_dim, h_dim, out_dim, n_layers, dtype=jnp.float32):
    """Mimics torch.nn.Linear default init U(-1/sqrt(fan_in), 1/sqrt(fan_in)).

    Weights are stored already transposed to (fan_in, fan_out) so the kernels
    compute x @ W (equivalent to torch's x @ W.T with W of shape (out, in)).
    """
    def lin(k, fan_in, fan_out, bias):
        bound = 1.0 / np.sqrt(fan_in)
        kw, kb = jax.random.split(k)
        w = jax.random.uniform(kw, (fan_in, fan_out), dtype, -bound, bound)
        b = (jax.random.uniform(kb, (1, fan_out), dtype, -bound, bound)
             if bias else None)
        return w, b

    layers = []
    for i in range(n_layers):
        x_dim = in_dim if i == 0 else h_dim
        key, *ks = jax.random.split(key, 7)
        wxz, _ = lin(ks[0], x_dim, h_dim, bias=False)
        whz, bz = lin(ks[1], h_dim, h_dim, bias=True)
        wxr, _ = lin(ks[2], x_dim, h_dim, bias=False)
        whr, br = lin(ks[3], h_dim, h_dim, bias=True)
        wxg, _ = lin(ks[4], x_dim, h_dim, bias=False)
        whg, bg = lin(ks[5], h_dim, h_dim, bias=True)
        layers.append(dict(wxz=wxz, whz=whz, bz=bz,
                           wxr=wxr, whr=whr, br=br,
                           wxg=wxg, whg=whg, bg=bg))
    key, kw = jax.random.split(key)
    why_w, why_b = lin(kw, h_dim, out_dim, bias=True)
    return dict(layers=layers, why_w=why_w, why_b=why_b)


# ----------------------------- pure-JAX reference ----------------------------


def reference_forward(params, x, hidden_state=None):
    B, S, _ = x.shape
    H = params['layers'][0]['whg'].shape[0]
    dot = functools.partial(jnp.dot, precision='highest')
    layer_input = x
    final_states = []
    for lp in params['layers']:
        h = (jnp.zeros((B, H), x.dtype) if hidden_state is None
             else hidden_state[:, len(final_states), :])
        outs = []
        for s in range(S):
            x_t = layer_input[:, s, :]
            z = jax.nn.sigmoid(dot(x_t, lp['wxz']) + dot(h, lp['whz']) + lp['bz'])
            r = jax.nn.sigmoid(dot(x_t, lp['wxr']) + dot(h, lp['whr']) + lp['br'])
            g = jnp.tanh(dot(x_t, lp['wxg']) + dot(r * h, lp['whg']) + lp['bg'])
            h = z * h + (1.0 - z) * g
            outs.append(h)
        final_states.append(h)
        layer_input = jnp.stack(outs, axis=1)
    out = dot(layer_input, params['why_w']) + params['why_b']
    return out, jnp.stack(final_states, axis=1)


# ---------------------------------- main -------------------------------------


if __name__ == "__main__":
    B, S, IN, H, OUT, L = 2, 16, 16, 32, 16, 2

    key = jax.random.PRNGKey(0)
    k_params, k_x, k_h = jax.random.split(key, 3)
    params = init_params(k_params, IN, H, OUT, L)
    x = jax.random.normal(k_x, (B, S, IN), dtype=jnp.float32)

    # Case 1: no initial hidden state.
    y, h_final = multilayer_gru_forward(params, x, None)
    jax.block_until_ready((y, h_final))
    assert y.shape == (B, S, OUT), y.shape
    assert h_final.shape == (B, L, H), h_final.shape

    y_ref, h_ref = reference_forward(params, x, None)
    np.testing.assert_allclose(np.asarray(y), np.asarray(y_ref),
                               rtol=1e-2, atol=1e-2)
    np.testing.assert_allclose(np.asarray(h_final), np.asarray(h_ref),
                               rtol=1e-2, atol=1e-2)

    # Case 2: explicit initial hidden state.
    h0 = 0.1 * jax.random.normal(k_h, (B, L, H), dtype=jnp.float32)
    y2, h2 = multilayer_gru_forward(params, x, h0)
    jax.block_until_ready((y2, h2))
    y2_ref, h2_ref = reference_forward(params, x, h0)
    np.testing.assert_allclose(np.asarray(y2), np.asarray(y2_ref),
                               rtol=1e-2, atol=1e-2)
    np.testing.assert_allclose(np.asarray(h2), np.asarray(h2_ref),
                               rtol=1e-2, atol=1e-2)

    print("KERNEL_OK")
</pallas_src>

<mosaic_0001>
module attributes {stable_mosaic.version = 11 : i64} {
  func.func @_gru_layer_kernel(%arg0: i32, %arg1: memref<8x8x128xf32, #tpu.memory_space<vmem>>, %arg2: memref<8x128xf32, #tpu.memory_space<vmem>>, %arg3: memref<128x384xf32, #tpu.memory_space<vmem>>, %arg4: memref<128x256xf32, #tpu.memory_space<vmem>>, %arg5: memref<128x128xf32, #tpu.memory_space<vmem>>, %arg6: memref<1x384xf32, #tpu.memory_space<vmem>>, %arg7: memref<8x8x128xf32, #tpu.memory_space<vmem>>, %arg8: memref<8x128xf32, #tpu.memory_space<vmem>>, %arg9: memref<8x128xf32, #tpu.memory_space<vmem>>, %arg10: memref<8x8x384xf32, #tpu.memory_space<vmem>>) attributes {dimension_semantics = [#tpu.dimension_semantics<arbitrary>], iteration_bounds = array<i64: 2>, scalar_prefetch = 0 : i64, scratch_operands = 2 : i64, tpu.core_type = #tpu.core_type<tc>, window_params = [{transform_indices = @transform_0, window_bounds = array<i64: 8, 8, 128>}, {pipeline_mode = #tpu.pipeline_mode<synchronous>, transform_indices = @transform_1, window_bounds = array<i64: 8, 128>}, {pipeline_mode = #tpu.pipeline_mode<synchronous>, transform_indices = @transform_2, window_bounds = array<i64: 128, 384>}, {pipeline_mode = #tpu.pipeline_mode<synchronous>, transform_indices = @transform_3, window_bounds = array<i64: 128, 256>}, {pipeline_mode = #tpu.pipeline_mode<synchronous>, transform_indices = @transform_4, window_bounds = array<i64: 128, 128>}, {pipeline_mode = #tpu.pipeline_mode<synchronous>, transform_indices = @transform_5, window_bounds = array<i64: 1, 384>}, {transform_indices = @transform_6, window_bounds = array<i64: 8, 8, 128>}, {pipeline_mode = #tpu.pipeline_mode<synchronous>, transform_indices = @transform_7, window_bounds = array<i64: 8, 128>}]} {
    %c0_i32 = arith.constant 0 : i32
    %0 = arith.cmpi eq, %arg0, %c0_i32 : i32
    %1 = arith.extui %0 : i1 to i32
    %c0_i32_0 = arith.constant 0 : i32
    %2 = arith.cmpi ne, %1, %c0_i32_0 : i32
    scf.if %2 {
      %c0_93 = arith.constant 0 : index
      %c0_94 = arith.constant 0 : index
      %291 = vector.load %arg2[%c0_93, %c0_94] : memref<8x128xf32, #tpu.memory_space<vmem>>, vector<8x128xf32>
      %c0_95 = arith.constant 0 : index
      %c0_96 = arith.constant 0 : index
      %292 = vector.load %arg9[%c0_95, %c0_96] : memref<8x128xf32, #tpu.memory_space<vmem>>, vector<8x128xf32>
      tpu.vector_store %arg9[%c0_95, %c0_96], %291 {strides = array<i32>} : memref<8x128xf32, #tpu.memory_space<vmem>>, vector<8x128xf32>,
    } else {
    }
    %c0 = arith.constant 0 : index
    %c0_1 = arith.constant 0 : index
    %c0_2 = arith.constant 0 : index
    %3 = vector.load %arg1[%c0, %c0_1, %c0_2] : memref<8x8x128xf32, #tpu.memory_space<vmem>>, vector<8x8x128xf32>
    %4 = vector.shape_cast %3 : vector<8x8x128xf32> to vector<64x128xf32>
    %c0_3 = arith.constant 0 : index
    %c0_4 = arith.constant 0 : index
    %5 = vector.load %arg3[%c0_3, %c0_4] : memref<128x384xf32, #tpu.memory_space<vmem>>, vector<128x384xf32>
    %cst = arith.constant dense<0.000000e+00> : vector<64x384xf32>
    %6 = tpu.matmul %4, %5, %cst {dimension_numbers = #tpu.dot_dimension_numbers<[1], [0], [0], [1], [0, 0, 1, 1], [], []>} : vector<64x128xf32>, vector<128x384xf32>, vector<64x384xf32> -> vector<64x384xf32>
    %c0_5 = arith.constant 0 : index
    %c0_6 = arith.constant 0 : index
    %7 = vector.load %arg6[%c0_5, %c0_6] : memref<1x384xf32, #tpu.memory_space<vmem>>, vector<1x384xf32>
    %8 = vector.broadcast %7 : vector<1x384xf32> to vector<64x384xf32>
    %9 = arith.addf %6, %8 : vector<64x384xf32>
    %10 = vector.shape_cast %9 : vector<64x384xf32> to vector<8x8x384xf32>
    %c0_7 = arith.constant 0 : index
    %c0_8 = arith.constant 0 : index
    %c0_9 = arith.constant 0 : index
    %11 = vector.load %arg10[%c0_7, %c0_8, %c0_9] : memref<8x8x384xf32, #tpu.memory_space<vmem>>, vector<8x8x384xf32>
    tpu.vector_store %arg10[%c0_7, %c0_8, %c0_9], %10 {strides = array<i32>} : memref<8x8x384xf32, #tpu.memory_space<vmem>>, vector<8x8x384xf32>,
    %c0_10 = arith.constant 0 : index
    %c0_11 = arith.constant 0 : index
    %12 = vector.load %arg4[%c0_10, %c0_11] : memref<128x256xf32, #tpu.memory_space<vmem>>, vector<128x256xf32>
    %c0_12 = arith.constant 0 : index
    %c0_13 = arith.constant 0 : index
    %13 = vector.load %arg5[%c0_12, %c0_13] : memref<128x128xf32, #tpu.memory_space<vmem>>, vector<128x128xf32>
    %c0_14 = arith.constant 0 : index
    %c0_15 = arith.constant 0 : index
    %14 = vector.load %arg9[%c0_14, %c0_15] : memref<8x128xf32, #tpu.memory_space<vmem>>, vector<8x128xf32>
    %c0_i32_16 = arith.constant 0 : i32
    %15 = arith.index_cast %c0_i32_16 : i32 to index
    %c0_17 = arith.constant 0 : index
    %c0_18 = arith.constant 0 : index
    %16 = vector.load %arg10[%15, %c0_17, %c0_18] : memref<8x8x384xf32, #tpu.memory_space<vmem>>, vector<1x8x384xf32>
    %17 = vector.shape_cast %16 : vector<1x8x384xf32> to vector<8x384xf32>
    %cst_19 = arith.constant dense<0.000000e+00> : vector<8x256xf32>
    %18 = tpu.matmul %14, %12, %cst_19 {dimension_numbers = #tpu.dot_dimension_numbers<[1], [0], [0], [1], [0, 0, 1, 1], [], []>} : vector<8x128xf32>, vector<128x256xf32>, vector<8x256xf32> -> vector<8x256xf32>
    %19 = vector.extract_strided_slice %17 {offsets = [0, 0], sizes = [8, 128], strides = [1, 1]} : vector<8x384xf32> to vector<8x128xf32>
    %20 = vector.extract_strided_slice %18 {offsets = [0, 0], sizes = [8, 128], strides = [1, 1]} : vector<8x256xf32> to vector<8x128xf32>
    %21 = arith.addf %19, %20 : vector<8x128xf32>
    %22 = arith.negf %21 : vector<8x128xf32>
    %23 = math.exp %22 : vector<8x128xf32>
    %cst_20 = arith.constant 1.000000e+00 : f32
    %24 = vector.broadcast %cst_20 : f32 to vector<8x128xf32>
    %25 = arith.addf %24, %23 : vector<8x128xf32>
    %26 = arith.divf %24, %25 : vector<8x128xf32>
    %27 = vector.extract_strided_slice %17 {offsets = [0, 128], sizes = [8, 128], strides = [1, 1]} : vector<8x384xf32> to vector<8x128xf32>
    %28 = vector.extract_strided_slice %18 {offsets = [0, 128], sizes = [8, 128], strides = [1, 1]} : vector<8x256xf32> to vector<8x128xf32>
    %29 = arith.addf %27, %28 : vector<8x128xf32>
    %30 = arith.negf %29 : vector<8x128xf32>
    %31 = math.exp %30 : vector<8x128xf32>
    %cst_21 = arith.constant 1.000000e+00 : f32
    %32 = vector.broadcast %cst_21 : f32 to vector<8x128xf32>
    %33 = arith.addf %32, %31 : vector<8x128xf32>
    %34 = arith.divf %32, %33 : vector<8x128xf32>
    %35 = vector.extract_strided_slice %17 {offsets = [0, 256], sizes = [8, 128], strides = [1, 1]} : vector<8x384xf32> to vector<8x128xf32>
    %36 = arith.mulf %34, %14 : vector<8x128xf32>
    %cst_22 = arith.constant dense<0.000000e+00> : vector<8x128xf32>
    %37 = tpu.matmul %36, %13, %cst_22 {dimension_numbers = #tpu.dot_dimension_numbers<[1], [0], [0], [1], [0, 0, 1, 1], [], []>} : vector<8x128xf32>, vector<128x128xf32>, vector<8x128xf32> -> vector<8x128xf32>
    %38 = arith.addf %35, %37 : vector<8x128xf32>
    %39 = math.tanh %38 : vector<8x128xf32>
    %40 = arith.mulf %26, %14 : vector<8x128xf32>
    %cst_23 = arith.constant 1.000000e+00 : f32
    %41 = vector.broadcast %cst_23 : f32 to vector<8x128xf32>
    %42 = arith.subf %41, %26 : vector<8x128xf32>
    %43 = arith.mulf %42, %39 : vector<8x128xf32>
    %44 = arith.addf %40, %43 : vector<8x128xf32>
    %45 = arith.index_cast %c0_i32_16 : i32 to index
    %c0_24 = arith.constant 0 : index
    %c0_25 = arith.constant 0 : index
    %46 = vector.load %arg7[%45, %c0_24, %c0_25] : memref<8x8x128xf32, #tpu.memory_space<vmem>>, vector<1x8x128xf32>
    %47 = vector.shape_cast %46 : vector<1x8x128xf32> to vector<8x128xf32>
    %48 = vector.shape_cast %44 : vector<8x128xf32> to vector<1x8x128xf32>
    tpu.vector_store %arg7[%45, %c0_24, %c0_25], %48 {strides = array<i32>} : memref<8x8x128xf32, #tpu.memory_space<vmem>>, vector<1x8x128xf32>,
    %c1_i32 = arith.constant 1 : i32
    %49 = arith.index_cast %c1_i32 : i32 to index
    %c0_26 = arith.constant 0 : index
    %c0_27 = arith.constant 0 : index
    %50 = vector.load %arg10[%49, %c0_26, %c0_27] : memref<8x8x384xf32, #tpu.memory_space<vmem>>, vector<1x8x384xf32>
    %51 = vector.shape_cast %50 : vector<1x8x384xf32> to vector<8x384xf32>
    %cst_28 = arith.constant dense<0.000000e+00> : vector<8x256xf32>
    %52 = tpu.matmul %44, %12, %cst_28 {dimension_numbers = #tpu.dot_dimension_numbers<[1], [0], [0], [1], [0, 0, 1, 1], [], []>} : vector<8x128xf32>, vector<128x256xf32>, vector<8x256xf32> -> vector<8x256xf32>
    %53 = vector.extract_strided_slice %51 {offsets = [0, 0], sizes = [8, 128], strides = [1, 1]} : vector<8x384xf32> to vector<8x128xf32>
    %54 = vector.extract_strided_slice %52 {offsets = [0, 0], sizes = [8, 128], strides = [1, 1]} : vector<8x256xf32> to vector<8x128xf32>
    %55 = arith.addf %53, %54 : vector<8x128xf32>
    %56 = arith.negf %55 : vector<8x128xf32>
    %57 = math.exp %56 : vector<8x128xf32>
    %cst_29 = arith.constant 1.000000e+00 : f32
    %58 = vector.broadcast %cst_29 : f32 to vector<8x128xf32>
    %59 = arith.addf %58, %57 : vector<8x128xf32>
    %60 = arith.divf %58, %59 : vector<8x128xf32>
    %61 = vector.extract_strided_slice %51 {offsets = [0, 128], sizes = [8, 128], strides = [1, 1]} : vector<8x384xf32> to vector<8x128xf32>
    %62 = vector.extract_strided_slice %52 {offsets = [0, 128], sizes = [8, 128], strides = [1, 1]} : vector<8x256xf32> to vector<8x128xf32>
    %63 = arith.addf %61, %62 : vector<8x128xf32>
    %64 = arith.negf %63 : vector<8x128xf32>
    %65 = math.exp %64 : vector<8x128xf32>
    %cst_30 = arith.constant 1.000000e+00 : f32
    %66 = vector.broadcast %cst_30 : f32 to vector<8x128xf32>
    %67 = arith.addf %66, %65 : vector<8x128xf32>
    %68 = arith.divf %66, %67 : vector<8x128xf32>
    %69 = vector.extract_strided_slice %51 {offsets = [0, 256], sizes = [8, 128], strides = [1, 1]} : vector<8x384xf32> to vector<8x128xf32>
    %70 = arith.mulf %68, %44 : vector<8x128xf32>
    %cst_31 = arith.constant dense<0.000000e+00> : vector<8x128xf32>
    %71 = tpu.matmul %70, %13, %cst_31 {dimension_numbers = #tpu.dot_dimension_numbers<[1], [0], [0], [1], [0, 0, 1, 1], [], []>} : vector<8x128xf32>, vector<128x128xf32>, vector<8x128xf32> -> vector<8x128xf32>
    %72 = arith.addf %69, %71 : vector<8x128xf32>
    %73 = math.tanh %72 : vector<8x128xf32>
    %74 = arith.mulf %60, %44 : vector<8x128xf32>
    %cst_32 = arith.constant 1.000000e+00 : f32
    %75 = vector.broadcast %cst_32 : f32 to vector<8x128xf32>
    %76 = arith.subf %75, %60 : vector<8x128xf32>
    %77 = arith.mulf %76, %73 : vector<8x128xf32>
    %78 = arith.addf %74, %77 : vector<8x128xf32>
    %79 = arith.index_cast %c1_i32 : i32 to index
    %c0_33 = arith.constant 0 : index
    %c0_34 = arith.constant 0 : index
    %80 = vector.load %arg7[%79, %c0_33, %c0_34] : memref<8x8x128xf32, #tpu.memory_space<vmem>>, vector<1x8x128xf32>
    %81 = vector.shape_cast %80 : vector<1x8x128xf32> to vector<8x128xf32>
    %82 = vector.shape_cast %78 : vector<8x128xf32> to vector<1x8x128xf32>
    tpu.vector_store %arg7[%79, %c0_33, %c0_34], %82 {strides = array<i32>} : memref<8x8x128xf32, #tpu.memory_space<vmem>>, vector<1x8x128xf32>,
    %c2_i32 = arith.constant 2 : i32
    %83 = arith.index_cast %c2_i32 : i32 to index
    %c0_35 = arith.constant 0 : index
    %c0_36 = arith.constant 0 : index
    %84 = vector.load %arg10[%83, %c0_35, %c0_36] : memref<8x8x384xf32, #tpu.memory_space<vmem>>, vector<1x8x384xf32>
    %85 = vector.shape_cast %84 : vector<1x8x384xf32> to vector<8x384xf32>
    %cst_37 = arith.constant dense<0.000000e+00> : vector<8x256xf32>
    %86 = tpu.matmul %78, %12, %cst_37 {dimension_numbers = #tpu.dot_dimension_numbers<[1], [0], [0], [1], [0, 0, 1, 1], [], []>} : vector<8x128xf32>, vector<128x256xf32>, vector<8x256xf32> -> vector<8x256xf32>
    %87 = vector.extract_strided_slice %85 {offsets = [0, 0], sizes = [8, 128], strides = [1, 1]} : vector<8x384xf32> to vector<8x128xf32>
    %88 = vector.extract_strided_slice %86 {offsets = [0, 0], sizes = [8, 128], strides = [1, 1]} : vector<8x256xf32> to vector<8x128xf32>
    %89 = arith.addf %87, %88 : vector<8x128xf32>
    %90 = arith.negf %89 : vector<8x128xf32>
    %91 = math.exp %90 : vector<8x128xf32>
    %cst_38 = arith.constant 1.000000e+00 : f32
    %92 = vector.broadcast %cst_38 : f32 to vector<8x128xf32>
    %93 = arith.addf %92, %91 : vector<8x128xf32>
    %94 = arith.divf %92, %93 : vector<8x128xf32>
    %95 = vector.extract_strided_slice %85 {offsets = [0, 128], sizes = [8, 128], strides = [1, 1]} : vector<8x384xf32> to vector<8x128xf32>
    %96 = vector.extract_strided_slice %86 {offsets = [0, 128], sizes = [8, 128], strides = [1, 1]} : vector<8x256xf32> to vector<8x128xf32>
    %97 = arith.addf %95, %96 : vector<8x128xf32>
    %98 = arith.negf %97 : vector<8x128xf32>
    %99 = math.exp %98 : vector<8x128xf32>
    %cst_39 = arith.constant 1.000000e+00 : f32
    %100 = vector.broadcast %cst_39 : f32 to vector<8x128xf32>
    %101 = arith.addf %100, %99 : vector<8x128xf32>
    %102 = arith.divf %100, %101 : vector<8x128xf32>
    %103 = vector.extract_strided_slice %85 {offsets = [0, 256], sizes = [8, 128], strides = [1, 1]} : vector<8x384xf32> to vector<8x128xf32>
    %104 = arith.mulf %102, %78 : vector<8x128xf32>
    %cst_40 = arith.constant dense<0.000000e+00> : vector<8x128xf32>
    %105 = tpu.matmul %104, %13, %cst_40 {dimension_numbers = #tpu.dot_dimension_numbers<[1], [0], [0], [1], [0, 0, 1, 1], [], []>} : vector<8x128xf32>, vector<128x128xf32>, vector<8x128xf32> -> vector<8x128xf32>
    %106 = arith.addf %103, %105 : vector<8x128xf32>
    %107 = math.tanh %106 : vector<8x128xf32>
    %108 = arith.mulf %94, %78 : vector<8x128xf32>
    %cst_41 = arith.constant 1.000000e+00 : f32
    %109 = vector.broadcast %cst_41 : f32 to vector<8x128xf32>
    %110 = arith.subf %109, %94 : vector<8x128xf32>
    %111 = arith.mulf %110, %107 : vector<8x128xf32>
    %112 = arith.addf %108, %111 : vector<8x128xf32>
    %113 = arith.index_cast %c2_i32 : i32 to index
    %c0_42 = arith.constant 0 : index
    %c0_43 = arith.constant 0 : index
    %114 = vector.load %arg7[%113, %c0_42, %c0_43] : memref<8x8x128xf32, #tpu.memory_space<vmem>>, vector<1x8x128xf32>
    %115 = vector.shape_cast %114 : vector<1x8x128xf32> to vector<8x128xf32>
    %116 = vector.shape_cast %112 : vector<8x128xf32> to vector<1x8x128xf32>
    tpu.vector_store %arg7[%113, %c0_42, %c0_43], %116 {strides = array<i32>} : memref<8x8x128xf32, #tpu.memory_space<vmem>>, vector<1x8x128xf32>,
    %c3_i32 = arith.constant 3 : i32
    %117 = arith.index_cast %c3_i32 : i32 to index
    %c0_44 = arith.constant 0 : index
    %c0_45 = arith.constant 0 : index
    %118 = vector.load %arg10[%117, %c0_44, %c0_45] : memref<8x8x384xf32, #tpu.memory_space<vmem>>, vector<1x8x384xf32>
    %119 = vector.shape_cast %118 : vector<1x8x384xf32> to vector<8x384xf32>
    %cst_46 = arith.constant dense<0.000000e+00> : vector<8x256xf32>
    %120 = tpu.matmul %112, %12, %cst_46 {dimension_numbers = #tpu.dot_dimension_numbers<[1], [0], [0], [1], [0, 0, 1, 1], [], []>} : vector<8x128xf32>, vector<128x256xf32>, vector<8x256xf32> -> vector<8x256xf32>
    %121 = vector.extract_strided_slice %119 {offsets = [0, 0], sizes = [8, 128], strides = [1, 1]} : vector<8x384xf32> to vector<8x128xf32>
    %122 = vector.extract_strided_slice %120 {offsets = [0, 0], sizes = [8, 128], strides = [1, 1]} : vector<8x256xf32> to vector<8x128xf32>
    %123 = arith.addf %121, %122 : vector<8x128xf32>
    %124 = arith.negf %123 : vector<8x128xf32>
    %125 = math.exp %124 : vector<8x128xf32>
    %cst_47 = arith.constant 1.000000e+00 : f32
    %126 = vector.broadcast %cst_47 : f32 to vector<8x128xf32>
    %127 = arith.addf %126, %125 : vector<8x128xf32>
    %128 = arith.divf %126, %127 : vector<8x128xf32>
    %129 = vector.extract_strided_slice %119 {offsets = [0, 128], sizes = [8, 128], strides = [1, 1]} : vector<8x384xf32> to vector<8x128xf32>
    %130 = vector.extract_strided_slice %120 {offsets = [0, 128], sizes = [8, 128], strides = [1, 1]} : vector<8x256xf32> to vector<8x128xf32>
    %131 = arith.addf %129, %130 : vector<8x128xf32>
    %132 = arith.negf %131 : vector<8x128xf32>
    %133 = math.exp %132 : vector<8x128xf32>
    %cst_48 = arith.constant 1.000000e+00 : f32
    %134 = vector.broadcast %cst_48 : f32 to vector<8x128xf32>
    %135 = arith.addf %134, %133 : vector<8x128xf32>
    %136 = arith.divf %134, %135 : vector<8x128xf32>
    %137 = vector.extract_strided_slice %119 {offsets = [0, 256], sizes = [8, 128], strides = [1, 1]} : vector<8x384xf32> to vector<8x128xf32>
    %138 = arith.mulf %136, %112 : vector<8x128xf32>
    %cst_49 = arith.constant dense<0.000000e+00> : vector<8x128xf32>
    %139 = tpu.matmul %138, %13, %cst_49 {dimension_numbers = #tpu.dot_dimension_numbers<[1], [0], [0], [1], [0, 0, 1, 1], [], []>} : vector<8x128xf32>, vector<128x128xf32>, vector<8x128xf32> -> vector<8x128xf32>
    %140 = arith.addf %137, %139 : vector<8x128xf32>
    %141 = math.tanh %140 : vector<8x128xf32>
    %142 = arith.mulf %128, %112 : vector<8x128xf32>
    %cst_50 = arith.constant 1.000000e+00 : f32
    %143 = vector.broadcast %cst_50 : f32 to vector<8x128xf32>
    %144 = arith.subf %143, %128 : vector<8x128xf32>
    %145 = arith.mulf %144, %141 : vector<8x128xf32>
    %146 = arith.addf %142, %145 : vector<8x128xf32>
    %147 = arith.index_cast %c3_i32 : i32 to index
    %c0_51 = arith.constant 0 : index
    %c0_52 = arith.constant 0 : index
    %148 = vector.load %arg7[%147, %c0_51, %c0_52] : memref<8x8x128xf32, #tpu.memory_space<vmem>>, vector<1x8x128xf32>
    %149 = vector.shape_cast %148 : vector<1x8x128xf32> to vector<8x128xf32>
    %150 = vector.shape_cast %146 : vector<8x128xf32> to vector<1x8x128xf32>
    tpu.vector_store %arg7[%147, %c0_51, %c0_52], %150 {strides = array<i32>} : memref<8x8x128xf32, #tpu.memory_space<vmem>>, vector<1x8x128xf32>,
    %c4_i32 = arith.constant 4 : i32
    %151 = arith.index_cast %c4_i32 : i32 to index
    %c0_53 = arith.constant 0 : index
    %c0_54 = arith.constant 0 : index
    %152 = vector.load %arg10[%151, %c0_53, %c0_54] : memref<8x8x384xf32, #tpu.memory_space<vmem>>, vector<1x8x384xf32>
    %153 = vector.shape_cast %152 : vector<1x8x384xf32> to vector<8x384xf32>
    %cst_55 = arith.constant dense<0.000000e+00> : vector<8x256xf32>
    %154 = tpu.matmul %146, %12, %cst_55 {dimension_numbers = #tpu.dot_dimension_numbers<[1], [0], [0], [1], [0, 0, 1, 1], [], []>} : vector<8x128xf32>, vector<128x256xf32>, vector<8x256xf32> -> vector<8x256xf32>
    %155 = vector.extract_strided_slice %153 {offsets = [0, 0], sizes = [8, 128], strides = [1, 1]} : vector<8x384xf32> to vector<8x128xf32>
    %156 = vector.extract_strided_slice %154 {offsets = [0, 0], sizes = [8, 128], strides = [1, 1]} : vector<8x256xf32> to vector<8x128xf32>
    %157 = arith.addf %155, %156 : vector<8x128xf32>
    %158 = arith.negf %157 : vector<8x128xf32>
    %159 = math.exp %158 : vector<8x128xf32>
    %cst_56 = arith.constant 1.000000e+00 : f32
    %160 = vector.broadcast %cst_56 : f32 to vector<8x128xf32>
    %161 = arith.addf %160, %159 : vector<8x128xf32>
    %162 = arith.divf %160, %161 : vector<8x128xf32>
    %163 = vector.extract_strided_slice %153 {offsets = [0, 128], sizes = [8, 128], strides = [1, 1]} : vector<8x384xf32> to vector<8x128xf32>
    %164 = vector.extract_strided_slice %154 {offsets = [0, 128], sizes = [8, 128], strides = [1, 1]} : vector<8x256xf32> to vector<8x128xf32>
    %165 = arith.addf %163, %164 : vector<8x128xf32>
    %166 = arith.negf %165 : vector<8x128xf32>
    %167 = math.exp %166 : vector<8x128xf32>
    %cst_57 = arith.constant 1.000000e+00 : f32
    %168 = vector.broadcast %cst_57 : f32 to vector<8x128xf32>
    %169 = arith.addf %168, %167 : vector<8x128xf32>
    %170 = arith.divf %168, %169 : vector<8x128xf32>
    %171 = vector.extract_strided_slice %153 {offsets = [0, 256], sizes = [8, 128], strides = [1, 1]} : vector<8x384xf32> to vector<8x128xf32>
    %172 = arith.mulf %170, %146 : vector<8x128xf32>
    %cst_58 = arith.constant dense<0.000000e+00> : vector<8x128xf32>
    %173 = tpu.matmul %172, %13, %cst_58 {dimension_numbers = #tpu.dot_dimension_numbers<[1], [0], [0], [1], [0, 0, 1, 1], [], []>} : vector<8x128xf32>, vector<128x128xf32>, vector<8x128xf32> -> vector<8x128xf32>
    %174 = arith.addf %171, %173 : vector<8x128xf32>
    %175 = math.tanh %174 : vector<8x128xf32>
    %176 = arith.mulf %162, %146 : vector<8x128xf32>
    %cst_59 = arith.constant 1.000000e+00 : f32
    %177 = vector.broadcast %cst_59 : f32 to vector<8x128xf32>
    %178 = arith.subf %177, %162 : vector<8x128xf32>
    %179 = arith.mulf %178, %175 : vector<8x128xf32>
    %180 = arith.addf %176, %179 : vector<8x128xf32>
    %181 = arith.index_cast %c4_i32 : i32 to index
    %c0_60 = arith.constant 0 : index
    %c0_61 = arith.constant 0 : index
    %182 = vector.load %arg7[%181, %c0_60, %c0_61] : memref<8x8x128xf32, #tpu.memory_space<vmem>>, vector<1x8x128xf32>
    %183 = vector.shape_cast %182 : vector<1x8x128xf32> to vector<8x128xf32>
    %184 = vector.shape_cast %180 : vector<8x128xf32> to vector<1x8x128xf32>
    tpu.vector_store %arg7[%181, %c0_60, %c0_61], %184 {strides = array<i32>} : memref<8x8x128xf32, #tpu.memory_space<vmem>>, vector<1x8x128xf32>,
    %c5_i32 = arith.constant 5 : i32
    %185 = arith.index_cast %c5_i32 : i32 to index
    %c0_62 = arith.constant 0 : index
    %c0_63 = arith.constant 0 : index
    %186 = vector.load %arg10[%185, %c0_62, %c0_63] : memref<8x8x384xf32, #tpu.memory_space<vmem>>, vector<1x8x384xf32>
    %187 = vector.shape_cast %186 : vector<1x8x384xf32> to vector<8x384xf32>
    %cst_64 = arith.constant dense<0.000000e+00> : vector<8x256xf32>
    %188 = tpu.matmul %180, %12, %cst_64 {dimension_numbers = #tpu.dot_dimension_numbers<[1], [0], [0], [1], [0, 0, 1, 1], [], []>} : vector<8x128xf32>, vector<128x256xf32>, vector<8x256xf32> -> vector<8x256xf32>
    %189 = vector.extract_strided_slice %187 {offsets = [0, 0], sizes = [8, 128], strides = [1, 1]} : vector<8x384xf32> to vector<8x128xf32>
    %190 = vector.extract_strided_slice %188 {offsets = [0, 0], sizes = [8, 128], strides = [1, 1]} : vector<8x256xf32> to vector<8x128xf32>
    %191 = arith.addf %189, %190 : vector<8x128xf32>
    %192 = arith.negf %191 : vector<8x128xf32>
    %193 = math.exp %192 : vector<8x128xf32>
    %cst_65 = arith.constant 1.000000e+00 : f32
    %194 = vector.broadcast %cst_65 : f32 to vector<8x128xf32>
    %195 = arith.addf %194, %193 : vector<8x128xf32>
    %196 = arith.divf %194, %195 : vector<8x128xf32>
    %197 = vector.extract_strided_slice %187 {offsets = [0, 128], sizes = [8, 128], strides = [1, 1]} : vector<8x384xf32> to vector<8x128xf32>
    %198 = vector.extract_strided_slice %188 {offsets = [0, 128], sizes = [8, 128], strides = [1, 1]} : vector<8x256xf32> to vector<8x128xf32>
    %199 = arith.addf %197, %198 : vector<8x128xf32>
    %200 = arith.negf %199 : vector<8x128xf32>
    %201 = math.exp %200 : vector<8x128xf32>
    %cst_66 = arith.constant 1.000000e+00 : f32
    %202 = vector.broadcast %cst_66 : f32 to vector<8x128xf32>
    %203 = arith.addf %202, %201 : vector<8x128xf32>
    %204 = arith.divf %202, %203 : vector<8x128xf32>
    %205 = vector.extract_strided_slice %187 {offsets = [0, 256], sizes = [8, 128], strides = [1, 1]} : vector<8x384xf32> to vector<8x128xf32>
    %206 = arith.mulf %204, %180 : vector<8x128xf32>
    %cst_67 = arith.constant dense<0.000000e+00> : vector<8x128xf32>
    %207 = tpu.matmul %206, %13, %cst_67 {dimension_numbers = #tpu.dot_dimension_numbers<[1], [0], [0], [1], [0, 0, 1, 1], [], []>} : vector<8x128xf32>, vector<128x128xf32>, vector<8x128xf32> -> vector<8x128xf32>
    %208 = arith.addf %205, %207 : vector<8x128xf32>
    %209 = math.tanh %208 : vector<8x128xf32>
    %210 = arith.mulf %196, %180 : vector<8x128xf32>
    %cst_68 = arith.constant 1.000000e+00 : f32
    %211 = vector.broadcast %cst_68 : f32 to vector<8x128xf32>
    %212 = arith.subf %211, %196 : vector<8x128xf32>
    %213 = arith.mulf %212, %209 : vector<8x128xf32>
    %214 = arith.addf %210, %213 : vector<8x128xf32>
    %215 = arith.index_cast %c5_i32 : i32 to index
    %c0_69 = arith.constant 0 : index
    %c0_70 = arith.constant 0 : index
    %216 = vector.load %arg7[%215, %c0_69, %c0_70] : memref<8x8x128xf32, #tpu.memory_space<vmem>>, vector<1x8x128xf32>
    %217 = vector.shape_cast %216 : vector<1x8x128xf32> to vector<8x128xf32>
    %218 = vector.shape_cast %214 : vector<8x128xf32> to vector<1x8x128xf32>
    tpu.vector_store %arg7[%215, %c0_69, %c0_70], %218 {strides = array<i32>} : memref<8x8x128xf32, #tpu.memory_space<vmem>>, vector<1x8x128xf32>,
    %c6_i32 = arith.constant 6 : i32
    %219 = arith.index_cast %c6_i32 : i32 to index
    %c0_71 = arith.constant 0 : index
    %c0_72 = arith.constant 0 : index
    %220 = vector.load %arg10[%219, %c0_71, %c0_72] : memref<8x8x384xf32, #tpu.memory_space<vmem>>, vector<1x8x384xf32>
    %221 = vector.shape_cast %220 : vector<1x8x384xf32> to vector<8x384xf32>
    %cst_73 = arith.constant dense<0.000000e+00> : vector<8x256xf32>
    %222 = tpu.matmul %214, %12, %cst_73 {dimension_numbers = #tpu.dot_dimension_numbers<[1], [0], [0], [1], [0, 0, 1, 1], [], []>} : vector<8x128xf32>, vector<128x256xf32>, vector<8x256xf32> -> vector<8x256xf32>
    %223 = vector.extract_strided_slice %221 {offsets = [0, 0], sizes = [8, 128], strides = [1, 1]} : vector<8x384xf32> to vector<8x128xf32>
    %224 = vector.extract_strided_slice %222 {offsets = [0, 0], sizes = [8, 128], strides = [1, 1]} : vector<8x256xf32> to vector<8x128xf32>
    %225 = arith.addf %223, %224 : vector<8x128xf32>
    %226 = arith.negf %225 : vector<8x128xf32>
    %227 = math.exp %226 : vector<8x128xf32>
    %cst_74 = arith.constant 1.000000e+00 : f32
    %228 = vector.broadcast %cst_74 : f32 to vector<8x128xf32>
    %229 = arith.addf %228, %227 : vector<8x128xf32>
    %230 = arith.divf %228, %229 : vector<8x128xf32>
    %231 = vector.extract_strided_slice %221 {offsets = [0, 128], sizes = [8, 128], strides = [1, 1]} : vector<8x384xf32> to vector<8x128xf32>
    %232 = vector.extract_strided_slice %222 {offsets = [0, 128], sizes = [8, 128], strides = [1, 1]} : vector<8x256xf32> to vector<8x128xf32>
    %233 = arith.addf %231, %232 : vector<8x128xf32>
    %234 = arith.negf %233 : vector<8x128xf32>
    %235 = math.exp %234 : vector<8x128xf32>
    %cst_75 = arith.constant 1.000000e+00 : f32
    %236 = vector.broadcast %cst_75 : f32 to vector<8x128xf32>
    %237 = arith.addf %236, %235 : vector<8x128xf32>
    %238 = arith.divf %236, %237 : vector<8x128xf32>
    %239 = vector.extract_strided_slice %221 {offsets = [0, 256], sizes = [8, 128], strides = [1, 1]} : vector<8x384xf32> to vector<8x128xf32>
    %240 = arith.mulf %238, %214 : vector<8x128xf32>
    %cst_76 = arith.constant dense<0.000000e+00> : vector<8x128xf32>
    %241 = tpu.matmul %240, %13, %cst_76 {dimension_numbers = #tpu.dot_dimension_numbers<[1], [0], [0], [1], [0, 0, 1, 1], [], []>} : vector<8x128xf32>, vector<128x128xf32>, vector<8x128xf32> -> vector<8x128xf32>
    %242 = arith.addf %239, %241 : vector<8x128xf32>
    %243 = math.tanh %242 : vector<8x128xf32>
    %244 = arith.mulf %230, %214 : vector<8x128xf32>
    %cst_77 = arith.constant 1.000000e+00 : f32
    %245 = vector.broadcast %cst_77 : f32 to vector<8x128xf32>
    %246 = arith.subf %245, %230 : vector<8x128xf32>
    %247 = arith.mulf %246, %243 : vector<8x128xf32>
    %248 = arith.addf %244, %247 : vector<8x128xf32>
    %249 = arith.index_cast %c6_i32 : i32 to index
    %c0_78 = arith.constant 0 : index
    %c0_79 = arith.constant 0 : index
    %250 = vector.load %arg7[%249, %c0_78, %c0_79] : memref<8x8x128xf32, #tpu.memory_space<vmem>>, vector<1x8x128xf32>
    %251 = vector.shape_cast %250 : vector<1x8x128xf32> to vector<8x128xf32>
    %252 = vector.shape_cast %248 : vector<8x128xf32> to vector<1x8x128xf32>
    tpu.vector_store %arg7[%249, %c0_78, %c0_79], %252 {strides = array<i32>} : memref<8x8x128xf32, #tpu.memory_space<vmem>>, vector<1x8x128xf32>,
    %c7_i32 = arith.constant 7 : i32
    %253 = arith.index_cast %c7_i32 : i32 to index
    %c0_80 = arith.constant 0 : index
    %c0_81 = arith.constant 0 : index
    %254 = vector.load %arg10[%253, %c0_80, %c0_81] : memref<8x8x384xf32, #tpu.memory_space<vmem>>, vector<1x8x384xf32>
    %255 = vector.shape_cast %254 : vector<1x8x384xf32> to vector<8x384xf32>
    %cst_82 = arith.constant dense<0.000000e+00> : vector<8x256xf32>
    %256 = tpu.matmul %248, %12, %cst_82 {dimension_numbers = #tpu.dot_dimension_numbers<[1], [0], [0], [1], [0, 0, 1, 1], [], []>} : vector<8x128xf32>, vector<128x256xf32>, vector<8x256xf32> -> vector<8x256xf32>
    %257 = vector.extract_strided_slice %255 {offsets = [0, 0], sizes = [8, 128], strides = [1, 1]} : vector<8x384xf32> to vector<8x128xf32>
    %258 = vector.extract_strided_slice %256 {offsets = [0, 0], sizes = [8, 128], strides = [1, 1]} : vector<8x256xf32> to vector<8x128xf32>
    %259 = arith.addf %257, %258 : vector<8x128xf32>
    %260 = arith.negf %259 : vector<8x128xf32>
    %261 = math.exp %260 : vector<8x128xf32>
    %cst_83 = arith.constant 1.000000e+00 : f32
    %262 = vector.broadcast %cst_83 : f32 to vector<8x128xf32>
    %263 = arith.addf %262, %261 : vector<8x128xf32>
    %264 = arith.divf %262, %263 : vector<8x128xf32>
    %265 = vector.extract_strided_slice %255 {offsets = [0, 128], sizes = [8, 128], strides = [1, 1]} : vector<8x384xf32> to vector<8x128xf32>
    %266 = vector.extract_strided_slice %256 {offsets = [0, 128], sizes = [8, 128], strides = [1, 1]} : vector<8x256xf32> to vector<8x128xf32>
    %267 = arith.addf %265, %266 : vector<8x128xf32>
    %268 = arith.negf %267 : vector<8x128xf32>
    %269 = math.exp %268 : vector<8x128xf32>
    %cst_84 = arith.constant 1.000000e+00 : f32
    %270 = vector.broadcast %cst_84 : f32 to vector<8x128xf32>
    %271 = arith.addf %270, %269 : vector<8x128xf32>
    %272 = arith.divf %270, %271 : vector<8x128xf32>
    %273 = vector.extract_strided_slice %255 {offsets = [0, 256], sizes = [8, 128], strides = [1, 1]} : vector<8x384xf32> to vector<8x128xf32>
    %274 = arith.mulf %272, %248 : vector<8x128xf32>
    %cst_85 = arith.constant dense<0.000000e+00> : vector<8x128xf32>
    %275 = tpu.matmul %274, %13, %cst_85 {dimension_numbers = #tpu.dot_dimension_numbers<[1], [0], [0], [1], [0, 0, 1, 1], [], []>} : vector<8x128xf32>, vector<128x128xf32>, vector<8x128xf32> -> vector<8x128xf32>
    %276 = arith.addf %273, %275 : vector<8x128xf32>
    %277 = math.tanh %276 : vector<8x128xf32>
    %278 = arith.mulf %264, %248 : vector<8x128xf32>
    %cst_86 = arith.constant 1.000000e+00 : f32
    %279 = vector.broadcast %cst_86 : f32 to vector<8x128xf32>
    %280 = arith.subf %279, %264 : vector<8x128xf32>
    %281 = arith.mulf %280, %277 : vector<8x128xf32>
    %282 = arith.addf %278, %281 : vector<8x128xf32>
    %283 = arith.index_cast %c7_i32 : i32 to index
    %c0_87 = arith.constant 0 : index
    %c0_88 = arith.constant 0 : index
    %284 = vector.load %arg7[%283, %c0_87, %c0_88] : memref<8x8x128xf32, #tpu.memory_space<vmem>>, vector<1x8x128xf32>
    %285 = vector.shape_cast %284 : vector<1x8x128xf32> to vector<8x128xf32>
    %286 = vector.shape_cast %282 : vector<8x128xf32> to vector<1x8x128xf32>
    tpu.vector_store %arg7[%283, %c0_87, %c0_88], %286 {strides = array<i32>} : memref<8x8x128xf32, #tpu.memory_space<vmem>>, vector<1x8x128xf32>,
    %c8_i32 = arith.constant 8 : i32
    %c0_89 = arith.constant 0 : index
    %c0_90 = arith.constant 0 : index
    %287 = vector.load %arg9[%c0_89, %c0_90] : memref<8x128xf32, #tpu.memory_space<vmem>>, vector<8x128xf32>
    tpu.vector_store %arg9[%c0_89, %c0_90], %282 {strides = array<i32>} : memref<8x128xf32, #tpu.memory_space<vmem>>, vector<8x128xf32>,
    %c1_i32_91 = arith.constant 1 : i32
    %288 = arith.cmpi eq, %arg0, %c1_i32_91 : i32
    %289 = arith.extui %288 : i1 to i32
    %c0_i32_92 = arith.constant 0 : i32
    %290 = arith.cmpi ne, %289, %c0_i32_92 : i32
    scf.if %290 {
      %c0_93 = arith.constant 0 : index
      %c0_94 = arith.constant 0 : index
      %291 = vector.load %arg8[%c0_93, %c0_94] : memref<8x128xf32, #tpu.memory_space<vmem>>, vector<8x128xf32>
      tpu.vector_store %arg8[%c0_93, %c0_94], %282 {strides = array<i32>} : memref<8x128xf32, #tpu.memory_space<vmem>>, vector<8x128xf32>,
    } else {
    }
    return
  }
  func.func @transform_0(%arg0: i32) -> (i32, i32, i32) {
    %c0_i32 = arith.constant 0 : i32
    %c0_i32_0 = arith.constant 0 : i32
    %c0_i32_1 = arith.constant 0 : i32
    return %arg0, %c0_i32, %c0_i32_0 : i32, i32, i32
  }
  func.func @transform_1(%arg0: i32) -> (i32, i32) {
    %c0_i32 = arith.constant 0 : i32
    %c0_i32_0 = arith.constant 0 : i32
    %c0_i32_1 = arith.constant 0 : i32
    return %c0_i32, %c0_i32_0 : i32, i32
  }
  func.func @transform_2(%arg0: i32) -> (i32, i32) {
    %c0_i32 = arith.constant 0 : i32
    %c0_i32_0 = arith.constant 0 : i32
    %c0_i32_1 = arith.constant 0 : i32
    return %c0_i32, %c0_i32_0 : i32, i32
  }
  func.func @transform_3(%arg0: i32) -> (i32, i32) {
    %c0_i32 = arith.constant 0 : i32
    %c0_i32_0 = arith.constant 0 : i32
    %c0_i32_1 = arith.constant 0 : i32
    return %c0_i32, %c0_i32_0 : i32, i32
  }
  func.func @transform_4(%arg0: i32) -> (i32, i32) {
    %c0_i32 = arith.constant 0 : i32
    %c0_i32_0 = arith.constant 0 : i32
    %c0_i32_1 = arith.constant 0 : i32
    return %c0_i32, %c0_i32_0 : i32, i32
  }
  func.func @transform_5(%arg0: i32) -> (i32, i32) {
    %c0_i32 = arith.constant 0 : i32
    %c0_i32_0 = arith.constant 0 : i32
    %c0_i32_1 = arith.constant 0 : i32
    return %c0_i32, %c0_i32_0 : i32, i32
  }
  func.func @transform_6(%arg0: i32) -> (i32, i32, i32) {
    %c0_i32 = arith.constant 0 : i32
    %c0_i32_0 = arith.constant 0 : i32
    %c0_i32_1 = arith.constant 0 : i32
    return %arg0, %c0_i32, %c0_i32_0 : i32, i32, i32
  }
  func.func @transform_7(%arg0: i32) -> (i32, i32) {
    %c0_i32 = arith.constant 0 : i32
    %c0_i32_0 = arith.constant 0 : i32
    %c0_i32_1 = arith.constant 0 : i32
    return %c0_i32, %c0_i32_0 : i32, i32
  }
}

module attributes {stable_mosaic.version = 11 : i64} {
  func.func @_gru_layer_proj_kernel(%arg0: i32, %arg1: memref<8x8x128xf32, #tpu.memory_space<vmem>>, %arg2: memref<8x128xf32, #tpu.memory_space<vmem>>, %arg3: memref<128x384xf32, #tpu.memory_space<vmem>>, %arg4: memref<128x256xf32, #tpu.memory_space<vmem>>, %arg5: memref<128x128xf32, #tpu.memory_space<vmem>>, %arg6: memref<1x384xf32, #tpu.memory_space<vmem>>, %arg7: memref<128x128xf32, #tpu.memory_space<vmem>>, %arg8: memref<1x128xf32, #tpu.memory_space<vmem>>, %arg9: memref<8x8x128xf32, #tpu.memory_space<vmem>>, %arg10: memref<8x128xf32, #tpu.memory_space<vmem>>, %arg11: memref<8x128xf32, #tpu.memory_space<vmem>>, %arg12: memref<8x8x384xf32, #tpu.memory_space<vmem>>, %arg13: memref<8x8x128xf32, #tpu.memory_space<vmem>>) attributes {dimension_semantics = [#tpu.dimension_semantics<arbitrary>], iteration_bounds = array<i64: 2>, scalar_prefetch = 0 : i64, scratch_operands = 3 : i64, tpu.core_type = #tpu.core_type<tc>, window_params = [{transform_indices = @transform_0, window_bounds = array<i64: 8, 8, 128>}, {pipeline_mode = #tpu.pipeline_mode<synchronous>, transform_indices = @transform_1, window_bounds = array<i64: 8, 128>}, {pipeline_mode = #tpu.pipeline_mode<synchronous>, transform_indices = @transform_2, window_bounds = array<i64: 128, 384>}, {pipeline_mode = #tpu.pipeline_mode<synchronous>, transform_indices = @transform_3, window_bounds = array<i64: 128, 256>}, {pipeline_mode = #tpu.pipeline_mode<synchronous>, transform_indices = @transform_4, window_bounds = array<i64: 128, 128>}, {pipeline_mode = #tpu.pipeline_mode<synchronous>, transform_indices = @transform_5, window_bounds = array<i64: 1, 384>}, {pipeline_mode = #tpu.pipeline_mode<synchronous>, transform_indices = @transform_6, window_bounds = array<i64: 128, 128>}, {pipeline_mode = #tpu.pipeline_mode<synchronous>, transform_indices = @transform_7, window_bounds = array<i64: 1, 128>}, {transform_indices = @transform_8, window_bounds = array<i64: 8, 8, 128>}, {pipeline_mode = #tpu.pipeline_mode<synchronous>, transform_indices = @transform_9, window_bounds = array<i64: 8, 128>}]} {
    %c0_i32 = arith.constant 0 : i32
    %0 = arith.cmpi eq, %arg0, %c0_i32 : i32
    %1 = arith.extui %0 : i1 to i32
    %c0_i32_0 = arith.constant 0 : i32
    %2 = arith.cmpi ne, %1, %c0_i32_0 : i32
    scf.if %2 {
      %c0_104 = arith.constant 0 : index
      %c0_105 = arith.constant 0 : index
      %300 = vector.load %arg2[%c0_104, %c0_105] : memref<8x128xf32, #tpu.memory_space<vmem>>, vector<8x128xf32>
      %c0_106 = arith.constant 0 : index
      %c0_107 = arith.constant 0 : index
      %301 = vector.load %arg11[%c0_106, %c0_107] : memref<8x128xf32, #tpu.memory_space<vmem>>, vector<8x128xf32>
      tpu.vector_store %arg11[%c0_106, %c0_107], %300 {strides = array<i32>} : memref<8x128xf32, #tpu.memory_space<vmem>>, vector<8x128xf32>,
    } else {
    }
    %c0 = arith.constant 0 : index
    %c0_1 = arith.constant 0 : index
    %c0_2 = arith.constant 0 : index
    %3 = vector.load %arg1[%c0, %c0_1, %c0_2] : memref<8x8x128xf32, #tpu.memory_space<vmem>>, vector<8x8x128xf32>
    %4 = vector.shape_cast %3 : vector<8x8x128xf32> to vector<64x128xf32>
    %c0_3 = arith.constant 0 : index
    %c0_4 = arith.constant 0 : index
    %5 = vector.load %arg3[%c0_3, %c0_4] : memref<128x384xf32, #tpu.memory_space<vmem>>, vector<128x384xf32>
    %cst = arith.constant dense<0.000000e+00> : vector<64x384xf32>
    %6 = tpu.matmul %4, %5, %cst {dimension_numbers = #tpu.dot_dimension_numbers<[1], [0], [0], [1], [0, 0, 1, 1], [], []>} : vector<64x128xf32>, vector<128x384xf32>, vector<64x384xf32> -> vector<64x384xf32>
    %c0_5 = arith.constant 0 : index
    %c0_6 = arith.constant 0 : index
    %7 = vector.load %arg6[%c0_5, %c0_6] : memref<1x384xf32, #tpu.memory_space<vmem>>, vector<1x384xf32>
    %8 = vector.broadcast %7 : vector<1x384xf32> to vector<64x384xf32>
    %9 = arith.addf %6, %8 : vector<64x384xf32>
    %10 = vector.shape_cast %9 : vector<64x384xf32> to vector<8x8x384xf32>
    %c0_7 = arith.constant 0 : index
    %c0_8 = arith.constant 0 : index
    %c0_9 = arith.constant 0 : index
    %11 = vector.load %arg12[%c0_7, %c0_8, %c0_9] : memref<8x8x384xf32, #tpu.memory_space<vmem>>, vector<8x8x384xf32>
    tpu.vector_store %arg12[%c0_7, %c0_8, %c0_9], %10 {strides = array<i32>} : memref<8x8x384xf32, #tpu.memory_space<vmem>>, vector<8x8x384xf32>,
    %c0_10 = arith.constant 0 : index
    %c0_11 = arith.constant 0 : index
    %12 = vector.load %arg4[%c0_10, %c0_11] : memref<128x256xf32, #tpu.memory_space<vmem>>, vector<128x256xf32>
    %c0_12 = arith.constant 0 : index
    %c0_13 = arith.constant 0 : index
    %13 = vector.load %arg5[%c0_12, %c0_13] : memref<128x128xf32, #tpu.memory_space<vmem>>, vector<128x128xf32>
    %c0_14 = arith.constant 0 : index
    %c0_15 = arith.constant 0 : index
    %14 = vector.load %arg11[%c0_14, %c0_15] : memref<8x128xf32, #tpu.memory_space<vmem>>, vector<8x128xf32>
    %c0_i32_16 = arith.constant 0 : i32
    %15 = arith.index_cast %c0_i32_16 : i32 to index
    %c0_17 = arith.constant 0 : index
    %c0_18 = arith.constant 0 : index
    %16 = vector.load %arg12[%15, %c0_17, %c0_18] : memref<8x8x384xf32, #tpu.memory_space<vmem>>, vector<1x8x384xf32>
    %17 = vector.shape_cast %16 : vector<1x8x384xf32> to vector<8x384xf32>
    %cst_19 = arith.constant dense<0.000000e+00> : vector<8x256xf32>
    %18 = tpu.matmul %14, %12, %cst_19 {dimension_numbers = #tpu.dot_dimension_numbers<[1], [0], [0], [1], [0, 0, 1, 1], [], []>} : vector<8x128xf32>, vector<128x256xf32>, vector<8x256xf32> -> vector<8x256xf32>
    %19 = vector.extract_strided_slice %17 {offsets = [0, 0], sizes = [8, 128], strides = [1, 1]} : vector<8x384xf32> to vector<8x128xf32>
    %20 = vector.extract_strided_slice %18 {offsets = [0, 0], sizes = [8, 128], strides = [1, 1]} : vector<8x256xf32> to vector<8x128xf32>
    %21 = arith.addf %19, %20 : vector<8x128xf32>
    %22 = arith.negf %21 : vector<8x128xf32>
    %23 = math.exp %22 : vector<8x128xf32>
    %cst_20 = arith.constant 1.000000e+00 : f32
    %24 = vector.broadcast %cst_20 : f32 to vector<8x128xf32>
    %25 = arith.addf %24, %23 : vector<8x128xf32>
    %26 = arith.divf %24, %25 : vector<8x128xf32>
    %27 = vector.extract_strided_slice %17 {offsets = [0, 128], sizes = [8, 128], strides = [1, 1]} : vector<8x384xf32> to vector<8x128xf32>
    %28 = vector.extract_strided_slice %18 {offsets = [0, 128], sizes = [8, 128], strides = [1, 1]} : vector<8x256xf32> to vector<8x128xf32>
    %29 = arith.addf %27, %28 : vector<8x128xf32>
    %30 = arith.negf %29 : vector<8x128xf32>
    %31 = math.exp %30 : vector<8x128xf32>
    %cst_21 = arith.constant 1.000000e+00 : f32
    %32 = vector.broadcast %cst_21 : f32 to vector<8x128xf32>
    %33 = arith.addf %32, %31 : vector<8x128xf32>
    %34 = arith.divf %32, %33 : vector<8x128xf32>
    %35 = vector.extract_strided_slice %17 {offsets = [0, 256], sizes = [8, 128], strides = [1, 1]} : vector<8x384xf32> to vector<8x128xf32>
    %36 = arith.mulf %34, %14 : vector<8x128xf32>
    %cst_22 = arith.constant dense<0.000000e+00> : vector<8x128xf32>
    %37 = tpu.matmul %36, %13, %cst_22 {dimension_numbers = #tpu.dot_dimension_numbers<[1], [0], [0], [1], [0, 0, 1, 1], [], []>} : vector<8x128xf32>, vector<128x128xf32>, vector<8x128xf32> -> vector<8x128xf32>
    %38 = arith.addf %35, %37 : vector<8x128xf32>
    %39 = math.tanh %38 : vector<8x128xf32>
    %40 = arith.mulf %26, %14 : vector<8x128xf32>
    %cst_23 = arith.constant 1.000000e+00 : f32
    %41 = vector.broadcast %cst_23 : f32 to vector<8x128xf32>
    %42 = arith.subf %41, %26 : vector<8x128xf32>
    %43 = arith.mulf %42, %39 : vector<8x128xf32>
    %44 = arith.addf %40, %43 : vector<8x128xf32>
    %45 = arith.index_cast %c0_i32_16 : i32 to index
    %c0_24 = arith.constant 0 : index
    %c0_25 = arith.constant 0 : index
    %46 = vector.load %arg13[%45, %c0_24, %c0_25] : memref<8x8x128xf32, #tpu.memory_space<vmem>>, vector<1x8x128xf32>
    %47 = vector.shape_cast %46 : vector<1x8x128xf32> to vector<8x128xf32>
    %48 = vector.shape_cast %44 : vector<8x128xf32> to vector<1x8x128xf32>
    tpu.vector_store %arg13[%45, %c0_24, %c0_25], %48 {strides = array<i32>} : memref<8x8x128xf32, #tpu.memory_space<vmem>>, vector<1x8x128xf32>,
    %c1_i32 = arith.constant 1 : i32
    %49 = arith.index_cast %c1_i32 : i32 to index
    %c0_26 = arith.constant 0 : index
    %c0_27 = arith.constant 0 : index
    %50 = vector.load %arg12[%49, %c0_26, %c0_27] : memref<8x8x384xf32, #tpu.memory_space<vmem>>, vector<1x8x384xf32>
    %51 = vector.shape_cast %50 : vector<1x8x384xf32> to vector<8x384xf32>
    %cst_28 = arith.constant dense<0.000000e+00> : vector<8x256xf32>
    %52 = tpu.matmul %44, %12, %cst_28 {dimension_numbers = #tpu.dot_dimension_numbers<[1], [0], [0], [1], [0, 0, 1, 1], [], []>} : vector<8x128xf32>, vector<128x256xf32>, vector<8x256xf32> -> vector<8x256xf32>
    %53 = vector.extract_strided_slice %51 {offsets = [0, 0], sizes = [8, 128], strides = [1, 1]} : vector<8x384xf32> to vector<8x128xf32>
    %54 = vector.extract_strided_slice %52 {offsets = [0, 0], sizes = [8, 128], strides = [1, 1]} : vector<8x256xf32> to vector<8x128xf32>
    %55 = arith.addf %53, %54 : vector<8x128xf32>
    %56 = arith.negf %55 : vector<8x128xf32>
    %57 = math.exp %56 : vector<8x128xf32>
    %cst_29 = arith.constant 1.000000e+00 : f32
    %58 = vector.broadcast %cst_29 : f32 to vector<8x128xf32>
    %59 = arith.addf %58, %57 : vector<8x128xf32>
    %60 = arith.divf %58, %59 : vector<8x128xf32>
    %61 = vector.extract_strided_slice %51 {offsets = [0, 128], sizes = [8, 128], strides = [1, 1]} : vector<8x384xf32> to vector<8x128xf32>
    %62 = vector.extract_strided_slice %52 {offsets = [0, 128], sizes = [8, 128], strides = [1, 1]} : vector<8x256xf32> to vector<8x128xf32>
    %63 = arith.addf %61, %62 : vector<8x128xf32>
    %64 = arith.negf %63 : vector<8x128xf32>
    %65 = math.exp %64 : vector<8x128xf32>
    %cst_30 = arith.constant 1.000000e+00 : f32
    %66 = vector.broadcast %cst_30 : f32 to vector<8x128xf32>
    %67 = arith.addf %66, %65 : vector<8x128xf32>
    %68 = arith.divf %66, %67 : vector<8x128xf32>
    %69 = vector.extract_strided_slice %51 {offsets = [0, 256], sizes = [8, 128], strides = [1, 1]} : vector<8x384xf32> to vector<8x128xf32>
    %70 = arith.mulf %68, %44 : vector<8x128xf32>
    %cst_31 = arith.constant dense<0.000000e+00> : vector<8x128xf32>
    %71 = tpu.matmul %70, %13, %cst_31 {dimension_numbers = #tpu.dot_dimension_numbers<[1], [0], [0], [1], [0, 0, 1, 1], [], []>} : vector<8x128xf32>, vector<128x128xf32>, vector<8x128xf32> -> vector<8x128xf32>
    %72 = arith.addf %69, %71 : vector<8x128xf32>
    %73 = math.tanh %72 : vector<8x128xf32>
    %74 = arith.mulf %60, %44 : vector<8x128xf32>
    %cst_32 = arith.constant 1.000000e+00 : f32
    %75 = vector.broadcast %cst_32 : f32 to vector<8x128xf32>
    %76 = arith.subf %75, %60 : vector<8x128xf32>
    %77 = arith.mulf %76, %73 : vector<8x128xf32>
    %78 = arith.addf %74, %77 : vector<8x128xf32>
    %79 = arith.index_cast %c1_i32 : i32 to index
    %c0_33 = arith.constant 0 : index
    %c0_34 = arith.constant 0 : index
    %80 = vector.load %arg13[%79, %c0_33, %c0_34] : memref<8x8x128xf32, #tpu.memory_space<vmem>>, vector<1x8x128xf32>
    %81 = vector.shape_cast %80 : vector<1x8x128xf32> to vector<8x128xf32>
    %82 = vector.shape_cast %78 : vector<8x128xf32> to vector<1x8x128xf32>
    tpu.vector_store %arg13[%79, %c0_33, %c0_34], %82 {strides = array<i32>} : memref<8x8x128xf32, #tpu.memory_space<vmem>>, vector<1x8x128xf32>,
    %c2_i32 = arith.constant 2 : i32
    %83 = arith.index_cast %c2_i32 : i32 to index
    %c0_35 = arith.constant 0 : index
    %c0_36 = arith.constant 0 : index
    %84 = vector.load %arg12[%83, %c0_35, %c0_36] : memref<8x8x384xf32, #tpu.memory_space<vmem>>, vector<1x8x384xf32>
    %85 = vector.shape_cast %84 : vector<1x8x384xf32> to vector<8x384xf32>
    %cst_37 = arith.constant dense<0.000000e+00> : vector<8x256xf32>
    %86 = tpu.matmul %78, %12, %cst_37 {dimension_numbers = #tpu.dot_dimension_numbers<[1], [0], [0], [1], [0, 0, 1, 1], [], []>} : vector<8x128xf32>, vector<128x256xf32>, vector<8x256xf32> -> vector<8x256xf32>
    %87 = vector.extract_strided_slice %85 {offsets = [0, 0], sizes = [8, 128], strides = [1, 1]} : vector<8x384xf32> to vector<8x128xf32>
    %88 = vector.extract_strided_slice %86 {offsets = [0, 0], sizes = [8, 128], strides = [1, 1]} : vector<8x256xf32> to vector<8x128xf32>
    %89 = arith.addf %87, %88 : vector<8x128xf32>
    %90 = arith.negf %89 : vector<8x128xf32>
    %91 = math.exp %90 : vector<8x128xf32>
    %cst_38 = arith.constant 1.000000e+00 : f32
    %92 = vector.broadcast %cst_38 : f32 to vector<8x128xf32>
    %93 = arith.addf %92, %91 : vector<8x128xf32>
    %94 = arith.divf %92, %93 : vector<8x128xf32>
    %95 = vector.extract_strided_slice %85 {offsets = [0, 128], sizes = [8, 128], strides = [1, 1]} : vector<8x384xf32> to vector<8x128xf32>
    %96 = vector.extract_strided_slice %86 {offsets = [0, 128], sizes = [8, 128], strides = [1, 1]} : vector<8x256xf32> to vector<8x128xf32>
    %97 = arith.addf %95, %96 : vector<8x128xf32>
    %98 = arith.negf %97 : vector<8x128xf32>
    %99 = math.exp %98 : vector<8x128xf32>
    %cst_39 = arith.constant 1.000000e+00 : f32
    %100 = vector.broadcast %cst_39 : f32 to vector<8x128xf32>
    %101 = arith.addf %100, %99 : vector<8x128xf32>
    %102 = arith.divf %100, %101 : vector<8x128xf32>
    %103 = vector.extract_strided_slice %85 {offsets = [0, 256], sizes = [8, 128], strides = [1, 1]} : vector<8x384xf32> to vector<8x128xf32>
    %104 = arith.mulf %102, %78 : vector<8x128xf32>
    %cst_40 = arith.constant dense<0.000000e+00> : vector<8x128xf32>
    %105 = tpu.matmul %104, %13, %cst_40 {dimension_numbers = #tpu.dot_dimension_numbers<[1], [0], [0], [1], [0, 0, 1, 1], [], []>} : vector<8x128xf32>, vector<128x128xf32>, vector<8x128xf32> -> vector<8x128xf32>
    %106 = arith.addf %103, %105 : vector<8x128xf32>
    %107 = math.tanh %106 : vector<8x128xf32>
    %108 = arith.mulf %94, %78 : vector<8x128xf32>
    %cst_41 = arith.constant 1.000000e+00 : f32
    %109 = vector.broadcast %cst_41 : f32 to vector<8x128xf32>
    %110 = arith.subf %109, %94 : vector<8x128xf32>
    %111 = arith.mulf %110, %107 : vector<8x128xf32>
    %112 = arith.addf %108, %111 : vector<8x128xf32>
    %113 = arith.index_cast %c2_i32 : i32 to index
    %c0_42 = arith.constant 0 : index
    %c0_43 = arith.constant 0 : index
    %114 = vector.load %arg13[%113, %c0_42, %c0_43] : memref<8x8x128xf32, #tpu.memory_space<vmem>>, vector<1x8x128xf32>
    %115 = vector.shape_cast %114 : vector<1x8x128xf32> to vector<8x128xf32>
    %116 = vector.shape_cast %112 : vector<8x128xf32> to vector<1x8x128xf32>
    tpu.vector_store %arg13[%113, %c0_42, %c0_43], %116 {strides = array<i32>} : memref<8x8x128xf32, #tpu.memory_space<vmem>>, vector<1x8x128xf32>,
    %c3_i32 = arith.constant 3 : i32
    %117 = arith.index_cast %c3_i32 : i32 to index
    %c0_44 = arith.constant 0 : index
    %c0_45 = arith.constant 0 : index
    %118 = vector.load %arg12[%117, %c0_44, %c0_45] : memref<8x8x384xf32, #tpu.memory_space<vmem>>, vector<1x8x384xf32>
    %119 = vector.shape_cast %118 : vector<1x8x384xf32> to vector<8x384xf32>
    %cst_46 = arith.constant dense<0.000000e+00> : vector<8x256xf32>
    %120 = tpu.matmul %112, %12, %cst_46 {dimension_numbers = #tpu.dot_dimension_numbers<[1], [0], [0], [1], [0, 0, 1, 1], [], []>} : vector<8x128xf32>, vector<128x256xf32>, vector<8x256xf32> -> vector<8x256xf32>
    %121 = vector.extract_strided_slice %119 {offsets = [0, 0], sizes = [8, 128], strides = [1, 1]} : vector<8x384xf32> to vector<8x128xf32>
    %122 = vector.extract_strided_slice %120 {offsets = [0, 0], sizes = [8, 128], strides = [1, 1]} : vector<8x256xf32> to vector<8x128xf32>
    %123 = arith.addf %121, %122 : vector<8x128xf32>
    %124 = arith.negf %123 : vector<8x128xf32>
    %125 = math.exp %124 : vector<8x128xf32>
    %cst_47 = arith.constant 1.000000e+00 : f32
    %126 = vector.broadcast %cst_47 : f32 to vector<8x128xf32>
    %127 = arith.addf %126, %125 : vector<8x128xf32>
    %128 = arith.divf %126, %127 : vector<8x128xf32>
    %129 = vector.extract_strided_slice %119 {offsets = [0, 128], sizes = [8, 128], strides = [1, 1]} : vector<8x384xf32> to vector<8x128xf32>
    %130 = vector.extract_strided_slice %120 {offsets = [0, 128], sizes = [8, 128], strides = [1, 1]} : vector<8x256xf32> to vector<8x128xf32>
    %131 = arith.addf %129, %130 : vector<8x128xf32>
    %132 = arith.negf %131 : vector<8x128xf32>
    %133 = math.exp %132 : vector<8x128xf32>
    %cst_48 = arith.constant 1.000000e+00 : f32
    %134 = vector.broadcast %cst_48 : f32 to vector<8x128xf32>
    %135 = arith.addf %134, %133 : vector<8x128xf32>
    %136 = arith.divf %134, %135 : vector<8x128xf32>
    %137 = vector.extract_strided_slice %119 {offsets = [0, 256], sizes = [8, 128], strides = [1, 1]} : vector<8x384xf32> to vector<8x128xf32>
    %138 = arith.mulf %136, %112 : vector<8x128xf32>
    %cst_49 = arith.constant dense<0.000000e+00> : vector<8x128xf32>
    %139 = tpu.matmul %138, %13, %cst_49 {dimension_numbers = #tpu.dot_dimension_numbers<[1], [0], [0], [1], [0, 0, 1, 1], [], []>} : vector<8x128xf32>, vector<128x128xf32>, vector<8x128xf32> -> vector<8x128xf32>
    %140 = arith.addf %137, %139 : vector<8x128xf32>
    %141 = math.tanh %140 : vector<8x128xf32>
    %142 = arith.mulf %128, %112 : vector<8x128xf32>
    %cst_50 = arith.constant 1.000000e+00 : f32
    %143 = vector.broadcast %cst_50 : f32 to vector<8x128xf32>
    %144 = arith.subf %143, %128 : vector<8x128xf32>
    %145 = arith.mulf %144, %141 : vector<8x128xf32>
    %146 = arith.addf %142, %145 : vector<8x128xf32>
    %147 = arith.index_cast %c3_i32 : i32 to index
    %c0_51 = arith.constant 0 : index
    %c0_52 = arith.constant 0 : index
    %148 = vector.load %arg13[%147, %c0_51, %c0_52] : memref<8x8x128xf32, #tpu.memory_space<vmem>>, vector<1x8x128xf32>
    %149 = vector.shape_cast %148 : vector<1x8x128xf32> to vector<8x128xf32>
    %150 = vector.shape_cast %146 : vector<8x128xf32> to vector<1x8x128xf32>
    tpu.vector_store %arg13[%147, %c0_51, %c0_52], %150 {strides = array<i32>} : memref<8x8x128xf32, #tpu.memory_space<vmem>>, vector<1x8x128xf32>,
    %c4_i32 = arith.constant 4 : i32
    %151 = arith.index_cast %c4_i32 : i32 to index
    %c0_53 = arith.constant 0 : index
    %c0_54 = arith.constant 0 : index
    %152 = vector.load %arg12[%151, %c0_53, %c0_54] : memref<8x8x384xf32, #tpu.memory_space<vmem>>, vector<1x8x384xf32>
    %153 = vector.shape_cast %152 : vector<1x8x384xf32> to vector<8x384xf32>
    %cst_55 = arith.constant dense<0.000000e+00> : vector<8x256xf32>
    %154 = tpu.matmul %146, %12, %cst_55 {dimension_numbers = #tpu.dot_dimension_numbers<[1], [0], [0], [1], [0, 0, 1, 1], [], []>} : vector<8x128xf32>, vector<128x256xf32>, vector<8x256xf32> -> vector<8x256xf32>
    %155 = vector.extract_strided_slice %153 {offsets = [0, 0], sizes = [8, 128], strides = [1, 1]} : vector<8x384xf32> to vector<8x128xf32>
    %156 = vector.extract_strided_slice %154 {offsets = [0, 0], sizes = [8, 128], strides = [1, 1]} : vector<8x256xf32> to vector<8x128xf32>
    %157 = arith.addf %155, %156 : vector<8x128xf32>
    %158 = arith.negf %157 : vector<8x128xf32>
    %159 = math.exp %158 : vector<8x128xf32>
    %cst_56 = arith.constant 1.000000e+00 : f32
    %160 = vector.broadcast %cst_56 : f32 to vector<8x128xf32>
    %161 = arith.addf %160, %159 : vector<8x128xf32>
    %162 = arith.divf %160, %161 : vector<8x128xf32>
    %163 = vector.extract_strided_slice %153 {offsets = [0, 128], sizes = [8, 128], strides = [1, 1]} : vector<8x384xf32> to vector<8x128xf32>
    %164 = vector.extract_strided_slice %154 {offsets = [0, 128], sizes = [8, 128], strides = [1, 1]} : vector<8x256xf32> to vector<8x128xf32>
    %165 = arith.addf %163, %164 : vector<8x128xf32>
    %166 = arith.negf %165 : vector<8x128xf32>
    %167 = math.exp %166 : vector<8x128xf32>
    %cst_57 = arith.constant 1.000000e+00 : f32
    %168 = vector.broadcast %cst_57 : f32 to vector<8x128xf32>
    %169 = arith.addf %168, %167 : vector<8x128xf32>
    %170 = arith.divf %168, %169 : vector<8x128xf32>
    %171 = vector.extract_strided_slice %153 {offsets = [0, 256], sizes = [8, 128], strides = [1, 1]} : vector<8x384xf32> to vector<8x128xf32>
    %172 = arith.mulf %170, %146 : vector<8x128xf32>
    %cst_58 = arith.constant dense<0.000000e+00> : vector<8x128xf32>
    %173 = tpu.matmul %172, %13, %cst_58 {dimension_numbers = #tpu.dot_dimension_numbers<[1], [0], [0], [1], [0, 0, 1, 1], [], []>} : vector<8x128xf32>, vector<128x128xf32>, vector<8x128xf32> -> vector<8x128xf32>
    %174 = arith.addf %171, %173 : vector<8x128xf32>
    %175 = math.tanh %174 : vector<8x128xf32>
    %176 = arith.mulf %162, %146 : vector<8x128xf32>
    %cst_59 = arith.constant 1.000000e+00 : f32
    %177 = vector.broadcast %cst_59 : f32 to vector<8x128xf32>
    %178 = arith.subf %177, %162 : vector<8x128xf32>
    %179 = arith.mulf %178, %175 : vector<8x128xf32>
    %180 = arith.addf %176, %179 : vector<8x128xf32>
    %181 = arith.index_cast %c4_i32 : i32 to index
    %c0_60 = arith.constant 0 : index
    %c0_61 = arith.constant 0 : index
    %182 = vector.load %arg13[%181, %c0_60, %c0_61] : memref<8x8x128xf32, #tpu.memory_space<vmem>>, vector<1x8x128xf32>
    %183 = vector.shape_cast %182 : vector<1x8x128xf32> to vector<8x128xf32>
    %184 = vector.shape_cast %180 : vector<8x128xf32> to vector<1x8x128xf32>
    tpu.vector_store %arg13[%181, %c0_60, %c0_61], %184 {strides = array<i32>} : memref<8x8x128xf32, #tpu.memory_space<vmem>>, vector<1x8x128xf32>,
    %c5_i32 = arith.constant 5 : i32
    %185 = arith.index_cast %c5_i32 : i32 to index
    %c0_62 = arith.constant 0 : index
    %c0_63 = arith.constant 0 : index
    %186 = vector.load %arg12[%185, %c0_62, %c0_63] : memref<8x8x384xf32, #tpu.memory_space<vmem>>, vector<1x8x384xf32>
    %187 = vector.shape_cast %186 : vector<1x8x384xf32> to vector<8x384xf32>
    %cst_64 = arith.constant dense<0.000000e+00> : vector<8x256xf32>
    %188 = tpu.matmul %180, %12, %cst_64 {dimension_numbers = #tpu.dot_dimension_numbers<[1], [0], [0], [1], [0, 0, 1, 1], [], []>} : vector<8x128xf32>, vector<128x256xf32>, vector<8x256xf32> -> vector<8x256xf32>
    %189 = vector.extract_strided_slice %187 {offsets = [0, 0], sizes = [8, 128], strides = [1, 1]} : vector<8x384xf32> to vector<8x128xf32>
    %190 = vector.extract_strided_slice %188 {offsets = [0, 0], sizes = [8, 128], strides = [1, 1]} : vector<8x256xf32> to vector<8x128xf32>
    %191 = arith.addf %189, %190 : vector<8x128xf32>
    %192 = arith.negf %191 : vector<8x128xf32>
    %193 = math.exp %192 : vector<8x128xf32>
    %cst_65 = arith.constant 1.000000e+00 : f32
    %194 = vector.broadcast %cst_65 : f32 to vector<8x128xf32>
    %195 = arith.addf %194, %193 : vector<8x128xf32>
    %196 = arith.divf %194, %195 : vector<8x128xf32>
    %197 = vector.extract_strided_slice %187 {offsets = [0, 128], sizes = [8, 128], strides = [1, 1]} : vector<8x384xf32> to vector<8x128xf32>
    %198 = vector.extract_strided_slice %188 {offsets = [0, 128], sizes = [8, 128], strides = [1, 1]} : vector<8x256xf32> to vector<8x128xf32>
    %199 = arith.addf %197, %198 : vector<8x128xf32>
    %200 = arith.negf %199 : vector<8x128xf32>
    %201 = math.exp %200 : vector<8x128xf32>
    %cst_66 = arith.constant 1.000000e+00 : f32
    %202 = vector.broadcast %cst_66 : f32 to vector<8x128xf32>
    %203 = arith.addf %202, %201 : vector<8x128xf32>
    %204 = arith.divf %202, %203 : vector<8x128xf32>
    %205 = vector.extract_strided_slice %187 {offsets = [0, 256], sizes = [8, 128], strides = [1, 1]} : vector<8x384xf32> to vector<8x128xf32>
    %206 = arith.mulf %204, %180 : vector<8x128xf32>
    %cst_67 = arith.constant dense<0.000000e+00> : vector<8x128xf32>
    %207 = tpu.matmul %206, %13, %cst_67 {dimension_numbers = #tpu.dot_dimension_numbers<[1], [0], [0], [1], [0, 0, 1, 1], [], []>} : vector<8x128xf32>, vector<128x128xf32>, vector<8x128xf32> -> vector<8x128xf32>
    %208 = arith.addf %205, %207 : vector<8x128xf32>
    %209 = math.tanh %208 : vector<8x128xf32>
    %210 = arith.mulf %196, %180 : vector<8x128xf32>
    %cst_68 = arith.constant 1.000000e+00 : f32
    %211 = vector.broadcast %cst_68 : f32 to vector<8x128xf32>
    %212 = arith.subf %211, %196 : vector<8x128xf32>
    %213 = arith.mulf %212, %209 : vector<8x128xf32>
    %214 = arith.addf %210, %213 : vector<8x128xf32>
    %215 = arith.index_cast %c5_i32 : i32 to index
    %c0_69 = arith.constant 0 : index
    %c0_70 = arith.constant 0 : index
    %216 = vector.load %arg13[%215, %c0_69, %c0_70] : memref<8x8x128xf32, #tpu.memory_space<vmem>>, vector<1x8x128xf32>
    %217 = vector.shape_cast %216 : vector<1x8x128xf32> to vector<8x128xf32>
    %218 = vector.shape_cast %214 : vector<8x128xf32> to vector<1x8x128xf32>
    tpu.vector_store %arg13[%215, %c0_69, %c0_70], %218 {strides = array<i32>} : memref<8x8x128xf32, #tpu.memory_space<vmem>>, vector<1x8x128xf32>,
    %c6_i32 = arith.constant 6 : i32
    %219 = arith.index_cast %c6_i32 : i32 to index
    %c0_71 = arith.constant 0 : index
    %c0_72 = arith.constant 0 : index
    %220 = vector.load %arg12[%219, %c0_71, %c0_72] : memref<8x8x384xf32, #tpu.memory_space<vmem>>, vector<1x8x384xf32>
    %221 = vector.shape_cast %220 : vector<1x8x384xf32> to vector<8x384xf32>
    %cst_73 = arith.constant dense<0.000000e+00> : vector<8x256xf32>
    %222 = tpu.matmul %214, %12, %cst_73 {dimension_numbers = #tpu.dot_dimension_numbers<[1], [0], [0], [1], [0, 0, 1, 1], [], []>} : vector<8x128xf32>, vector<128x256xf32>, vector<8x256xf32> -> vector<8x256xf32>
    %223 = vector.extract_strided_slice %221 {offsets = [0, 0], sizes = [8, 128], strides = [1, 1]} : vector<8x384xf32> to vector<8x128xf32>
    %224 = vector.extract_strided_slice %222 {offsets = [0, 0], sizes = [8, 128], strides = [1, 1]} : vector<8x256xf32> to vector<8x128xf32>
    %225 = arith.addf %223, %224 : vector<8x128xf32>
    %226 = arith.negf %225 : vector<8x128xf32>
    %227 = math.exp %226 : vector<8x128xf32>
    %cst_74 = arith.constant 1.000000e+00 : f32
    %228 = vector.broadcast %cst_74 : f32 to vector<8x128xf32>
    %229 = arith.addf %228, %227 : vector<8x128xf32>
    %230 = arith.divf %228, %229 : vector<8x128xf32>
    %231 = vector.extract_strided_slice %221 {offsets = [0, 128], sizes = [8, 128], strides = [1, 1]} : vector<8x384xf32> to vector<8x128xf32>
    %232 = vector.extract_strided_slice %222 {offsets = [0, 128], sizes = [8, 128], strides = [1, 1]} : vector<8x256xf32> to vector<8x128xf32>
    %233 = arith.addf %231, %232 : vector<8x128xf32>
    %234 = arith.negf %233 : vector<8x128xf32>
    %235 = math.exp %234 : vector<8x128xf32>
    %cst_75 = arith.constant 1.000000e+00 : f32
    %236 = vector.broadcast %cst_75 : f32 to vector<8x128xf32>
    %237 = arith.addf %236, %235 : vector<8x128xf32>
    %238 = arith.divf %236, %237 : vector<8x128xf32>
    %239 = vector.extract_strided_slice %221 {offsets = [0, 256], sizes = [8, 128], strides = [1, 1]} : vector<8x384xf32> to vector<8x128xf32>
    %240 = arith.mulf %238, %214 : vector<8x128xf32>
    %cst_76 = arith.constant dense<0.000000e+00> : vector<8x128xf32>
    %241 = tpu.matmul %240, %13, %cst_76 {dimension_numbers = #tpu.dot_dimension_numbers<[1], [0], [0], [1], [0, 0, 1, 1], [], []>} : vector<8x128xf32>, vector<128x128xf32>, vector<8x128xf32> -> vector<8x128xf32>
    %242 = arith.addf %239, %241 : vector<8x128xf32>
    %243 = math.tanh %242 : vector<8x128xf32>
    %244 = arith.mulf %230, %214 : vector<8x128xf32>
    %cst_77 = arith.constant 1.000000e+00 : f32
    %245 = vector.broadcast %cst_77 : f32 to vector<8x128xf32>
    %246 = arith.subf %245, %230 : vector<8x128xf32>
    %247 = arith.mulf %246, %243 : vector<8x128xf32>
    %248 = arith.addf %244, %247 : vector<8x128xf32>
    %249 = arith.index_cast %c6_i32 : i32 to index
    %c0_78 = arith.constant 0 : index
    %c0_79 = arith.constant 0 : index
    %250 = vector.load %arg13[%249, %c0_78, %c0_79] : memref<8x8x128xf32, #tpu.memory_space<vmem>>, vector<1x8x128xf32>
    %251 = vector.shape_cast %250 : vector<1x8x128xf32> to vector<8x128xf32>
    %252 = vector.shape_cast %248 : vector<8x128xf32> to vector<1x8x128xf32>
    tpu.vector_store %arg13[%249, %c0_78, %c0_79], %252 {strides = array<i32>} : memref<8x8x128xf32, #tpu.memory_space<vmem>>, vector<1x8x128xf32>,
    %c7_i32 = arith.constant 7 : i32
    %253 = arith.index_cast %c7_i32 : i32 to index
    %c0_80 = arith.constant 0 : index
    %c0_81 = arith.constant 0 : index
    %254 = vector.load %arg12[%253, %c0_80, %c0_81] : memref<8x8x384xf32, #tpu.memory_space<vmem>>, vector<1x8x384xf32>
    %255 = vector.shape_cast %254 : vector<1x8x384xf32> to vector<8x384xf32>
    %cst_82 = arith.constant dense<0.000000e+00> : vector<8x256xf32>
    %256 = tpu.matmul %248, %12, %cst_82 {dimension_numbers = #tpu.dot_dimension_numbers<[1], [0], [0], [1], [0, 0, 1, 1], [], []>} : vector<8x128xf32>, vector<128x256xf32>, vector<8x256xf32> -> vector<8x256xf32>
    %257 = vector.extract_strided_slice %255 {offsets = [0, 0], sizes = [8, 128], strides = [1, 1]} : vector<8x384xf32> to vector<8x128xf32>
    %258 = vector.extract_strided_slice %256 {offsets = [0, 0], sizes = [8, 128], strides = [1, 1]} : vector<8x256xf32> to vector<8x128xf32>
    %259 = arith.addf %257, %258 : vector<8x128xf32>
    %260 = arith.negf %259 : vector<8x128xf32>
    %261 = math.exp %260 : vector<8x128xf32>
    %cst_83 = arith.constant 1.000000e+00 : f32
    %262 = vector.broadcast %cst_83 : f32 to vector<8x128xf32>
    %263 = arith.addf %262, %261 : vector<8x128xf32>
    %264 = arith.divf %262, %263 : vector<8x128xf32>
    %265 = vector.extract_strided_slice %255 {offsets = [0, 128], sizes = [8, 128], strides = [1, 1]} : vector<8x384xf32> to vector<8x128xf32>
    %266 = vector.extract_strided_slice %256 {offsets = [0, 128], sizes = [8, 128], strides = [1, 1]} : vector<8x256xf32> to vector<8x128xf32>
    %267 = arith.addf %265, %266 : vector<8x128xf32>
    %268 = arith.negf %267 : vector<8x128xf32>
    %269 = math.exp %268 : vector<8x128xf32>
    %cst_84 = arith.constant 1.000000e+00 : f32
    %270 = vector.broadcast %cst_84 : f32 to vector<8x128xf32>
    %271 = arith.addf %270, %269 : vector<8x128xf32>
    %272 = arith.divf %270, %271 : vector<8x128xf32>
    %273 = vector.extract_strided_slice %255 {offsets = [0, 256], sizes = [8, 128], strides = [1, 1]} : vector<8x384xf32> to vector<8x128xf32>
    %274 = arith.mulf %272, %248 : vector<8x128xf32>
    %cst_85 = arith.constant dense<0.000000e+00> : vector<8x128xf32>
    %275 = tpu.matmul %274, %13, %cst_85 {dimension_numbers = #tpu.dot_dimension_numbers<[1], [0], [0], [1], [0, 0, 1, 1], [], []>} : vector<8x128xf32>, vector<128x128xf32>, vector<8x128xf32> -> vector<8x128xf32>
    %276 = arith.addf %273, %275 : vector<8x128xf32>
    %277 = math.tanh %276 : vector<8x128xf32>
    %278 = arith.mulf %264, %248 : vector<8x128xf32>
    %cst_86 = arith.constant 1.000000e+00 : f32
    %279 = vector.broadcast %cst_86 : f32 to vector<8x128xf32>
    %280 = arith.subf %279, %264 : vector<8x128xf32>
    %281 = arith.mulf %280, %277 : vector<8x128xf32>
    %282 = arith.addf %278, %281 : vector<8x128xf32>
    %283 = arith.index_cast %c7_i32 : i32 to index
    %c0_87 = arith.constant 0 : index
    %c0_88 = arith.constant 0 : index
    %284 = vector.load %arg13[%283, %c0_87, %c0_88] : memref<8x8x128xf32, #tpu.memory_space<vmem>>, vector<1x8x128xf32>
    %285 = vector.shape_cast %284 : vector<1x8x128xf32> to vector<8x128xf32>
    %286 = vector.shape_cast %282 : vector<8x128xf32> to vector<1x8x128xf32>
    tpu.vector_store %arg13[%283, %c0_87, %c0_88], %286 {strides = array<i32>} : memref<8x8x128xf32, #tpu.memory_space<vmem>>, vector<1x8x128xf32>,
    %c8_i32 = arith.constant 8 : i32
    %c0_89 = arith.constant 0 : index
    %c0_90 = arith.constant 0 : index
    %287 = vector.load %arg11[%c0_89, %c0_90] : memref<8x128xf32, #tpu.memory_space<vmem>>, vector<8x128xf32>
    tpu.vector_store %arg11[%c0_89, %c0_90], %282 {strides = array<i32>} : memref<8x128xf32, #tpu.memory_space<vmem>>, vector<8x128xf32>,
    %c1_i32_91 = arith.constant 1 : i32
    %288 = arith.cmpi eq, %arg0, %c1_i32_91 : i32
    %289 = arith.extui %288 : i1 to i32
    %c0_i32_92 = arith.constant 0 : i32
    %290 = arith.cmpi ne, %289, %c0_i32_92 : i32
    scf.if %290 {
      %c0_104 = arith.constant 0 : index
      %c0_105 = arith.constant 0 : index
      %300 = vector.load %arg10[%c0_104, %c0_105] : memref<8x128xf32, #tpu.memory_space<vmem>>, vector<8x128xf32>
      tpu.vector_store %arg10[%c0_104, %c0_105], %282 {strides = array<i32>} : memref<8x128xf32, #tpu.memory_space<vmem>>, vector<8x128xf32>,
    } else {
    }
    %c0_93 = arith.constant 0 : index
    %c0_94 = arith.constant 0 : index
    %c0_95 = arith.constant 0 : index
    %291 = vector.load %arg13[%c0_93, %c0_94, %c0_95] : memref<8x8x128xf32, #tpu.memory_space<vmem>>, vector<8x8x128xf32>
    %292 = vector.shape_cast %291 : vector<8x8x128xf32> to vector<64x128xf32>
    %c0_96 = arith.constant 0 : index
    %c0_97 = arith.constant 0 : index
    %293 = vector.load %arg7[%c0_96, %c0_97] : memref<128x128xf32, #tpu.memory_space<vmem>>, vector<128x128xf32>
    %cst_98 = arith.constant dense<0.000000e+00> : vector<64x128xf32>
    %294 = tpu.matmul %292, %293, %cst_98 {dimension_numbers = #tpu.dot_dimension_numbers<[1], [0], [0], [1], [0, 0, 1, 1], [], []>} : vector<64x128xf32>, vector<128x128xf32>, vector<64x128xf32> -> vector<64x128xf32>
    %c0_99 = arith.constant 0 : index
    %c0_100 = arith.constant 0 : index
    %295 = vector.load %arg8[%c0_99, %c0_100] : memref<1x128xf32, #tpu.memory_space<vmem>>, vector<1x128xf32>
    %296 = vector.broadcast %295 : vector<1x128xf32> to vector<64x128xf32>
    %297 = arith.addf %294, %296 : vector<64x128xf32>
    %298 = vector.shape_cast %297 : vector<64x128xf32> to vector<8x8x128xf32>
    %c0_101 = arith.constant 0 : index
    %c0_102 = arith.constant 0 : index
    %c0_103 = arith.constant 0 : index
    %299 = vector.load %arg9[%c0_101, %c0_102, %c0_103] : memref<8x8x128xf32, #tpu.memory_space<vmem>>, vector<8x8x128xf32>
    tpu.vector_store %arg9[%c0_101, %c0_102, %c0_103], %298 {strides = array<i32>} : memref<8x8x128xf32, #tpu.memory_space<vmem>>, vector<8x8x128xf32>,
    return
  }
  func.func @transform_0(%arg0: i32) -> (i32, i32, i32) {
    %c0_i32 = arith.constant 0 : i32
    %c0_i32_0 = arith.constant 0 : i32
    %c0_i32_1 = arith.constant 0 : i32
    return %arg0, %c0_i32, %c0_i32_0 : i32, i32, i32
  }
  func.func @transform_1(%arg0: i32) -> (i32, i32) {
    %c0_i32 = arith.constant 0 : i32
    %c0_i32_0 = arith.constant 0 : i32
    %c0_i32_1 = arith.constant 0 : i32
    return %c0_i32, %c0_i32_0 : i32, i32
  }
  func.func @transform_2(%arg0: i32) -> (i32, i32) {
    %c0_i32 = arith.constant 0 : i32
    %c0_i32_0 = arith.constant 0 : i32
    %c0_i32_1 = arith.constant 0 : i32
    return %c0_i32, %c0_i32_0 : i32, i32
  }
  func.func @transform_3(%arg0: i32) -> (i32, i32) {
    %c0_i32 = arith.constant 0 : i32
    %c0_i32_0 = arith.constant 0 : i32
    %c0_i32_1 = arith.constant 0 : i32
    return %c0_i32, %c0_i32_0 : i32, i32
  }
  func.func @transform_4(%arg0: i32) -> (i32, i32) {
    %c0_i32 = arith.constant 0 : i32
    %c0_i32_0 = arith.constant 0 : i32
    %c0_i32_1 = arith.constant 0 : i32
    return %c0_i32, %c0_i32_0 : i32, i32
  }
  func.func @transform_5(%arg0: i32) -> (i32, i32) {
    %c0_i32 = arith.constant 0 : i32
    %c0_i32_0 = arith.constant 0 : i32
    %c0_i32_1 = arith.constant 0 : i32
    return %c0_i32, %c0_i32_0 : i32, i32
  }
  func.func @transform_6(%arg0: i32) -> (i32, i32) {
    %c0_i32 = arith.constant 0 : i32
    %c0_i32_0 = arith.constant 0 : i32
    %c0_i32_1 = arith.constant 0 : i32
    return %c0_i32, %c0_i32_0 : i32, i32
  }
  func.func @transform_7(%arg0: i32) -> (i32, i32) {
    %c0_i32 = arith.constant 0 : i32
    %c0_i32_0 = arith.constant 0 : i32
    %c0_i32_1 = arith.constant 0 : i32
    return %c0_i32, %c0_i32_0 : i32, i32
  }
  func.func @transform_8(%arg0: i32) -> (i32, i32, i32) {
    %c0_i32 = arith.constant 0 : i32
    %c0_i32_0 = arith.constant 0 : i32
    %c0_i32_1 = arith.constant 0 : i32
    return %arg0, %c0_i32, %c0_i32_0 : i32, i32, i32
  }
  func.func @transform_9(%arg0: i32) -> (i32, i32) {
    %c0_i32 = arith.constant 0 : i32
    %c0_i32_0 = arith.constant 0 : i32
    %c0_i32_1 = arith.constant 0 : i32
    return %c0_i32, %c0_i32_0 : i32, i32
  }
}

</mosaic_0001>

<llo_original>
// kernel: multilayer_gru_forward.2
$region0: #{multilayer_gru_forward.2}
  #allocation0 [shape = 'u32[]', space=smem, size = 0x4, offset = 0x4, fixed_abs, tag = 'smem constant byte address 0x4 - core index']
  #allocation1 [shape = 'u32[144,128]{1,0:T(1,128)}', space=vmem, size = 0x12000, scoped, tag = 'internal scratch']
  #allocation2 [shape = 'f32[8,128]{1,0:T(8,128)}', space=vmem, size = 0x1000, scoped, tag = 'scratch operand']
  #allocation3 [shape = 'f32[8,8,384]{2,1,0:T(8,128)}', space=vmem, size = 0x18000, scoped, tag = 'scratch operand']
  %s0 = inlined_call_operand.vmem [shape: f32[16,8,128], index: 0, kind: input, shape index: {}]
  %s1 = inlined_call_operand.vmem [shape: f32[8,128], index: 1, kind: input, shape index: {}]
  %s2 = inlined_call_operand.vmem [shape: f32[128,384], index: 2, kind: input, shape index: {}]
  %s3 = inlined_call_operand.vmem [shape: f32[128,256], index: 3, kind: input, shape index: {}]
  %s4 = inlined_call_operand.vmem [shape: f32[128,128], index: 4, kind: input, shape index: {}]
  %s5 = inlined_call_operand.vmem [shape: f32[1,384], index: 5, kind: input, shape index: {}]
  %s6 = inlined_call_operand.vmem [shape: f32[16,8,128], index: 6, kind: output, shape index: {0}]
  %s7 = inlined_call_operand.vmem [shape: f32[8,128], index: 7, kind: output, shape index: {1}]
  %8 = xla_tuple %s6, %s7
  %s9 = sld [smem:[#allocation0]]
  $region73: #{multilayer_gru_forward.2} parent=0
    _
  %s11 = ssub.s32 1, %s9
  %s12 = scalar_select 0, %s11, %s9
  loop: start=0, step=1, limit=4
  $region2: #{multilayer_gru_forward.2} parent=0 // loop_pre_header
    _
  $region3: #{multilayer_gru_forward.2} parent=0 // loop_header
    %s14 = sphi 0, %s18
    %p15 = scmp.ge.s32.totalorder %s14, 4
    %s24 = sphi 0, %s26
    %s27 = sphi 0, %s24
    %s28 = sphi 0, %s27
    %s44 = sphi 0, %s28
    %s48 = sphi 0, %s48
    %s50 = sphi 0, %s48
    %s51 = sphi 0, %s50
    %s65 = sphi 0, %s51
    %s69 = sphi 0, %s69
    %s71 = sphi 0, %s69
    %s72 = sphi 0, %s71
    %s86 = sphi 0, %s72
    %s90 = sphi 0, %s90
    %s92 = sphi 0, %s90
    %s93 = sphi 0, %s92
    %s107 = sphi 0, %s93
    %s111 = sphi 0, %s111
    %s113 = sphi 0, %s111
    %s114 = sphi 0, %s113
    %s128 = sphi 0, %s114
    %s132 = sphi 0, %s132
    %s134 = sphi 0, %s132
    %s135 = sphi 0, %s134
    %s149 = sphi 0, %s135
    %s155 = sphi 0, %s157
    %s158 = sphi 0, %s155
    %s159 = sphi 0, %s158
    %s175 = sphi 0, %s159
    %s179 = sphi 0, %s179
    %s181 = sphi 0, %s179
    %s182 = sphi 0, %s181
    %s196 = sphi 0, %s182
  $region4: #{multilayer_gru_forward.2} parent=0 // loop_header_branch
    %17 = sbr.rel (%p15) target = $region8
  $region5: #{multilayer_gru_forward.2} parent=0 // loop_body
    %s19 = ssub.s32 %s14, 1
    %s20 = ssub.s32 %s14, 2
    %s21 = sadd.s32 %s14, 1
    %s22 = ssub.s32 %s14, %s21
    %p23 = scmp.eq.s32.totalorder %s22, 0
    %s25 = sadd.s32 %s24, 1
    %s26 = scalar_select %p23, %s24, %s25
    %p29 = pneg %p23
    %p30 = scmp.eq.s32.totalorder %s14, 1
    %p31 = por %p29, %p30
    %p32 = scmp.ne.s32.totalorder %s24, %s27
    %p33 = scmp.eq.s32.totalorder %s14, 0
    %p34 = por %p32, %p33
    %p35 = scmp.ne.s32.totalorder %s24, %s27
    %p36 = scmp.eq.s32.totalorder %s19, 1
    %p37 = por %p35, %p36
    %p38 = scmp.ne.s32.totalorder %s27, %s28
    %p39 = scmp.eq.s32.totalorder %s19, 0
    %p40 = por %p38, %p39
    %p41 = scmp.ne.s32.totalorder %s27, %s28
    %p42 = scmp.eq.s32.totalorder %s20, 1
    %p43 = por %p41, %p42
    %p45 = scmp.ne.s32.totalorder %s28, %s44
    %p46 = scmp.eq.s32.totalorder %s20, 0
    %p47 = por %p45, %p46
    %s49 = sadd.s32 %s48, 1
    %p52 = scmp.eq.s32.totalorder %s14, 1
    %p53 = scmp.ne.s32.totalorder %s48, %s50
    %p54 = scmp.eq.s32.totalorder %s14, 0
    %p55 = por %p53, %p54
    %p56 = scmp.ne.s32.totalorder %s48, %s50
    %p57 = scmp.eq.s32.totalorder %s19, 1
    %p58 = por %p56, %p57
    %p59 = scmp.ne.s32.totalorder %s50, %s51
    %p60 = scmp.eq.s32.totalorder %s19, 0
    %p61 = por %p59, %p60
    %p62 = scmp.ne.s32.totalorder %s50, %s51
    %p63 = scmp.eq.s32.totalorder %s20, 1
    %p64 = por %p62, %p63
    %p66 = scmp.ne.s32.totalorder %s51, %s65
    %p67 = scmp.eq.s32.totalorder %s20, 0
    %p68 = por %p66, %p67
    %s70 = sadd.s32 %s69, 1
    %p73 = scmp.eq.s32.totalorder %s14, 1
    %p74 = scmp.ne.s32.totalorder %s69, %s71
    %p75 = scmp.eq.s32.totalorder %s14, 0
    %p76 = por %p74, %p75
    %p77 = scmp.ne.s32.totalorder %s69, %s71
    %p78 = scmp.eq.s32.totalorder %s19, 1
    %p79 = por %p77, %p78
    %p80 = scmp.ne.s32.totalorder %s71, %s72
    %p81 = scmp.eq.s32.totalorder %s19, 0
    %p82 = por %p80, %p81
    %p83 = scmp.ne.s32.totalorder %s71, %s72
    %p84 = scmp.eq.s32.totalorder %s20, 1
    %p85 = por %p83, %p84
    %p87 = scmp.ne.s32.totalorder %s72, %s86
    %p88 = scmp.eq.s32.totalorder %s20, 0
    %p89 = por %p87, %p88
    %s91 = sadd.s32 %s90, 1
    %p94 = scmp.eq.s32.totalorder %s14, 1
    %p95 = scmp.ne.s32.totalorder %s90, %s92
    %p96 = scmp.eq.s32.totalorder %s14, 0
    %p97 = por %p95, %p96
    %p98 = scmp.ne.s32.totalorder %s90, %s92
    %p99 = scmp.eq.s32.totalorder %s19, 1
    %p100 = por %p98, %p99
    %p101 = scmp.ne.s32.totalorder %s92, %s93
    %p102 = scmp.eq.s32.totalorder %s19, 0
    %p103 = por %p101, %p102
    %p104 = scmp.ne.s32.totalorder %s92, %s93
    %p105 = scmp.eq.s32.totalorder %s20, 1
    %p106 = por %p104, %p105
    %p108 = scmp.ne.s32.totalorder %s93, %s107
    %p109 = scmp.eq.s32.totalorder %s20, 0
    %p110 = por %p108, %p109
    %s112 = sadd.s32 %s111, 1
    %p115 = scmp.eq.s32.totalorder %s14, 1
    %p116 = scmp.ne.s32.totalorder %s111, %s113
    %p117 = scmp.eq.s32.totalorder %s14, 0
    %p118 = por %p116, %p117
    %p119 = scmp.ne.s32.totalorder %s111, %s113
    %p120 = scmp.eq.s32.totalorder %s19, 1
    %p121 = por %p119, %p120
    %p122 = scmp.ne.s32.totalorder %s113, %s114
    %p123 = scmp.eq.s32.totalorder %s19, 0
    %p124 = por %p122, %p123
    %p125 = scmp.ne.s32.totalorder %s113, %s114
    %p126 = scmp.eq.s32.totalorder %s20, 1
    %p127 = por %p125, %p126
    %p129 = scmp.ne.s32.totalorder %s114, %s128
    %p130 = scmp.eq.s32.totalorder %s20, 0
    %p131 = por %p129, %p130
    %s133 = sadd.s32 %s132, 1
    %p136 = scmp.eq.s32.totalorder %s14, 1
    %p137 = scmp.ne.s32.totalorder %s132, %s134
    %p138 = scmp.eq.s32.totalorder %s14, 0
    %p139 = por %p137, %p138
    %p140 = scmp.ne.s32.totalorder %s132, %s134
    %p141 = scmp.eq.s32.totalorder %s19, 1
    %p142 = por %p140, %p141
    %p143 = scmp.ne.s32.totalorder %s134, %s135
    %p144 = scmp.eq.s32.totalorder %s19, 0
    %p145 = por %p143, %p144
    %p146 = scmp.ne.s32.totalorder %s134, %s135
    %p147 = scmp.eq.s32.totalorder %s20, 1
    %p148 = por %p146, %p147
    %p150 = scmp.ne.s32.totalorder %s135, %s149
    %p151 = scmp.eq.s32.totalorder %s20, 0
    %p152 = por %p150, %p151
    %s153 = ssub.s32 %s14, %s21
    %p154 = scmp.eq.s32.totalorder %s153, 0
    %s156 = sadd.s32 %s155, 1
    %s157 = scalar_select %p154, %s155, %s156
    %p160 = pneg %p154
    %p161 = scmp.eq.s32.totalorder %s14, 1
    %p162 = por %p160, %p161
    %p163 = scmp.ne.s32.totalorder %s155, %s158
    %p164 = scmp.eq.s32.totalorder %s14, 0
    %p165 = por %p163, %p164
    %p166 = scmp.ne.s32.totalorder %s155, %s158
    %p167 = scmp.eq.s32.totalorder %s19, 1
    %p168 = por %p166, %p167
    %p169 = scmp.ne.s32.totalorder %s158, %s159
    %p170 = scmp.eq.s32.totalorder %s19, 0
    %p171 = por %p169, %p170
    %p172 = scmp.ne.s32.totalorder %s158, %s159
    %p173 = scmp.eq.s32.totalorder %s20, 1
    %p174 = por %p172, %p173
    %p176 = scmp.ne.s32.totalorder %s159, %s175
    %p177 = scmp.eq.s32.totalorder %s20, 0
    %p178 = por %p176, %p177
    %s180 = sadd.s32 %s179, 1
    %p183 = scmp.eq.s32.totalorder %s14, 1
    %p184 = scmp.ne.s32.totalorder %s179, %s181
    %p185 = scmp.eq.s32.totalorder %s14, 0
    %p186 = por %p184, %p185
    %p187 = scmp.ne.s32.totalorder %s179, %s181
    %p188 = scmp.eq.s32.totalorder %s19, 1
    %p189 = por %p187, %p188
    %p190 = scmp.ne.s32.totalorder %s181, %s182
    %p191 = scmp.eq.s32.totalorder %s19, 0
    %p192 = por %p190, %p191
    %p193 = scmp.ne.s32.totalorder %s181, %s182
    %p194 = scmp.eq.s32.totalorder %s20, 1
    %p195 = por %p193, %p194
    %p197 = scmp.ne.s32.totalorder %s182, %s196
    %p198 = scmp.eq.s32.totalorder %s20, 0
    %p199 = por %p197, %p198
    %p200 = scmp.le.s32.totalorder 1, %s14
    %p201 = scmp.lt.s32.totalorder %s14, 3
    %p202 = pnand %p200, %p201
    %p203 = pneg %p202
    // Predicated region
    $region9: #{multilayer_gru_forward.2} parent=5 // pred_check
      _
    $region10: #{multilayer_gru_forward.2} parent=5 // pred_check_branch
      %205 = sbr.rel (%p202) target = $region12
    $region11: #{multilayer_gru_forward.2} parent=5 // pred_region
      %s206 = ssub.s32 %s14, 1
      // Predicated region
      $region13: #{multilayer_gru_forward.2} parent=11 // pred_check
        %p207 = pneg %p61
      $region14: #{multilayer_gru_forward.2} parent=11 // pred_check_branch
        %209 = sbr.rel (%p207) target = $region16
      $region15: #{multilayer_gru_forward.2} parent=11 // pred_region
        _
      $region16: #{multilayer_gru_forward.2} parent=11 // pred_fallthru
        _
      // Predicated region
      $region17: #{multilayer_gru_forward.2} parent=11 // pred_check
        %p210 = pneg %p82
      $region18: #{multilayer_gru_forward.2} parent=11 // pred_check_branch
        %212 = sbr.rel (%p210) target = $region20
      $region19: #{multilayer_gru_forward.2} parent=11 // pred_region
        _
      $region20: #{multilayer_gru_forward.2} parent=11 // pred_fallthru
        _
      // Predicated region
      $region21: #{multilayer_gru_forward.2} parent=11 // pred_check
        %p213 = pneg %p103
      $region22: #{multilayer_gru_forward.2} parent=11 // pred_check_branch
        %215 = sbr.rel (%p213) target = $region24
      $region23: #{multilayer_gru_forward.2} parent=11 // pred_region
        _
      $region24: #{multilayer_gru_forward.2} parent=11 // pred_fallthru
        _
      // Predicated region
      $region25: #{multilayer_gru_forward.2} parent=11 // pred_check
        %p216 = pneg %p124
      $region26: #{multilayer_gru_forward.2} parent=11 // pred_check_branch
        %218 = sbr.rel (%p216) target = $region28
      $region27: #{multilayer_gru_forward.2} parent=11 // pred_region
        _
      $region28: #{multilayer_gru_forward.2} parent=11 // pred_fallthru
        _
      // Predicated region
      $region29: #{multilayer_gru_forward.2} parent=11 // pred_check
        %p219 = pneg %p145
      $region30: #{multilayer_gru_forward.2} parent=11 // pred_check_branch
        %221 = sbr.rel (%p219) target = $region32
      $region31: #{multilayer_gru_forward.2} parent=11 // pred_region
        _
      $region32: #{multilayer_gru_forward.2} parent=11 // pred_fallthru
        _
    $region12: #{multilayer_gru_forward.2} parent=5 // pred_fallthru
      _
    %p222 = scmp.lt.s32.totalorder %s14, 2
    // Predicated region
    $region33: #{multilayer_gru_forward.2} parent=5 // pred_check
      %p223 = pneg %p222
    $region34: #{multilayer_gru_forward.2} parent=5 // pred_check_branch
      %225 = sbr.rel (%p223) target = $region36
    $region35: #{multilayer_gru_forward.2} parent=5 // pred_region
      // Predicated region
      $region37: #{multilayer_gru_forward.2} parent=35 // pred_check
        %p226 = pneg %p34
      $region38: #{multilayer_gru_forward.2} parent=35 // pred_check_branch
        %228 = sbr.rel (%p226) target = $region40
      $region39: #{multilayer_gru_forward.2} parent=35 // pred_region
        %s229 = smul.u32 8, %s14
        %p230 = scmp.lt.s32.totalorder %s229, 15
        %s231 = scalar_select %p230, %s229, 15
        %s232 = smul.addr %s231, 8
        %s233 = scalar_lea.vmem %s0, %s232
        %s234 = smul.u32 8, %s14
      $region40: #{multilayer_gru_forward.2} parent=35 // pred_fallthru
        _
    $region36: #{multilayer_gru_forward.2} parent=5 // pred_fallthru
      _
    %p235 = scmp.le.s32.totalorder 1, %s14
    %p236 = scmp.lt.s32.totalorder %s14, 3
    %p237 = pnand %p235, %p236
    %p238 = pneg %p237
    // Predicated region
    $region41: #{multilayer_gru_forward.2} parent=5 // pred_check
      _
    $region42: #{multilayer_gru_forward.2} parent=5 // pred_check_branch
      %240 = sbr.rel (%p237) target = $region44
    $region43: #{multilayer_gru_forward.2} parent=5 // pred_region
      %s241 = ssub.s32 %s14, 1
      %s242 = smul.u32 8, %s19
      %p243 = scmp.lt.s32.totalorder %s242, 15
      %s244 = scalar_select %p243, %s242, 15
      %s245 = smul.addr %s244, 8
      %s246 = scalar_lea.vmem %s0, %s245
      %p247 = pneg %p40
      %p248 = pneg %p37
      %p249 = pneg %p61
      %p250 = pneg %p58
      %p251 = pneg %p82
      %p252 = pneg %p79
      %p253 = pneg %p103
      %p254 = pneg %p100
      %p255 = pneg %p124
      %p256 = pneg %p121
      %p257 = pneg %p145
      %p258 = pneg %p142
      %p259 = pneg %p171
      %p260 = pneg %p168
      %s261 = smul.u32 8, %s19
      %p262 = scmp.lt.s32.totalorder %s261, 15
      %s263 = scalar_select %p262, %s261, 15
      %s264 = smul.addr %s263, 8
      %s265 = scalar_lea.vmem %s6, %s264
      %p266 = pneg %p192
      %p267 = pneg %p189
      %s268 = smul.u32 8, %s19
      %p269 = scmp.lt.s32.totalorder %s268, 15
      %s270 = scalar_select %p269, %s268, 15
      %s271 = smul.addr %s270, 8
      %s272 = scalar_lea.vmem %s0, %s271
      %s273 = smul.u32 8, %s19
      %s274 = smul.u32 8, %s19
      %p275 = scmp.lt.s32.totalorder %s274, 15
      %s276 = scalar_select %p275, %s274, 15
      %s277 = smul.addr %s276, 8
      %s278 = scalar_lea.vmem %s6, %s277
      %s279 = smul.u32 8, %s19
      %p280 = scmp.eq.s32.totalorder %s19, 0
      // Predicated region
      $region45: #{multilayer_gru_forward.2} parent=43 // pred_check
        %p281 = pneg %p280
      $region46: #{multilayer_gru_forward.2} parent=43 // pred_check_branch
        %283 = sbr.rel (%p281) target = $region48
      $region47: #{multilayer_gru_forward.2} parent=43 // pred_region
        %v284 = vld [vmem:[%s1] sm:$0xff]
        %285 = vst [vmem:[#allocation2] sm:$0xff] %v284
      $region48: #{multilayer_gru_forward.2} parent=43 // pred_fallthru
        _
      %v286 = vld [vmem:[%s272] sm:$0xff]
      %v287 = vld [vmem:[%s272 + $0x8] sm:$0xff]
      %v288 = vld [vmem:[%s272 + $0x10] sm:$0xff]
      %v289 = vld [vmem:[%s272 + $0x18] sm:$0xff]
      %v290 = vld [vmem:[%s272 + $0x20] sm:$0xff]
      %v291 = vld [vmem:[%s272 + $0x28] sm:$0xff]
      %v292 = vld [vmem:[%s272 + $0x30] sm:$0xff]
      %v293 = vld [vmem:[%s272 + $0x38] sm:$0xff]
      %v294 = vld [vmem:[%s2] sm:$0xff]
      %v295 = vld [vmem:[%s2 + $0x8] sm:$0xff]
      %v296 = vld [vmem:[%s2 + $0x10] sm:$0xff]
      %v297 = vld [vmem:[%s2 + $0x18] sm:$0xff]
      %v298 = vld [vmem:[%s2 + $0x20] sm:$0xff]
      %v299 = vld [vmem:[%s2 + $0x28] sm:$0xff]
      %v300 = vld [vmem:[%s2 + $0x30] sm:$0xff]
      %v301 = vld [vmem:[%s2 + $0x38] sm:$0xff]
      %v302 = vld [vmem:[%s2 + $0x40] sm:$0xff]
      %v303 = vld [vmem:[%s2 + $0x48] sm:$0xff]
      %v304 = vld [vmem:[%s2 + $0x50] sm:$0xff]
      %v305 = vld [vmem:[%s2 + $0x58] sm:$0xff]
      %v306 = vld [vmem:[%s2 + $0x60] sm:$0xff]
      %v307 = vld [vmem:[%s2 + $0x68] sm:$0xff]
      %v308 = vld [vmem:[%s2 + $0x70] sm:$0xff]
      %v309 = vld [vmem:[%s2 + $0x78] sm:$0xff]
      %v310 = vld [vmem:[%s2 + $0x80] sm:$0xff]
      %v311 = vld [vmem:[%s2 + $0x88] sm:$0xff]
      %v312 = vld [vmem:[%s2 + $0x90] sm:$0xff]
      %v313 = vld [vmem:[%s2 + $0x98] sm:$0xff]
      %v314 = vld [vmem:[%s2 + $0xa0] sm:$0xff]
      %v315 = vld [vmem:[%s2 + $0xa8] sm:$0xff]
      %v316 = vld [vmem:[%s2 + $0xb0] sm:$0xff]
      %v317 = vld [vmem:[%s2 + $0xb8] sm:$0xff]
      %v318 = vld [vmem:[%s2 + $0xc0] sm:$0xff]
      %v319 = vld [vmem:[%s2 + $0xc8] sm:$0xff]
      %v320 = vld [vmem:[%s2 + $0xd0] sm:$0xff]
      %v321 = vld [vmem:[%s2 + $0xd8] sm:$0xff]
      %v322 = vld [vmem:[%s2 + $0xe0] sm:$0xff]
      %v323 = vld [vmem:[%s2 + $0xe8] sm:$0xff]
      %v324 = vld [vmem:[%s2 + $0xf0] sm:$0xff]
      %v325 = vld [vmem:[%s2 + $0xf8] sm:$0xff]
      %v326 = vld [vmem:[%s2 + $0x100] sm:$0xff]
      %v327 = vld [vmem:[%s2 + $0x108] sm:$0xff]
      %v328 = vld [vmem:[%s2 + $0x110] sm:$0xff]
      %v329 = vld [vmem:[%s2 + $0x118] sm:$0xff]
      %v330 = vld [vmem:[%s2 + $0x120] sm:$0xff]
      %v331 = vld [vmem:[%s2 + $0x128] sm:$0xff]
      %v332 = vld [vmem:[%s2 + $0x130] sm:$0xff]
      %v333 = vld [vmem:[%s2 + $0x138] sm:$0xff]
      %v334 = vld [vmem:[%s2 + $0x140] sm:$0xff]
      %v335 = vld [vmem:[%s2 + $0x148] sm:$0xff]
      %v336 = vld [vmem:[%s2 + $0x150] sm:$0xff]
      %v337 = vld [vmem:[%s2 + $0x158] sm:$0xff]
      %v338 = vld [vmem:[%s2 + $0x160] sm:$0xff]
      %v339 = vld [vmem:[%s2 + $0x168] sm:$0xff]
      %v340 = vld [vmem:[%s2 + $0x170] sm:$0xff]
      %v341 = vld [vmem:[%s2 + $0x178] sm:$0xff]
      %v342 = vld [vmem:[%s5] sm:$0x7]
      %v344 = vlaneseq
      %v345 = vshrl.u32 %v344, 7
      %v346 = vsub.s32 0, %v345
      %v347 = vrot.slane %v342, %v346
      %v348 = vlaneseq
      %v349 = vshrl.u32 %v348, 7
      %v350 = vsub.s32 1, %v349
      %v351 = vrot.slane %v342, %v350
      %v352 = vlaneseq
      %v353 = vshrl.u32 %v352, 7
      %v354 = vsub.s32 2, %v353
      %v355 = vrot.slane %v342, %v354
      %359 = vmatprep.subr.mxu0 %v340
      %360 = vmatpush1.msra.mxu0 %v339
      %361 = vmatprep.subr.mxu0 %v337
      %362 = vmatpush1.msra.mxu0 %v336
      %363 = vmatprep.subr.mxu0 %v334
      %364 = vmatpush1.msra.mxu0 %v333
      %365 = vmatprep.subr.mxu0 %v331
      %366 = vmatpush1.msra.mxu0 %v330
      %367 = vmatprep.subr.mxu0 %v328
      %368 = vmatpush1.msra.mxu0 %v327
      %369 = vmatprep.subr.mxu0 %v325
      %370 = vmatpush1.msra.mxu0 %v324
      %371 = vmatprep.subr.mxu0 %v322
      %372 = vmatpush1.msra.mxu0 %v321
      %373 = vmatprep.subr.mxu0 %v319
      %374 = vmatpush1.msra.mxu0 %v318
      %375 = vmatprep.subr.mxu0 %v316
      %376 = vmatpush1.msra.mxu0 %v315
      %377 = vmatprep.subr.mxu0 %v313
      %378 = vmatpush1.msra.mxu0 %v312
      %379 = vmatprep.subr.mxu0 %v310
      %380 = vmatpush1.msra.mxu0 %v309
      %381 = vmatprep.subr.mxu0 %v307
      %382 = vmatpush1.msra.mxu0 %v306
      %383 = vmatprep.subr.mxu0 %v304
      %384 = vmatpush1.msra.mxu0 %v303
      %385 = vmatprep.subr.mxu0 %v301
      %386 = vmatpush1.msra.mxu0 %v300
      %387 = vmatprep.subr.mxu0 %v298
      %388 = vmatpush1.msra.mxu0 %v297
      %389 = vmatprep.subr.mxu0 %v295
      %390 = vmatpush1.msra.mxu0 %v294
      %391 = vmatprep.subr.mxu0 0.0
      %392 = vmatpush2.msra.mxu0 0.0
      %393 = vmatprep.subr.mxu0 0.0
      %394 = vmatpush2.msra.mxu0 0.0
      %395 = vmatprep.subr.mxu0 0.0
      %396 = vmatpush2.msra.mxu0 0.0
      %397 = vmatprep.subr.mxu0 0.0
      %398 = vmatpush2.msra.mxu0 0.0
      %399 = vmatprep.subr.mxu0 0.0
      %400 = vmatpush2.msra.mxu0 0.0
      %401 = vmatprep.subr.mxu0 0.0
      %402 = vmatpush2.msra.mxu0 0.0
      %403 = vmatprep.subr.mxu0 0.0
      %404 = vmatpush2.msra.mxu0 0.0
      %405 = vmatprep.subr.mxu0 0.0
      %406 = vmatpush2.msra.mxu0 0.0
      %407 = vmatprep.subr.mxu0 0.0
      %408 = vmatpush2.msra.mxu0 0.0
      %409 = vmatprep.subr.mxu0 0.0
      %410 = vmatpush2.msra.mxu0 0.0
      %411 = vmatprep.subr.mxu0 0.0
      %412 = vmatpush2.msra.mxu0 0.0
      %413 = vmatprep.subr.mxu0 0.0
      %414 = vmatpush2.msra.mxu0 0.0
      %415 = vmatprep.subr.mxu0 0.0
      %416 = vmatpush2.msra.mxu0 0.0
      %417 = vmatprep.subr.mxu0 0.0
      %418 = vmatpush2.msra.mxu0 0.0
      %419 = vmatprep.subr.mxu0 0.0
      %420 = vmatpush2.msra.mxu0 0.0
      %421 = vmatprep.subr.mxu0 0.0
      %422 = vmatpush2.msra.mxu0 0.0
      %423 = vmatprep.mubr.f32.mxu0 0.0
      %424 = vmatmul.mubr.f32.gmra.mxu0 %v286
      %v425 = vpop.f32.mrf.mxu0
      %v426 = vadd.f32 %v347, %v425
      %v427 = vpop.f32.mrf.mxu0
      %v428 = vadd.f32 %v351, %v427
      %429 = vmatprep.mubr.f32.mxu0 0.0
      %430 = vmatmul.mubr.f32.gmra.mxu0 %v287
      %v431 = vpop.f32.mrf.mxu0
      %v432 = vadd.f32 %v347, %v431
      %v433 = vpop.f32.mrf.mxu0
      %v434 = vadd.f32 %v351, %v433
      %435 = vmatprep.mubr.f32.mxu0 0.0
      %436 = vmatmul.mubr.f32.gmra.mxu0 %v288
      %v437 = vpop.f32.mrf.mxu0
      %v438 = vadd.f32 %v347, %v437
      %v439 = vpop.f32.mrf.mxu0
      %v440 = vadd.f32 %v351, %v439
      %441 = vmatprep.mubr.f32.mxu0 0.0
      %442 = vmatmul.mubr.f32.gmra.mxu0 %v289
      %v443 = vpop.f32.mrf.mxu0
      %v444 = vadd.f32 %v347, %v443
      %v445 = vpop.f32.mrf.mxu0
      %v446 = vadd.f32 %v351, %v445
      %447 = vmatprep.mubr.f32.mxu0 0.0
      %448 = vmatmul.mubr.f32.gmra.mxu0 %v290
      %v449 = vpop.f32.mrf.mxu0
      %v450 = vadd.f32 %v347, %v449
      %v451 = vpop.f32.mrf.mxu0
      %v452 = vadd.f32 %v351, %v451
      %453 = vmatprep.mubr.f32.mxu0 0.0
      %454 = vmatmul.mubr.f32.gmra.mxu0 %v291
      %v455 = vpop.f32.mrf.mxu0
      %v456 = vadd.f32 %v347, %v455
      %v457 = vpop.f32.mrf.mxu0
      %v458 = vadd.f32 %v351, %v457
      %459 = vmatprep.mubr.f32.mxu0 0.0
      %460 = vmatmul.mubr.f32.gmra.mxu0 %v292
      %v461 = vpop.f32.mrf.mxu0
      %v462 = vadd.f32 %v347, %v461
      %v463 = vpop.f32.mrf.mxu0
      %v464 = vadd.f32 %v351, %v463
      %465 = vmatprep.mubr.f32.mxu0 0.0
      %466 = vmatmul.mubr.f32.gmra.mxu0 %v293
      %v467 = vpop.f32.mrf.mxu0
      %v468 = vadd.f32 %v347, %v467
      %v469 = vpop.f32.mrf.mxu0
      %v470 = vadd.f32 %v351, %v469
      %471 = vdwg.mxu0
      %472 = vmatprep.subr.mxu0 0.0
      %473 = vmatpush1.msra.mxu0 %v341
      %474 = vmatprep.subr.mxu0 0.0
      %475 = vmatpush1.msra.mxu0 %v338
      %476 = vmatprep.subr.mxu0 0.0
      %477 = vmatpush1.msra.mxu0 %v335
      %478 = vmatprep.subr.mxu0 0.0
      %479 = vmatpush1.msra.mxu0 %v332
      %480 = vmatprep.subr.mxu0 0.0
      %481 = vmatpush1.msra.mxu0 %v329
      %482 = vmatprep.subr.mxu0 0.0
      %483 = vmatpush1.msra.mxu0 %v326
      %484 = vmatprep.subr.mxu0 0.0
      %485 = vmatpush1.msra.mxu0 %v323
      %486 = vmatprep.subr.mxu0 0.0
      %487 = vmatpush1.msra.mxu0 %v320
      %488 = vmatprep.subr.mxu0 0.0
      %489 = vmatpush1.msra.mxu0 %v317
      %490 = vmatprep.subr.mxu0 0.0
      %491 = vmatpush1.msra.mxu0 %v314
      %492 = vmatprep.subr.mxu0 0.0
      %493 = vmatpush1.msra.mxu0 %v311
      %494 = vmatprep.subr.mxu0 0.0
      %495 = vmatpush1.msra.mxu0 %v308
      %496 = vmatprep.subr.mxu0 0.0
      %497 = vmatpush1.msra.mxu0 %v305
      %498 = vmatprep.subr.mxu0 0.0
      %499 = vmatpush1.msra.mxu0 %v302
      %500 = vmatprep.subr.mxu0 0.0
      %501 = vmatpush1.msra.mxu0 %v299
      %502 = vmatprep.subr.mxu0 0.0
      %503 = vmatpush1.msra.mxu0 %v296
      %504 = vmatprep.subr.mxu0 0.0
      %505 = vmatpush2.msra.mxu0 0.0
      %506 = vmatprep.subr.mxu0 0.0
      %507 = vmatpush2.msra.mxu0 0.0
      %508 = vmatprep.subr.mxu0 0.0
      %509 = vmatpush2.msra.mxu0 0.0
      %510 = vmatprep.subr.mxu0 0.0
      %511 = vmatpush2.msra.mxu0 0.0
      %512 = vmatprep.subr.mxu0 0.0
      %513 = vmatpush2.msra.mxu0 0.0
      %514 = vmatprep.subr.mxu0 0.0
      %515 = vmatpush2.msra.mxu0 0.0
      %516 = vmatprep.subr.mxu0 0.0
      %517 = vmatpush2.msra.mxu0 0.0
      %518 = vmatprep.subr.mxu0 0.0
      %519 = vmatpush2.msra.mxu0 0.0
      %520 = vmatprep.subr.mxu0 0.0
      %521 = vmatpush2.msra.mxu0 0.0
      %522 = vmatprep.subr.mxu0 0.0
      %523 = vmatpush2.msra.mxu0 0.0
      %524 = vmatprep.subr.mxu0 0.0
      %525 = vmatpush2.msra.mxu0 0.0
      %526 = vmatprep.subr.mxu0 0.0
      %527 = vmatpush2.msra.mxu0 0.0
      %528 = vmatprep.subr.mxu0 0.0
      %529 = vmatpush2.msra.mxu0 0.0
      %530 = vmatprep.subr.mxu0 0.0
      %531 = vmatpush2.msra.mxu0 0.0
      %532 = vmatprep.subr.mxu0 0.0
      %533 = vmatpush2.msra.mxu0 0.0
      %534 = vmatprep.subr.mxu0 0.0
      %535 = vmatpush2.msra.mxu0 0.0
      %536 = vmatprep.mubr.f32.mxu0 0.0
      %537 = vmatmul.mubr.f32.gmra.mxu0 %v286
      %v538 = vpop.f32.mrf.mxu0
      %v539 = vadd.f32 %v355, %v538
      %v540 = vpop.f32.mrf.mxu0
      %541 = vmatprep.mubr.f32.mxu0 0.0
      %542 = vmatmul.mubr.f32.gmra.mxu0 %v287
      %v543 = vpop.f32.mrf.mxu0
      %v544 = vadd.f32 %v355, %v543
      %v545 = vpop.f32.mrf.mxu0
      %546 = vmatprep.mubr.f32.mxu0 0.0
      %547 = vmatmul.mubr.f32.gmra.mxu0 %v288
      %v548 = vpop.f32.mrf.mxu0
      %v549 = vadd.f32 %v355, %v548
      %v550 = vpop.f32.mrf.mxu0
      %551 = vmatprep.mubr.f32.mxu0 0.0
      %552 = vmatmul.mubr.f32.gmra.mxu0 %v289
      %v553 = vpop.f32.mrf.mxu0
      %v554 = vadd.f32 %v355, %v553
      %v555 = vpop.f32.mrf.mxu0
      %556 = vmatprep.mubr.f32.mxu0 0.0
      %557 = vmatmul.mubr.f32.gmra.mxu0 %v290
      %v558 = vpop.f32.mrf.mxu0
      %v559 = vadd.f32 %v355, %v558
      %v560 = vpop.f32.mrf.mxu0
      %561 = vmatprep.mubr.f32.mxu0 0.0
      %562 = vmatmul.mubr.f32.gmra.mxu0 %v291
      %v563 = vpop.f32.mrf.mxu0
      %v564 = vadd.f32 %v355, %v563
      %v565 = vpop.f32.mrf.mxu0
      %566 = vmatprep.mubr.f32.mxu0 0.0
      %567 = vmatmul.mubr.f32.gmra.mxu0 %v292
      %v568 = vpop.f32.mrf.mxu0
      %v569 = vadd.f32 %v355, %v568
      %v570 = vpop.f32.mrf.mxu0
      %571 = vmatprep.mubr.f32.mxu0 0.0
      %572 = vmatmul.mubr.f32.gmra.mxu0 %v293
      %v573 = vpop.f32.mrf.mxu0
      %v574 = vadd.f32 %v355, %v573
      %v575 = vpop.f32.mrf.mxu0
      %576 = vdwg.mxu0
      %577 = vst [vmem:[#allocation3] sm:$0xff] %v426
      %578 = vst [vmem:[#allocation3 + $0x8] sm:$0xff] %v428
      %579 = vst [vmem:[#allocation3 + $0x10] sm:$0xff] %v539
      %580 = vst [vmem:[#allocation3 + $0x18] sm:$0xff] %v432
      %581 = vst [vmem:[#allocation3 + $0x20] sm:$0xff] %v434
      %582 = vst [vmem:[#allocation3 + $0x28] sm:$0xff] %v544
      %583 = vst [vmem:[#allocation3 + $0x30] sm:$0xff] %v438
      %584 = vst [vmem:[#allocation3 + $0x38] sm:$0xff] %v440
      %585 = vst [vmem:[#allocation3 + $0x40] sm:$0xff] %v549
      %586 = vst [vmem:[#allocation3 + $0x48] sm:$0xff] %v444
      %587 = vst [vmem:[#allocation3 + $0x50] sm:$0xff] %v446
      %588 = vst [vmem:[#allocation3 + $0x58] sm:$0xff] %v554
      %589 = vst [vmem:[#allocation3 + $0x60] sm:$0xff] %v450
      %590 = vst [vmem:[#allocation3 + $0x68] sm:$0xff] %v452
      %591 = vst [vmem:[#allocation3 + $0x70] sm:$0xff] %v559
      %592 = vst [vmem:[#allocation3 + $0x78] sm:$0xff] %v456
      %593 = vst [vmem:[#allocation3 + $0x80] sm:$0xff] %v458
      %594 = vst [vmem:[#allocation3 + $0x88] sm:$0xff] %v564
      %595 = vst [vmem:[#allocation3 + $0x90] sm:$0xff] %v462
      %596 = vst [vmem:[#allocation3 + $0x98] sm:$0xff] %v464
      %597 = vst [vmem:[#allocation3 + $0xa0] sm:$0xff] %v569
      %598 = vst [vmem:[#allocation3 + $0xa8] sm:$0xff] %v468
      %599 = vst [vmem:[#allocation3 + $0xb0] sm:$0xff] %v470
      %600 = vst [vmem:[#allocation3 + $0xb8] sm:$0xff] %v574
      %v601 = vld [vmem:[%s3] sm:$0xff]
      %v602 = vld [vmem:[%s3 + $0x8] sm:$0xff]
      %v603 = vld [vmem:[%s3 + $0x10] sm:$0xff]
      %v604 = vld [vmem:[%s3 + $0x18] sm:$0xff]
      %v605 = vld [vmem:[%s3 + $0x20] sm:$0xff]
      %v606 = vld [vmem:[%s3 + $0x28] sm:$0xff]
      %v607 = vld [vmem:[%s3 + $0x30] sm:$0xff]
      %v608 = vld [vmem:[%s3 + $0x38] sm:$0xff]
      %v609 = vld [vmem:[%s3 + $0x40] sm:$0xff]
      %v610 = vld [vmem:[%s3 + $0x48] sm:$0xff]
      %v611 = vld [vmem:[%s3 + $0x50] sm:$0xff]
      %v612 = vld [vmem:[%s3 + $0x58] sm:$0xff]
      %v613 = vld [vmem:[%s3 + $0x60] sm:$0xff]
      %v614 = vld [vmem:[%s3 + $0x68] sm:$0xff]
      %v615 = vld [vmem:[%s3 + $0x70] sm:$0xff]
      %v616 = vld [vmem:[%s3 + $0x78] sm:$0xff]
      %v617 = vld [vmem:[%s3 + $0x80] sm:$0xff]
      %v618 = vld [vmem:[%s3 + $0x88] sm:$0xff]
      %v619 = vld [vmem:[%s3 + $0x90] sm:$0xff]
      %v620 = vld [vmem:[%s3 + $0x98] sm:$0xff]
      %v621 = vld [vmem:[%s3 + $0xa0] sm:$0xff]
      %v622 = vld [vmem:[%s3 + $0xa8] sm:$0xff]
      %v623 = vld [vmem:[%s3 + $0xb0] sm:$0xff]
      %v624 = vld [vmem:[%s3 + $0xb8] sm:$0xff]
      %v625 = vld [vmem:[%s3 + $0xc0] sm:$0xff]
      %v626 = vld [vmem:[%s3 + $0xc8] sm:$0xff]
      %v627 = vld [vmem:[%s3 + $0xd0] sm:$0xff]
      %v628 = vld [vmem:[%s3 + $0xd8] sm:$0xff]
      %v629 = vld [vmem:[%s3 + $0xe0] sm:$0xff]
      %v630 = vld [vmem:[%s3 + $0xe8] sm:$0xff]
      %v631 = vld [vmem:[%s3 + $0xf0] sm:$0xff]
      %v632 = vld [vmem:[%s3 + $0xf8] sm:$0xff]
      %v633 = vld [vmem:[%s4] sm:$0xff]
      %v634 = vld [vmem:[%s4 + $0x8] sm:$0xff]
      %v635 = vld [vmem:[%s4 + $0x10] sm:$0xff]
      %v636 = vld [vmem:[%s4 + $0x18] sm:$0xff]
      %v637 = vld [vmem:[%s4 + $0x20] sm:$0xff]
      %v638 = vld [vmem:[%s4 + $0x28] sm:$0xff]
      %v639 = vld [vmem:[%s4 + $0x30] sm:$0xff]
      %v640 = vld [vmem:[%s4 + $0x38] sm:$0xff]
      %v641 = vld [vmem:[%s4 + $0x40] sm:$0xff]
      %v642 = vld [vmem:[%s4 + $0x48] sm:$0xff]
      %v643 = vld [vmem:[%s4 + $0x50] sm:$0xff]
      %v644 = vld [vmem:[%s4 + $0x58] sm:$0xff]
      %v645 = vld [vmem:[%s4 + $0x60] sm:$0xff]
      %v646 = vld [vmem:[%s4 + $0x68] sm:$0xff]
      %v647 = vld [vmem:[%s4 + $0x70] sm:$0xff]
      %v648 = vld [vmem:[%s4 + $0x78] sm:$0xff]
      %v649 = vld [vmem:[#allocation2] sm:$0xff]
      %v650 = vld [vmem:[#allocation3] sm:$0xff]
      %v651 = vld [vmem:[#allocation3 + $0x8] sm:$0xff]
      %v652 = vld [vmem:[#allocation3 + $0x10] sm:$0xff]
      %653 = vmatprep.subr.mxu0 %v632
      %654 = vmatpush1.msra.mxu0 %v631
      %655 = vmatprep.subr.mxu0 %v630
      %656 = vmatpush1.msra.mxu0 %v629
      %657 = vmatprep.subr.mxu0 %v628
      %658 = vmatpush1.msra.mxu0 %v627
      %659 = vmatprep.subr.mxu0 %v626
      %660 = vmatpush1.msra.mxu0 %v625
      %661 = vmatprep.subr.mxu0 %v624
      %662 = vmatpush1.msra.mxu0 %v623
      %663 = vmatprep.subr.mxu0 %v622
      %664 = vmatpush1.msra.mxu0 %v621
      %665 = vmatprep.subr.mxu0 %v620
      %666 = vmatpush1.msra.mxu0 %v619
      %667 = vmatprep.subr.mxu0 %v618
      %668 = vmatpush1.msra.mxu0 %v617
      %669 = vmatprep.subr.mxu0 %v616
      %670 = vmatpush1.msra.mxu0 %v615
      %671 = vmatprep.subr.mxu0 %v614
      %672 = vmatpush1.msra.mxu0 %v613
      %673 = vmatprep.subr.mxu0 %v612
      %674 = vmatpush1.msra.mxu0 %v611
      %675 = vmatprep.subr.mxu0 %v610
      %676 = vmatpush1.msra.mxu0 %v609
      %677 = vmatprep.subr.mxu0 %v608
      %678 = vmatpush1.msra.mxu0 %v607
      %679 = vmatprep.subr.mxu0 %v606
      %680 = vmatpush1.msra.mxu0 %v605
      %681 = vmatprep.subr.mxu0 %v604
      %682 = vmatpush1.msra.mxu0 %v603
      %683 = vmatprep.subr.mxu0 %v602
      %684 = vmatpush1.msra.mxu0 %v601
      %685 = vmatprep.subr.mxu0 0.0
      %686 = vmatpush2.msra.mxu0 0.0
      %687 = vmatprep.subr.mxu0 0.0
      %688 = vmatpush2.msra.mxu0 0.0
      %689 = vmatprep.subr.mxu0 0.0
      %690 = vmatpush2.msra.mxu0 0.0
      %691 = vmatprep.subr.mxu0 0.0
      %692 = vmatpush2.msra.mxu0 0.0
      %693 = vmatprep.subr.mxu0 0.0
      %694 = vmatpush2.msra.mxu0 0.0
      %695 = vmatprep.subr.mxu0 0.0
      %696 = vmatpush2.msra.mxu0 0.0
      %697 = vmatprep.subr.mxu0 0.0
      %698 = vmatpush2.msra.mxu0 0.0
      %699 = vmatprep.subr.mxu0 0.0
      %700 = vmatpush2.msra.mxu0 0.0
      %701 = vmatprep.subr.mxu0 0.0
      %702 = vmatpush2.msra.mxu0 0.0
      %703 = vmatprep.subr.mxu0 0.0
      %704 = vmatpush2.msra.mxu0 0.0
      %705 = vmatprep.subr.mxu0 0.0
      %706 = vmatpush2.msra.mxu0 0.0
      %707 = vmatprep.subr.mxu0 0.0
      %708 = vmatpush2.msra.mxu0 0.0
      %709 = vmatprep.subr.mxu0 0.0
      %710 = vmatpush2.msra.mxu0 0.0
      %711 = vmatprep.subr.mxu0 0.0
      %712 = vmatpush2.msra.mxu0 0.0
      %713 = vmatprep.subr.mxu0 0.0
      %714 = vmatpush2.msra.mxu0 0.0
      %715 = vmatprep.subr.mxu0 0.0
      %716 = vmatpush2.msra.mxu0 0.0
      %717 = vmatprep.mubr.f32.mxu0 0.0
      %718 = vmatmul.mubr.f32.gmra.mxu0 %v649
      %v719 = vpop.f32.mrf.mxu0
      %v720 = vadd.f32 0.0, %v719
      %v721 = vpop.f32.mrf.mxu0
      %v722 = vadd.f32 0.0, %v721
      %723 = vdwg.mxu0
      %v724 = vadd.f32 %v650, %v720
      %v725 = vxor.u32 %v724, 2147483648
      %v726 = vmul.f32 %v725, 1.442695
      %v727 = vpow.pop %v726
      %v728 = vadd.f32 %v727, 1.0
      %v729 = vrcp.pop %v728
      %v730 = vmul.f32 1.0, %v729
      %v731 = vadd.f32 %v651, %v722
      %v732 = vxor.u32 %v731, 2147483648
      %v733 = vmul.f32 %v732, 1.442695
      %v734 = vpow.pop %v733
      %v735 = vadd.f32 %v734, 1.0
      %v736 = vrcp.pop %v735
      %v737 = vmul.f32 1.0, %v736
      %v738 = vmul.f32 %v737, %v649
      %739 = vmatprep.subr.mxu0 0.0
      %740 = vmatpush1.msra.mxu0 %v648
      %741 = vmatprep.subr.mxu0 0.0
      %742 = vmatpush1.msra.mxu0 %v647
      %743 = vmatprep.subr.mxu0 0.0
      %744 = vmatpush1.msra.mxu0 %v646
      %745 = vmatprep.subr.mxu0 0.0
      %746 = vmatpush1.msra.mxu0 %v645
      %747 = vmatprep.subr.mxu0 0.0
      %748 = vmatpush1.msra.mxu0 %v644
      %749 = vmatprep.subr.mxu0 0.0
      %750 = vmatpush1.msra.mxu0 %v643
      %751 = vmatprep.subr.mxu0 0.0
      %752 = vmatpush1.msra.mxu0 %v642
      %753 = vmatprep.subr.mxu0 0.0
      %754 = vmatpush1.msra.mxu0 %v641
      %755 = vmatprep.subr.mxu0 0.0
      %756 = vmatpush1.msra.mxu0 %v640
      %757 = vmatprep.subr.mxu0 0.0
      %758 = vmatpush1.msra.mxu0 %v639
      %759 = vmatprep.subr.mxu0 0.0
      %760 = vmatpush1.msra.mxu0 %v638
      %761 = vmatprep.subr.mxu0 0.0
      %762 = vmatpush1.msra.mxu0 %v637
      %763 = vmatprep.subr.mxu0 0.0
      %764 = vmatpush1.msra.mxu0 %v636
      %765 = vmatprep.subr.mxu0 0.0
      %766 = vmatpush1.msra.mxu0 %v635
      %767 = vmatprep.subr.mxu0 0.0
      %768 = vmatpush1.msra.mxu0 %v634
      %769 = vmatprep.subr.mxu0 0.0
      %770 = vmatpush1.msra.mxu0 %v633
      %771 = vmatprep.subr.mxu0 0.0
      %772 = vmatpush2.msra.mxu0 0.0
      %773 = vmatprep.subr.mxu0 0.0
      %774 = vmatpush2.msra.mxu0 0.0
      %775 = vmatprep.subr.mxu0 0.0
      %776 = vmatpush2.msra.mxu0 0.0
      %777 = vmatprep.subr.mxu0 0.0
      %778 = vmatpush2.msra.mxu0 0.0
      %779 = vmatprep.subr.mxu0 0.0
      %780 = vmatpush2.msra.mxu0 0.0
      %781 = vmatprep.subr.mxu0 0.0
      %782 = vmatpush2.msra.mxu0 0.0
      %783 = vmatprep.subr.mxu0 0.0
      %784 = vmatpush2.msra.mxu0 0.0
      %785 = vmatprep.subr.mxu0 0.0
      %786 = vmatpush2.msra.mxu0 0.0
      %787 = vmatprep.subr.mxu0 0.0
      %788 = vmatpush2.msra.mxu0 0.0
      %789 = vmatprep.subr.mxu0 0.0
      %790 = vmatpush2.msra.mxu0 0.0
      %791 = vmatprep.subr.mxu0 0.0
      %792 = vmatpush2.msra.mxu0 0.0
      %793 = vmatprep.subr.mxu0 0.0
      %794 = vmatpush2.msra.mxu0 0.0
      %795 = vmatprep.subr.mxu0 0.0
      %796 = vmatpush2.msra.mxu0 0.0
      %797 = vmatprep.subr.mxu0 0.0
      %798 = vmatpush2.msra.mxu0 0.0
      %799 = vmatprep.subr.mxu0 0.0
      %800 = vmatpush2.msra.mxu0 0.0
      %801 = vmatprep.subr.mxu0 0.0
      %802 = vmatpush2.msra.mxu0 0.0
      %803 = vmatprep.mubr.f32.mxu0 0.0
      %804 = vmatmul.mubr.f32.gmra.mxu0 %v738
      %v805 = vpop.f32.mrf.mxu0
      %v806 = vadd.f32 0.0, %v805
      %v807 = vpop.f32.mrf.mxu0
      %808 = vdwg.mxu0
      %v809 = vadd.f32 %v652, %v806
      %v810 = vtanh.pop %v809
      %v811 = vmul.f32 %v730, %v649
      %v812 = vsub.f32 1.0, %v730
      %v813 = vmul.f32 %v812, %v810
      %v814 = vadd.f32 %v811, %v813
      %815 = vst [vmem:[%s278] sm:$0xff] %v814
      %s816 = scalar_lea.vmem [#allocation3], 24
      %v817 = vld [vmem:[%s816] sm:$0xff]
      %v818 = vld [vmem:[%s816 + $0x8] sm:$0xff]
      %v819 = vld [vmem:[%s816 + $0x10] sm:$0xff]
      %820 = vmatprep.subr.mxu0 %v632
      %821 = vmatpush1.msra.mxu0 %v631
      %822 = vmatprep.subr.mxu0 %v630
      %823 = vmatpush1.msra.mxu0 %v629
      %824 = vmatprep.subr.mxu0 %v628
      %825 = vmatpush1.msra.mxu0 %v627
      %826 = vmatprep.subr.mxu0 %v626
      %827 = vmatpush1.msra.mxu0 %v625
      %828 = vmatprep.subr.mxu0 %v624
      %829 = vmatpush1.msra.mxu0 %v623
      %830 = vmatprep.subr.mxu0 %v622
      %831 = vmatpush1.msra.mxu0 %v621
      %832 = vmatprep.subr.mxu0 %v620
      %833 = vmatpush1.msra.mxu0 %v619
      %834 = vmatprep.subr.mxu0 %v618
      %835 = vmatpush1.msra.mxu0 %v617
      %836 = vmatprep.subr.mxu0 %v616
      %837 = vmatpush1.msra.mxu0 %v615
      %838 = vmatprep.subr.mxu0 %v614
      %839 = vmatpush1.msra.mxu0 %v613
      %840 = vmatprep.subr.mxu0 %v612
      %841 = vmatpush1.msra.mxu0 %v611
      %842 = vmatprep.subr.mxu0 %v610
      %843 = vmatpush1.msra.mxu0 %v609
      %844 = vmatprep.subr.mxu0 %v608
      %845 = vmatpush1.msra.mxu0 %v607
      %846 = vmatprep.subr.mxu0 %v606
      %847 = vmatpush1.msra.mxu0 %v605
      %848 = vmatprep.subr.mxu0 %v604
      %849 = vmatpush1.msra.mxu0 %v603
      %850 = vmatprep.subr.mxu0 %v602
      %851 = vmatpush1.msra.mxu0 %v601
      %852 = vmatprep.subr.mxu0 0.0
      %853 = vmatpush2.msra.mxu0 0.0
      %854 = vmatprep.subr.mxu0 0.0
      %855 = vmatpush2.msra.mxu0 0.0
      %856 = vmatprep.subr.mxu0 0.0
      %857 = vmatpush2.msra.mxu0 0.0
      %858 = vmatprep.subr.mxu0 0.0
      %859 = vmatpush2.msra.mxu0 0.0
      %860 = vmatprep.subr.mxu0 0.0
      %861 = vmatpush2.msra.mxu0 0.0
      %862 = vmatprep.subr.mxu0 0.0
      %863 = vmatpush2.msra.mxu0 0.0
      %864 = vmatprep.subr.mxu0 0.0
      %865 = vmatpush2.msra.mxu0 0.0
      %866 = vmatprep.subr.mxu0 0.0
      %867 = vmatpush2.msra.mxu0 0.0
      %868 = vmatprep.subr.mxu0 0.0
      %869 = vmatpush2.msra.mxu0 0.0
      %870 = vmatprep.subr.mxu0 0.0
      %871 = vmatpush2.msra.mxu0 0.0
      %872 = vmatprep.subr.mxu0 0.0
      %873 = vmatpush2.msra.mxu0 0.0
      %874 = vmatprep.subr.mxu0 0.0
      %875 = vmatpush2.msra.mxu0 0.0
      %876 = vmatprep.subr.mxu0 0.0
      %877 = vmatpush2.msra.mxu0 0.0
      %878 = vmatprep.subr.mxu0 0.0
      %879 = vmatpush2.msra.mxu0 0.0
      %880 = vmatprep.subr.mxu0 0.0
      %881 = vmatpush2.msra.mxu0 0.0
      %882 = vmatprep.subr.mxu0 0.0
      %883 = vmatpush2.msra.mxu0 0.0
      %884 = vmatprep.mubr.f32.mxu0 0.0
      %885 = vmatmul.mubr.f32.gmra.mxu0 %v814
      %v886 = vpop.f32.mrf.mxu0
      %v887 = vadd.f32 0.0, %v886
      %v888 = vpop.f32.mrf.mxu0
      %v889 = vadd.f32 0.0, %v888
      %890 = vdwg.mxu0
      %v891 = vadd.f32 %v817, %v887
      %v892 = vxor.u32 %v891, 2147483648
      %v893 = vmul.f32 %v892, 1.442695
      %v894 = vpow.pop %v893
      %v895 = vadd.f32 %v894, 1.0
      %v896 = vrcp.pop %v895
      %v897 = vmul.f32 1.0, %v896
      %v898 = vadd.f32 %v818, %v889
      %v899 = vxor.u32 %v898, 2147483648
      %v900 = vmul.f32 %v899, 1.442695
      %v901 = vpow.pop %v900
      %v902 = vadd.f32 %v901, 1.0
      %v903 = vrcp.pop %v902
      %v904 = vmul.f32 1.0, %v903
      %v905 = vmul.f32 %v904, %v814
      %906 = vmatprep.subr.mxu0 0.0
      %907 = vmatpush1.msra.mxu0 %v648
      %908 = vmatprep.subr.mxu0 0.0
      %909 = vmatpush1.msra.mxu0 %v647
      %910 = vmatprep.subr.mxu0 0.0
      %911 = vmatpush1.msra.mxu0 %v646
      %912 = vmatprep.subr.mxu0 0.0
      %913 = vmatpush1.msra.mxu0 %v645
      %914 = vmatprep.subr.mxu0 0.0
      %915 = vmatpush1.msra.mxu0 %v644
      %916 = vmatprep.subr.mxu0 0.0
      %917 = vmatpush1.msra.mxu0 %v643
      %918 = vmatprep.subr.mxu0 0.0
      %919 = vmatpush1.msra.mxu0 %v642
      %920 = vmatprep.subr.mxu0 0.0
      %921 = vmatpush1.msra.mxu0 %v641
      %922 = vmatprep.subr.mxu0 0.0
      %923 = vmatpush1.msra.mxu0 %v640
      %924 = vmatprep.subr.mxu0 0.0
      %925 = vmatpush1.msra.mxu0 %v639
      %926 = vmatprep.subr.mxu0 0.0
      %927 = vmatpush1.msra.mxu0 %v638
      %928 = vmatprep.subr.mxu0 0.0
      %929 = vmatpush1.msra.mxu0 %v637
      %930 = vmatprep.subr.mxu0 0.0
      %931 = vmatpush1.msra.mxu0 %v636
      %932 = vmatprep.subr.mxu0 0.0
      %933 = vmatpush1.msra.mxu0 %v635
      %934 = vmatprep.subr.mxu0 0.0
      %935 = vmatpush1.msra.mxu0 %v634
      %936 = vmatprep.subr.mxu0 0.0
      %937 = vmatpush1.msra.mxu0 %v633
      %938 = vmatprep.subr.mxu0 0.0
      %939 = vmatpush2.msra.mxu0 0.0
      %940 = vmatprep.subr.mxu0 0.0
      %941 = vmatpush2.msra.mxu0 0.0
      %942 = vmatprep.subr.mxu0 0.0
      %943 = vmatpush2.msra.mxu0 0.0
      %944 = vmatprep.subr.mxu0 0.0
      %945 = vmatpush2.msra.mxu0 0.0
      %946 = vmatprep.subr.mxu0 0.0
      %947 = vmatpush2.msra.mxu0 0.0
      %948 = vmatprep.subr.mxu0 0.0
      %949 = vmatpush2.msra.mxu0 0.0
      %950 = vmatprep.subr.mxu0 0.0
      %951 = vmatpush2.msra.mxu0 0.0
      %952 = vmatprep.subr.mxu0 0.0
      %953 = vmatpush2.msra.mxu0 0.0
      %954 = vmatprep.subr.mxu0 0.0
      %955 = vmatpush2.msra.mxu0 0.0
      %956 = vmatprep.subr.mxu0 0.0
      %957 = vmatpush2.msra.mxu0 0.0
      %958 = vmatprep.subr.mxu0 0.0
      %959 = vmatpush2.msra.mxu0 0.0
      %960 = vmatprep.subr.mxu0 0.0
      %961 = vmatpush2.msra.mxu0 0.0
      %962 = vmatprep.subr.mxu0 0.0
      %963 = vmatpush2.msra.mxu0 0.0
      %964 = vmatprep.subr.mxu0 0.0
      %965 = vmatpush2.msra.mxu0 0.0
      %966 = vmatprep.subr.mxu0 0.0
      %967 = vmatpush2.msra.mxu0 0.0
      %968 = vmatprep.subr.mxu0 0.0
      %969 = vmatpush2.msra.mxu0 0.0
      %970 = vmatprep.mubr.f32.mxu0 0.0
      %971 = vmatmul.mubr.f32.gmra.mxu0 %v905
      %v972 = vpop.f32.mrf.mxu0
      %v973 = vadd.f32 0.0, %v972
      %v974 = vpop.f32.mrf.mxu0
      %975 = vdwg.mxu0
      %v976 = vadd.f32 %v819, %v973
      %v977 = vtanh.pop %v976
      %v978 = vmul.f32 %v897, %v814
      %v979 = vsub.f32 1.0, %v897
      %v980 = vmul.f32 %v979, %v977
      %v981 = vadd.f32 %v978, %v980
      %s982 = scalar_lea.vmem %s278, 8
      %983 = vst [vmem:[%s982] sm:$0xff] %v981
      %s984 = scalar_lea.vmem [#allocation3], 48
      %v985 = vld [vmem:[%s984] sm:$0xff]
      %v986 = vld [vmem:[%s984 + $0x8] sm:$0xff]
      %v987 = vld [vmem:[%s984 + $0x10] sm:$0xff]
      %988 = vmatprep.subr.mxu0 %v632
      %989 = vmatpush1.msra.mxu0 %v631
      %990 = vmatprep.subr.mxu0 %v630
      %991 = vmatpush1.msra.mxu0 %v629
      %992 = vmatprep.subr.mxu0 %v628
      %993 = vmatpush1.msra.mxu0 %v627
      %994 = vmatprep.subr.mxu0 %v626
      %995 = vmatpush1.msra.mxu0 %v625
      %996 = vmatprep.subr.mxu0 %v624
      %997 = vmatpush1.msra.mxu0 %v623
      %998 = vmatprep.subr.mxu0 %v622
      %999 = vmatpush1.msra.mxu0 %v621
      %1000 = vmatprep.subr.mxu0 %v620
      %1001 = vmatpush1.msra.mxu0 %v619
      %1002 = vmatprep.subr.mxu0 %v618
      %1003 = vmatpush1.msra.mxu0 %v617
      %1004 = vmatprep.subr.mxu0 %v616
      %1005 = vmatpush1.msra.mxu0 %v615
      %1006 = vmatprep.subr.mxu0 %v614
      %1007 = vmatpush1.msra.mxu0 %v613
      %1008 = vmatprep.subr.mxu0 %v612
      %1009 = vmatpush1.msra.mxu0 %v611
      %1010 = vmatprep.subr.mxu0 %v610
      %1011 = vmatpush1.msra.mxu0 %v609
      %1012 = vmatprep.subr.mxu0 %v608
      %1013 = vmatpush1.msra.mxu0 %v607
      %1014 = vmatprep.subr.mxu0 %v606
      %1015 = vmatpush1.msra.mxu0 %v605
      %1016 = vmatprep.subr.mxu0 %v604
      %1017 = vmatpush1.msra.mxu0 %v603
      %1018 = vmatprep.subr.mxu0 %v602
      %1019 = vmatpush1.msra.mxu0 %v601
      %1020 = vmatprep.subr.mxu0 0.0
      %1021 = vmatpush2.msra.mxu0 0.0
      %1022 = vmatprep.subr.mxu0 0.0
      %1023 = vmatpush2.msra.mxu0 0.0
      %1024 = vmatprep.subr.mxu0 0.0
      %1025 = vmatpush2.msra.mxu0 0.0
      %1026 = vmatprep.subr.mxu0 0.0
      %1027 = vmatpush2.msra.mxu0 0.0
      %1028 = vmatprep.subr.mxu0 0.0
      %1029 = vmatpush2.msra.mxu0 0.0
      %1030 = vmatprep.subr.mxu0 0.0
      %1031 = vmatpush2.msra.mxu0 0.0
      %1032 = vmatprep.subr.mxu0 0.0
      %1033 = vmatpush2.msra.mxu0 0.0
      %1034 = vmatprep.subr.mxu0 0.0
      %1035 = vmatpush2.msra.mxu0 0.0
      %1036 = vmatprep.subr.mxu0 0.0
      %1037 = vmatpush2.msra.mxu0 0.0
      %1038 = vmatprep.subr.mxu0 0.0
      %1039 = vmatpush2.msra.mxu0 0.0
      %1040 = vmatprep.subr.mxu0 0.0
      %1041 = vmatpush2.msra.mxu0 0.0
      %1042 = vmatprep.subr.mxu0 0.0
      %1043 = vmatpush2.msra.mxu0 0.0
      %1044 = vmatprep.subr.mxu0 0.0
      %1045 = vmatpush2.msra.mxu0 0.0
      %1046 = vmatprep.subr.mxu0 0.0
      %1047 = vmatpush2.msra.mxu0 0.0
      %1048 = vmatprep.subr.mxu0 0.0
      %1049 = vmatpush2.msra.mxu0 0.0
      %1050 = vmatprep.subr.mxu0 0.0
      %1051 = vmatpush2.msra.mxu0 0.0
      %1052 = vmatprep.mubr.f32.mxu0 0.0
      %1053 = vmatmul.mubr.f32.gmra.mxu0 %v981
      %v1054 = vpop.f32.mrf.mxu0
      %v1055 = vadd.f32 0.0, %v1054
      %v1056 = vpop.f32.mrf.mxu0
      %v1057 = vadd.f32 0.0, %v1056
      %1058 = vdwg.mxu0
      %v1059 = vadd.f32 %v985, %v1055
      %v1060 = vxor.u32 %v1059, 2147483648
      %v1061 = vmul.f32 %v1060, 1.442695
      %v1062 = vpow.pop %v1061
      %v1063 = vadd.f32 %v1062, 1.0
      %v1064 = vrcp.pop %v1063
      %v1065 = vmul.f32 1.0, %v1064
      %v1066 = vadd.f32 %v986, %v1057
      %v1067 = vxor.u32 %v1066, 2147483648
      %v1068 = vmul.f32 %v1067, 1.442695
      %v1069 = vpow.pop %v1068
      %v1070 = vadd.f32 %v1069, 1.0
      %v1071 = vrcp.pop %v1070
      %v1072 = vmul.f32 1.0, %v1071
      %v1073 = vmul.f32 %v1072, %v981
      %1074 = vmatprep.subr.mxu0 0.0
      %1075 = vmatpush1.msra.mxu0 %v648
      %1076 = vmatprep.subr.mxu0 0.0
      %1077 = vmatpush1.msra.mxu0 %v647
      %1078 = vmatprep.subr.mxu0 0.0
      %1079 = vmatpush1.msra.mxu0 %v646
      %1080 = vmatprep.subr.mxu0 0.0
      %1081 = vmatpush1.msra.mxu0 %v645
      %1082 = vmatprep.subr.mxu0 0.0
      %1083 = vmatpush1.msra.mxu0 %v644
      %1084 = vmatprep.subr.mxu0 0.0
      %1085 = vmatpush1.msra.mxu0 %v643
      %1086 = vmatprep.subr.mxu0 0.0
      %1087 = vmatpush1.msra.mxu0 %v642
      %1088 = vmatprep.subr.mxu0 0.0
      %1089 = vmatpush1.msra.mxu0 %v641
      %1090 = vmatprep.subr.mxu0 0.0
      %1091 = vmatpush1.msra.mxu0 %v640
      %1092 = vmatprep.subr.mxu0 0.0
      %1093 = vmatpush1.msra.mxu0 %v639
      %1094 = vmatprep.subr.mxu0 0.0
      %1095 = vmatpush1.msra.mxu0 %v638
      %1096 = vmatprep.subr.mxu0 0.0
      %1097 = vmatpush1.msra.mxu0 %v637
      %1098 = vmatprep.subr.mxu0 0.0
      %1099 = vmatpush1.msra.mxu0 %v636
      %1100 = vmatprep.subr.mxu0 0.0
      %1101 = vmatpush1.msra.mxu0 %v635
      %1102 = vmatprep.subr.mxu0 0.0
      %1103 = vmatpush1.msra.mxu0 %v634
      %1104 = vmatprep.subr.mxu0 0.0
      %1105 = vmatpush1.msra.mxu0 %v633
      %1106 = vmatprep.subr.mxu0 0.0
      %1107 = vmatpush2.msra.mxu0 0.0
      %1108 = vmatprep.subr.mxu0 0.0
      %1109 = vmatpush2.msra.mxu0 0.0
      %1110 = vmatprep.subr.mxu0 0.0
      %1111 = vmatpush2.msra.mxu0 0.0
      %1112 = vmatprep.subr.mxu0 0.0
      %1113 = vmatpush2.msra.mxu0 0.0
      %1114 = vmatprep.subr.mxu0 0.0
      %1115 = vmatpush2.msra.mxu0 0.0
      %1116 = vmatprep.subr.mxu0 0.0
      %1117 = vmatpush2.msra.mxu0 0.0
      %1118 = vmatprep.subr.mxu0 0.0
      %1119 = vmatpush2.msra.mxu0 0.0
      %1120 = vmatprep.subr.mxu0 0.0
      %1121 = vmatpush2.msra.mxu0 0.0
      %1122 = vmatprep.subr.mxu0 0.0
      %1123 = vmatpush2.msra.mxu0 0.0
      %1124 = vmatprep.subr.mxu0 0.0
      %1125 = vmatpush2.msra.mxu0 0.0
      %1126 = vmatprep.subr.mxu0 0.0
      %1127 = vmatpush2.msra.mxu0 0.0
      %1128 = vmatprep.subr.mxu0 0.0
      %1129 = vmatpush2.msra.mxu0 0.0
      %1130 = vmatprep.subr.mxu0 0.0
      %1131 = vmatpush2.msra.mxu0 0.0
      %1132 = vmatprep.subr.mxu0 0.0
      %1133 = vmatpush2.msra.mxu0 0.0
      %1134 = vmatprep.subr.mxu0 0.0
      %1135 = vmatpush2.msra.mxu0 0.0
      %1136 = vmatprep.subr.mxu0 0.0
      %1137 = vmatpush2.msra.mxu0 0.0
      %1138 = vmatprep.mubr.f32.mxu0 0.0
      %1139 = vmatmul.mubr.f32.gmra.mxu0 %v1073
      %v1140 = vpop.f32.mrf.mxu0
      %v1141 = vadd.f32 0.0, %v1140
      %v1142 = vpop.f32.mrf.mxu0
      %1143 = vdwg.mxu0
      %v1144 = vadd.f32 %v987, %v1141
      %v1145 = vtanh.pop %v1144
      %v1146 = vmul.f32 %v1065, %v981
      %v1147 = vsub.f32 1.0, %v1065
      %v1148 = vmul.f32 %v1147, %v1145
      %v1149 = vadd.f32 %v1146, %v1148
      %s1150 = scalar_lea.vmem %s278, 16
      %1151 = vst [vmem:[%s1150] sm:$0xff] %v1149
      %s1152 = scalar_lea.vmem [#allocation3], 72
      %v1153 = vld [vmem:[%s1152] sm:$0xff]
      %v1154 = vld [vmem:[%s1152 + $0x8] sm:$0xff]
      %v1155 = vld [vmem:[%s1152 + $0x10] sm:$0xff]
      %1156 = vmatprep.subr.mxu0 %v632
      %1157 = vmatpush1.msra.mxu0 %v631
      %1158 = vmatprep.subr.mxu0 %v630
      %1159 = vmatpush1.msra.mxu0 %v629
      %1160 = vmatprep.subr.mxu0 %v628
      %1161 = vmatpush1.msra.mxu0 %v627
      %1162 = vmatprep.subr.mxu0 %v626
      %1163 = vmatpush1.msra.mxu0 %v625
      %1164 = vmatprep.subr.mxu0 %v624
      %1165 = vmatpush1.msra.mxu0 %v623
      %1166 = vmatprep.subr.mxu0 %v622
      %1167 = vmatpush1.msra.mxu0 %v621
      %1168 = vmatprep.subr.mxu0 %v620
      %1169 = vmatpush1.msra.mxu0 %v619
      %1170 = vmatprep.subr.mxu0 %v618
      %1171 = vmatpush1.msra.mxu0 %v617
      %1172 = vmatprep.subr.mxu0 %v616
      %1173 = vmatpush1.msra.mxu0 %v615
      %1174 = vmatprep.subr.mxu0 %v614
      %1175 = vmatpush1.msra.mxu0 %v613
      %1176 = vmatprep.subr.mxu0 %v612
      %1177 = vmatpush1.msra.mxu0 %v611
      %1178 = vmatprep.subr.mxu0 %v610
      %1179 = vmatpush1.msra.mxu0 %v609
      %1180 = vmatprep.subr.mxu0 %v608
      %1181 = vmatpush1.msra.mxu0 %v607
      %1182 = vmatprep.subr.mxu0 %v606
      %1183 = vmatpush1.msra.mxu0 %v605
      %1184 = vmatprep.subr.mxu0 %v604
      %1185 = vmatpush1.msra.mxu0 %v603
      %1186 = vmatprep.subr.mxu0 %v602
      %1187 = vmatpush1.msra.mxu0 %v601
      %1188 = vmatprep.subr.mxu0 0.0
      %1189 = vmatpush2.msra.mxu0 0.0
      %1190 = vmatprep.subr.mxu0 0.0
      %1191 = vmatpush2.msra.mxu0 0.0
      %1192 = vmatprep.subr.mxu0 0.0
      %1193 = vmatpush2.msra.mxu0 0.0
      %1194 = vmatprep.subr.mxu0 0.0
      %1195 = vmatpush2.msra.mxu0 0.0
      %1196 = vmatprep.subr.mxu0 0.0
      %1197 = vmatpush2.msra.mxu0 0.0
      %1198 = vmatprep.subr.mxu0 0.0
      %1199 = vmatpush2.msra.mxu0 0.0
      %1200 = vmatprep.subr.mxu0 0.0
      %1201 = vmatpush2.msra.mxu0 0.0
      %1202 = vmatprep.subr.mxu0 0.0
      %1203 = vmatpush2.msra.mxu0 0.0
      %1204 = vmatprep.subr.mxu0 0.0
      %1205 = vmatpush2.msra.mxu0 0.0
      %1206 = vmatprep.subr.mxu0 0.0
      %1207 = vmatpush2.msra.mxu0 0.0
      %1208 = vmatprep.subr.mxu0 0.0
      %1209 = vmatpush2.msra.mxu0 0.0
      %1210 = vmatprep.subr.mxu0 0.0
      %1211 = vmatpush2.msra.mxu0 0.0
      %1212 = vmatprep.subr.mxu0 0.0
      %1213 = vmatpush2.msra.mxu0 0.0
      %1214 = vmatprep.subr.mxu0 0.0
      %1215 = vmatpush2.msra.mxu0 0.0
      %1216 = vmatprep.subr.mxu0 0.0
      %1217 = vmatpush2.msra.mxu0 0.0
      %1218 = vmatprep.subr.mxu0 0.0
      %1219 = vmatpush2.msra.mxu0 0.0
      %1220 = vmatprep.mubr.f32.mxu0 0.0
      %1221 = vmatmul.mubr.f32.gmra.mxu0 %v1149
      %v1222 = vpop.f32.mrf.mxu0
      %v1223 = vadd.f32 0.0, %v1222
      %v1224 = vpop.f32.mrf.mxu0
      %v1225 = vadd.f32 0.0, %v1224
      %1226 = vdwg.mxu0
      %v1227 = vadd.f32 %v1153, %v1223
      %v1228 = vxor.u32 %v1227, 2147483648
      %v1229 = vmul.f32 %v1228, 1.442695
      %v1230 = vpow.pop %v1229
      %v1231 = vadd.f32 %v1230, 1.0
      %v1232 = vrcp.pop %v1231
      %v1233 = vmul.f32 1.0, %v1232
      %v1234 = vadd.f32 %v1154, %v1225
      %v1235 = vxor.u32 %v1234, 2147483648
      %v1236 = vmul.f32 %v1235, 1.442695
      %v1237 = vpow.pop %v1236
      %v1238 = vadd.f32 %v1237, 1.0
      %v1239 = vrcp.pop %v1238
      %v1240 = vmul.f32 1.0, %v1239
      %v1241 = vmul.f32 %v1240, %v1149
      %1242 = vmatprep.subr.mxu0 0.0
      %1243 = vmatpush1.msra.mxu0 %v648
      %1244 = vmatprep.subr.mxu0 0.0
      %1245 = vmatpush1.msra.mxu0 %v647
      %1246 = vmatprep.subr.mxu0 0.0
      %1247 = vmatpush1.msra.mxu0 %v646
      %1248 = vmatprep.subr.mxu0 0.0
      %1249 = vmatpush1.msra.mxu0 %v645
      %1250 = vmatprep.subr.mxu0 0.0
      %1251 = vmatpush1.msra.mxu0 %v644
      %1252 = vmatprep.subr.mxu0 0.0
      %1253 = vmatpush1.msra.mxu0 %v643
      %1254 = vmatprep.subr.mxu0 0.0
      %1255 = vmatpush1.msra.mxu0 %v642
      %1256 = vmatprep.subr.mxu0 0.0
      %1257 = vmatpush1.msra.mxu0 %v641
      %1258 = vmatprep.subr.mxu0 0.0
      %1259 = vmatpush1.msra.mxu0 %v640
      %1260 = vmatprep.subr.mxu0 0.0
      %1261 = vmatpush1.msra.mxu0 %v639
      %1262 = vmatprep.subr.mxu0 0.0
      %1263 = vmatpush1.msra.mxu0 %v638
      %1264 = vmatprep.subr.mxu0 0.0
      %1265 = vmatpush1.msra.mxu0 %v637
      %1266 = vmatprep.subr.mxu0 0.0
      %1267 = vmatpush1.msra.mxu0 %v636
      %1268 = vmatprep.subr.mxu0 0.0
      %1269 = vmatpush1.msra.mxu0 %v635
      %1270 = vmatprep.subr.mxu0 0.0
      %1271 = vmatpush1.msra.mxu0 %v634
      %1272 = vmatprep.subr.mxu0 0.0
      %1273 = vmatpush1.msra.mxu0 %v633
      %1274 = vmatprep.subr.mxu0 0.0
      %1275 = vmatpush2.msra.mxu0 0.0
      %1276 = vmatprep.subr.mxu0 0.0
      %1277 = vmatpush2.msra.mxu0 0.0
      %1278 = vmatprep.subr.mxu0 0.0
      %1279 = vmatpush2.msra.mxu0 0.0
      %1280 = vmatprep.subr.mxu0 0.0
      %1281 = vmatpush2.msra.mxu0 0.0
      %1282 = vmatprep.subr.mxu0 0.0
      %1283 = vmatpush2.msra.mxu0 0.0
      %1284 = vmatprep.subr.mxu0 0.0
      %1285 = vmatpush2.msra.mxu0 0.0
      %1286 = vmatprep.subr.mxu0 0.0
      %1287 = vmatpush2.msra.mxu0 0.0
      %1288 = vmatprep.subr.mxu0 0.0
      %1289 = vmatpush2.msra.mxu0 0.0
      %1290 = vmatprep.subr.mxu0 0.0
      %1291 = vmatpush2.msra.mxu0 0.0
      %1292 = vmatprep.subr.mxu0 0.0
      %1293 = vmatpush2.msra.mxu0 0.0
      %1294 = vmatprep.subr.mxu0 0.0
      %1295 = vmatpush2.msra.mxu0 0.0
      %1296 = vmatprep.subr.mxu0 0.0
      %1297 = vmatpush2.msra.mxu0 0.0
      %1298 = vmatprep.subr.mxu0 0.0
      %1299 = vmatpush2.msra.mxu0 0.0
      %1300 = vmatprep.subr.mxu0 0.0
      %1301 = vmatpush2.msra.mxu0 0.0
      %1302 = vmatprep.subr.mxu0 0.0
      %1303 = vmatpush2.msra.mxu0 0.0
      %1304 = vmatprep.subr.mxu0 0.0
      %1305 = vmatpush2.msra.mxu0 0.0
      %1306 = vmatprep.mubr.f32.mxu0 0.0
      %1307 = vmatmul.mubr.f32.gmra.mxu0 %v1241
      %v1308 = vpop.f32.mrf.mxu0
      %v1309 = vadd.f32 0.0, %v1308
      %v1310 = vpop.f32.mrf.mxu0
      %1311 = vdwg.mxu0
      %v1312 = vadd.f32 %v1155, %v1309
      %v1313 = vtanh.pop %v1312
      %v1314 = vmul.f32 %v1233, %v1149
      %v1315 = vsub.f32 1.0, %v1233
      %v1316 = vmul.f32 %v1315, %v1313
      %v1317 = vadd.f32 %v1314, %v1316
      %s1318 = scalar_lea.vmem %s278, 24
      %1319 = vst [vmem:[%s1318] sm:$0xff] %v1317
      %s1320 = scalar_lea.vmem [#allocation3], 96
      %v1321 = vld [vmem:[%s1320] sm:$0xff]
      %v1322 = vld [vmem:[%s1320 + $0x8] sm:$0xff]
      %v1323 = vld [vmem:[%s1320 + $0x10] sm:$0xff]
      %1324 = vmatprep.subr.mxu0 %v632
      %1325 = vmatpush1.msra.mxu0 %v631
      %1326 = vmatprep.subr.mxu0 %v630
      %1327 = vmatpush1.msra.mxu0 %v629
      %1328 = vmatprep.subr.mxu0 %v628
      %1329 = vmatpush1.msra.mxu0 %v627
      %1330 = vmatprep.subr.mxu0 %v626
      %1331 = vmatpush1.msra.mxu0 %v625
      %1332 = vmatprep.subr.mxu0 %v624
      %1333 = vmatpush1.msra.mxu0 %v623
      %1334 = vmatprep.subr.mxu0 %v622
      %1335 = vmatpush1.msra.mxu0 %v621
      %1336 = vmatprep.subr.mxu0 %v620
      %1337 = vmatpush1.msra.mxu0 %v619
      %1338 = vmatprep.subr.mxu0 %v618
      %1339 = vmatpush1.msra.mxu0 %v617
      %1340 = vmatprep.subr.mxu0 %v616
      %1341 = vmatpush1.msra.mxu0 %v615
      %1342 = vmatprep.subr.mxu0 %v614
      %1343 = vmatpush1.msra.mxu0 %v613
      %1344 = vmatprep.subr.mxu0 %v612
      %1345 = vmatpush1.msra.mxu0 %v611
      %1346 = vmatprep.subr.mxu0 %v610
      %1347 = vmatpush1.msra.mxu0 %v609
      %1348 = vmatprep.subr.mxu0 %v608
      %1349 = vmatpush1.msra.mxu0 %v607
      %1350 = vmatprep.subr.mxu0 %v606
      %1351 = vmatpush1.msra.mxu0 %v605
      %1352 = vmatprep.subr.mxu0 %v604
      %1353 = vmatpush1.msra.mxu0 %v603
      %1354 = vmatprep.subr.mxu0 %v602
      %1355 = vmatpush1.msra.mxu0 %v601
      %1356 = vmatprep.subr.mxu0 0.0
      %1357 = vmatpush2.msra.mxu0 0.0
      %1358 = vmatprep.subr.mxu0 0.0
      %1359 = vmatpush2.msra.mxu0 0.0
      %1360 = vmatprep.subr.mxu0 0.0
      %1361 = vmatpush2.msra.mxu0 0.0
      %1362 = vmatprep.subr.mxu0 0.0
      %1363 = vmatpush2.msra.mxu0 0.0
      %1364 = vmatprep.subr.mxu0 0.0
      %1365 = vmatpush2.msra.mxu0 0.0
      %1366 = vmatprep.subr.mxu0 0.0
      %1367 = vmatpush2.msra.mxu0 0.0
      %1368 = vmatprep.subr.mxu0 0.0
      %1369 = vmatpush2.msra.mxu0 0.0
      %1370 = vmatprep.subr.mxu0 0.0
      %1371 = vmatpush2.msra.mxu0 0.0
      %1372 = vmatprep.subr.mxu0 0.0
      %1373 = vmatpush2.msra.mxu0 0.0
      %1374 = vmatprep.subr.mxu0 0.0
      %1375 = vmatpush2.msra.mxu0 0.0
      %1376 = vmatprep.subr.mxu0 0.0
      %1377 = vmatpush2.msra.mxu0 0.0
      %1378 = vmatprep.subr.mxu0 0.0
      %1379 = vmatpush2.msra.mxu0 0.0
      %1380 = vmatprep.subr.mxu0 0.0
      %1381 = vmatpush2.msra.mxu0 0.0
      %1382 = vmatprep.subr.mxu0 0.0
      %1383 = vmatpush2.msra.mxu0 0.0
      %1384 = vmatprep.subr.mxu0 0.0
      %1385 = vmatpush2.msra.mxu0 0.0
      %1386 = vmatprep.subr.mxu0 0.0
      %1387 = vmatpush2.msra.mxu0 0.0
      %1388 = vmatprep.mubr.f32.mxu0 0.0
      %1389 = vmatmul.mubr.f32.gmra.mxu0 %v1317
      %v1390 = vpop.f32.mrf.mxu0
      %v1391 = vadd.f32 0.0, %v1390
      %v1392 = vpop.f32.mrf.mxu0
      %v1393 = vadd.f32 0.0, %v1392
      %1394 = vdwg.mxu0
      %v1395 = vadd.f32 %v1321, %v1391
      %v1396 = vxor.u32 %v1395, 2147483648
      %v1397 = vmul.f32 %v1396, 1.442695
      %v1398 = vpow.pop %v1397
      %v1399 = vadd.f32 %v1398, 1.0
      %v1400 = vrcp.pop %v1399
      %v1401 = vmul.f32 1.0, %v1400
      %v1402 = vadd.f32 %v1322, %v1393
      %v1403 = vxor.u32 %v1402, 2147483648
      %v1404 = vmul.f32 %v1403, 1.442695
      %v1405 = vpow.pop %v1404
      %v1406 = vadd.f32 %v1405, 1.0
      %v1407 = vrcp.pop %v1406
      %v1408 = vmul.f32 1.0, %v1407
      %v1409 = vmul.f32 %v1408, %v1317
      %1410 = vmatprep.subr.mxu0 0.0
      %1411 = vmatpush1.msra.mxu0 %v648
      %1412 = vmatprep.subr.mxu0 0.0
      %1413 = vmatpush1.msra.mxu0 %v647
      %1414 = vmatprep.subr.mxu0 0.0
      %1415 = vmatpush1.msra.mxu0 %v646
      %1416 = vmatprep.subr.mxu0 0.0
      %1417 = vmatpush1.msra.mxu0 %v645
      %1418 = vmatprep.subr.mxu0 0.0
      %1419 = vmatpush1.msra.mxu0 %v644
      %1420 = vmatprep.subr.mxu0 0.0
      %1421 = vmatpush1.msra.mxu0 %v643
      %1422 = vmatprep.subr.mxu0 0.0
      %1423 = vmatpush1.msra.mxu0 %v642
      %1424 = vmatprep.subr.mxu0 0.0
      %1425 = vmatpush1.msra.mxu0 %v641
      %1426 = vmatprep.subr.mxu0 0.0
      %1427 = vmatpush1.msra.mxu0 %v640
      %1428 = vmatprep.subr.mxu0 0.0
      %1429 = vmatpush1.msra.mxu0 %v639
      %1430 = vmatprep.subr.mxu0 0.0
      %1431 = vmatpush1.msra.mxu0 %v638
      %1432 = vmatprep.subr.mxu0 0.0
      %1433 = vmatpush1.msra.mxu0 %v637
      %1434 = vmatprep.subr.mxu0 0.0
      %1435 = vmatpush1.msra.mxu0 %v636
      %1436 = vmatprep.subr.mxu0 0.0
      %1437 = vmatpush1.msra.mxu0 %v635
      %1438 = vmatprep.subr.mxu0 0.0
      %1439 = vmatpush1.msra.mxu0 %v634
      %1440 = vmatprep.subr.mxu0 0.0
      %1441 = vmatpush1.msra.mxu0 %v633
      %1442 = vmatprep.subr.mxu0 0.0
      %1443 = vmatpush2.msra.mxu0 0.0
      %1444 = vmatprep.subr.mxu0 0.0
      %1445 = vmatpush2.msra.mxu0 0.0
      %1446 = vmatprep.subr.mxu0 0.0
      %1447 = vmatpush2.msra.mxu0 0.0
      %1448 = vmatprep.subr.mxu0 0.0
      %1449 = vmatpush2.msra.mxu0 0.0
      %1450 = vmatprep.subr.mxu0 0.0
      %1451 = vmatpush2.msra.mxu0 0.0
      %1452 = vmatprep.subr.mxu0 0.0
      %1453 = vmatpush2.msra.mxu0 0.0
      %1454 = vmatprep.subr.mxu0 0.0
      %1455 = vmatpush2.msra.mxu0 0.0
      %1456 = vmatprep.subr.mxu0 0.0
      %1457 = vmatpush2.msra.mxu0 0.0
      %1458 = vmatprep.subr.mxu0 0.0
      %1459 = vmatpush2.msra.mxu0 0.0
      %1460 = vmatprep.subr.mxu0 0.0
      %1461 = vmatpush2.msra.mxu0 0.0
      %1462 = vmatprep.subr.mxu0 0.0
      %1463 = vmatpush2.msra.mxu0 0.0
      %1464 = vmatprep.subr.mxu0 0.0
      %1465 = vmatpush2.msra.mxu0 0.0
      %1466 = vmatprep.subr.mxu0 0.0
      %1467 = vmatpush2.msra.mxu0 0.0
      %1468 = vmatprep.subr.mxu0 0.0
      %1469 = vmatpush2.msra.mxu0 0.0
      %1470 = vmatprep.subr.mxu0 0.0
      %1471 = vmatpush2.msra.mxu0 0.0
      %1472 = vmatprep.subr.mxu0 0.0
      %1473 = vmatpush2.msra.mxu0 0.0
      %1474 = vmatprep.mubr.f32.mxu0 0.0
      %1475 = vmatmul.mubr.f32.gmra.mxu0 %v1409
      %v1476 = vpop.f32.mrf.mxu0
      %v1477 = vadd.f32 0.0, %v1476
      %v1478 = vpop.f32.mrf.mxu0
      %1479 = vdwg.mxu0
      %v1480 = vadd.f32 %v1323, %v1477
      %v1481 = vtanh.pop %v1480
      %v1482 = vmul.f32 %v1401, %v1317
      %v1483 = vsub.f32 1.0, %v1401
      %v1484 = vmul.f32 %v1483, %v1481
      %v1485 = vadd.f32 %v1482, %v1484
      %s1486 = scalar_lea.vmem %s278, 32
      %1487 = vst [vmem:[%s1486] sm:$0xff] %v1485
      %s1488 = scalar_lea.vmem [#allocation3], 120
      %v1489 = vld [vmem:[%s1488] sm:$0xff]
      %v1490 = vld [vmem:[%s1488 + $0x8] sm:$0xff]
      %v1491 = vld [vmem:[%s1488 + $0x10] sm:$0xff]
      %1492 = vmatprep.subr.mxu0 %v632
      %1493 = vmatpush1.msra.mxu0 %v631
      %1494 = vmatprep.subr.mxu0 %v630
      %1495 = vmatpush1.msra.mxu0 %v629
      %1496 = vmatprep.subr.mxu0 %v628
      %1497 = vmatpush1.msra.mxu0 %v627
      %1498 = vmatprep.subr.mxu0 %v626
      %1499 = vmatpush1.msra.mxu0 %v625
      %1500 = vmatprep.subr.mxu0 %v624
      %1501 = vmatpush1.msra.mxu0 %v623
      %1502 = vmatprep.subr.mxu0 %v622
      %1503 = vmatpush1.msra.mxu0 %v621
      %1504 = vmatprep.subr.mxu0 %v620
      %1505 = vmatpush1.msra.mxu0 %v619
      %1506 = vmatprep.subr.mxu0 %v618
      %1507 = vmatpush1.msra.mxu0 %v617
      %1508 = vmatprep.subr.mxu0 %v616
      %1509 = vmatpush1.msra.mxu0 %v615
      %1510 = vmatprep.subr.mxu0 %v614
      %1511 = vmatpush1.msra.mxu0 %v613
      %1512 = vmatprep.subr.mxu0 %v612
      %1513 = vmatpush1.msra.mxu0 %v611
      %1514 = vmatprep.subr.mxu0 %v610
      %1515 = vmatpush1.msra.mxu0 %v609
      %1516 = vmatprep.subr.mxu0 %v608
      %1517 = vmatpush1.msra.mxu0 %v607
      %1518 = vmatprep.subr.mxu0 %v606
      %1519 = vmatpush1.msra.mxu0 %v605
      %1520 = vmatprep.subr.mxu0 %v604
      %1521 = vmatpush1.msra.mxu0 %v603
      %1522 = vmatprep.subr.mxu0 %v602
      %1523 = vmatpush1.msra.mxu0 %v601
      %1524 = vmatprep.subr.mxu0 0.0
      %1525 = vmatpush2.msra.mxu0 0.0
      %1526 = vmatprep.subr.mxu0 0.0
      %1527 = vmatpush2.msra.mxu0 0.0
      %1528 = vmatprep.subr.mxu0 0.0
      %1529 = vmatpush2.msra.mxu0 0.0
      %1530 = vmatprep.subr.mxu0 0.0
      %1531 = vmatpush2.msra.mxu0 0.0
      %1532 = vmatprep.subr.mxu0 0.0
      %1533 = vmatpush2.msra.mxu0 0.0
      %1534 = vmatprep.subr.mxu0 0.0
      %1535 = vmatpush2.msra.mxu0 0.0
      %1536 = vmatprep.subr.mxu0 0.0
      %1537 = vmatpush2.msra.mxu0 0.0
      %1538 = vmatprep.subr.mxu0 0.0
      %1539 = vmatpush2.msra.mxu0 0.0
      %1540 = vmatprep.subr.mxu0 0.0
      %1541 = vmatpush2.msra.mxu0 0.0
      %1542 = vmatprep.subr.mxu0 0.0
      %1543 = vmatpush2.msra.mxu0 0.0
      %1544 = vmatprep.subr.mxu0 0.0
      %1545 = vmatpush2.msra.mxu0 0.0
      %1546 = vmatprep.subr.mxu0 0.0
      %1547 = vmatpush2.msra.mxu0 0.0
      %1548 = vmatprep.subr.mxu0 0.0
      %1549 = vmatpush2.msra.mxu0 0.0
      %1550 = vmatprep.subr.mxu0 0.0
      %1551 = vmatpush2.msra.mxu0 0.0
      %1552 = vmatprep.subr.mxu0 0.0
      %1553 = vmatpush2.msra.mxu0 0.0
      %1554 = vmatprep.subr.mxu0 0.0
      %1555 = vmatpush2.msra.mxu0 0.0
      %1556 = vmatprep.mubr.f32.mxu0 0.0
      %1557 = vmatmul.mubr.f32.gmra.mxu0 %v1485
      %v1558 = vpop.f32.mrf.mxu0
      %v1559 = vadd.f32 0.0, %v1558
      %v1560 = vpop.f32.mrf.mxu0
      %v1561 = vadd.f32 0.0, %v1560
      %1562 = vdwg.mxu0
      %v1563 = vadd.f32 %v1489, %v1559
      %v1564 = vxor.u32 %v1563, 2147483648
      %v1565 = vmul.f32 %v1564, 1.442695
      %v1566 = vpow.pop %v1565
      %v1567 = vadd.f32 %v1566, 1.0
      %v1568 = vrcp.pop %v1567
      %v1569 = vmul.f32 1.0, %v1568
      %v1570 = vadd.f32 %v1490, %v1561
      %v1571 = vxor.u32 %v1570, 2147483648
      %v1572 = vmul.f32 %v1571, 1.442695
      %v1573 = vpow.pop %v1572
      %v1574 = vadd.f32 %v1573, 1.0
      %v1575 = vrcp.pop %v1574
      %v1576 = vmul.f32 1.0, %v1575
      %v1577 = vmul.f32 %v1576, %v1485
      %1578 = vmatprep.subr.mxu0 0.0
      %1579 = vmatpush1.msra.mxu0 %v648
      %1580 = vmatprep.subr.mxu0 0.0
      %1581 = vmatpush1.msra.mxu0 %v647
      %1582 = vmatprep.subr.mxu0 0.0
      %1583 = vmatpush1.msra.mxu0 %v646
      %1584 = vmatprep.subr.mxu0 0.0
      %1585 = vmatpush1.msra.mxu0 %v645
      %1586 = vmatprep.subr.mxu0 0.0
      %1587 = vmatpush1.msra.mxu0 %v644
      %1588 = vmatprep.subr.mxu0 0.0
      %1589 = vmatpush1.msra.mxu0 %v643
      %1590 = vmatprep.subr.mxu0 0.0
      %1591 = vmatpush1.msra.mxu0 %v642
      %1592 = vmatprep.subr.mxu0 0.0
      %1593 = vmatpush1.msra.mxu0 %v641
      %1594 = vmatprep.subr.mxu0 0.0
      %1595 = vmatpush1.msra.mxu0 %v640
      %1596 = vmatprep.subr.mxu0 0.0
      %1597 = vmatpush1.msra.mxu0 %v639
      %1598 = vmatprep.subr.mxu0 0.0
      %1599 = vmatpush1.msra.mxu0 %v638
      %1600 = vmatprep.subr.mxu0 0.0
      %1601 = vmatpush1.msra.mxu0 %v637
      %1602 = vmatprep.subr.mxu0 0.0
      %1603 = vmatpush1.msra.mxu0 %v636
      %1604 = vmatprep.subr.mxu0 0.0
      %1605 = vmatpush1.msra.mxu0 %v635
      %1606 = vmatprep.subr.mxu0 0.0
      %1607 = vmatpush1.msra.mxu0 %v634
      %1608 = vmatprep.subr.mxu0 0.0
      %1609 = vmatpush1.msra.mxu0 %v633
      %1610 = vmatprep.subr.mxu0 0.0
      %1611 = vmatpush2.msra.mxu0 0.0
      %1612 = vmatprep.subr.mxu0 0.0
      %1613 = vmatpush2.msra.mxu0 0.0
      %1614 = vmatprep.subr.mxu0 0.0
      %1615 = vmatpush2.msra.mxu0 0.0
      %1616 = vmatprep.subr.mxu0 0.0
      %1617 = vmatpush2.msra.mxu0 0.0
      %1618 = vmatprep.subr.mxu0 0.0
      %1619 = vmatpush2.msra.mxu0 0.0
      %1620 = vmatprep.subr.mxu0 0.0
      %1621 = vmatpush2.msra.mxu0 0.0
      %1622 = vmatprep.subr.mxu0 0.0
      %1623 = vmatpush2.msra.mxu0 0.0
      %1624 = vmatprep.subr.mxu0 0.0
      %1625 = vmatpush2.msra.mxu0 0.0
      %1626 = vmatprep.subr.mxu0 0.0
      %1627 = vmatpush2.msra.mxu0 0.0
      %1628 = vmatprep.subr.mxu0 0.0
      %1629 = vmatpush2.msra.mxu0 0.0
      %1630 = vmatprep.subr.mxu0 0.0
      %1631 = vmatpush2.msra.mxu0 0.0
      %1632 = vmatprep.subr.mxu0 0.0
      %1633 = vmatpush2.msra.mxu0 0.0
      %1634 = vmatprep.subr.mxu0 0.0
      %1635 = vmatpush2.msra.mxu0 0.0
      %1636 = vmatprep.subr.mxu0 0.0
      %1637 = vmatpush2.msra.mxu0 0.0
      %1638 = vmatprep.subr.mxu0 0.0
      %1639 = vmatpush2.msra.mxu0 0.0
      %1640 = vmatprep.subr.mxu0 0.0
      %1641 = vmatpush2.msra.mxu0 0.0
      %1642 = vmatprep.mubr.f32.mxu0 0.0
      %1643 = vmatmul.mubr.f32.gmra.mxu0 %v1577
      %v1644 = vpop.f32.mrf.mxu0
      %v1645 = vadd.f32 0.0, %v1644
      %v1646 = vpop.f32.mrf.mxu0
      %1647 = vdwg.mxu0
      %v1648 = vadd.f32 %v1491, %v1645
      %v1649 = vtanh.pop %v1648
      %v1650 = vmul.f32 %v1569, %v1485
      %v1651 = vsub.f32 1.0, %v1569
      %v1652 = vmul.f32 %v1651, %v1649
      %v1653 = vadd.f32 %v1650, %v1652
      %s1654 = scalar_lea.vmem %s278, 40
      %1655 = vst [vmem:[%s1654] sm:$0xff] %v1653
      %s1656 = scalar_lea.vmem [#allocation3], 144
      %v1657 = vld [vmem:[%s1656] sm:$0xff]
      %v1658 = vld [vmem:[%s1656 + $0x8] sm:$0xff]
      %v1659 = vld [vmem:[%s1656 + $0x10] sm:$0xff]
      %1660 = vmatprep.subr.mxu0 %v632
      %1661 = vmatpush1.msra.mxu0 %v631
      %1662 = vmatprep.subr.mxu0 %v630
      %1663 = vmatpush1.msra.mxu0 %v629
      %1664 = vmatprep.subr.mxu0 %v628
      %1665 = vmatpush1.msra.mxu0 %v627
      %1666 = vmatprep.subr.mxu0 %v626
      %1667 = vmatpush1.msra.mxu0 %v625
      %1668 = vmatprep.subr.mxu0 %v624
      %1669 = vmatpush1.msra.mxu0 %v623
      %1670 = vmatprep.subr.mxu0 %v622
      %1671 = vmatpush1.msra.mxu0 %v621
      %1672 = vmatprep.subr.mxu0 %v620
      %1673 = vmatpush1.msra.mxu0 %v619
      %1674 = vmatprep.subr.mxu0 %v618
      %1675 = vmatpush1.msra.mxu0 %v617
      %1676 = vmatprep.subr.mxu0 %v616
      %1677 = vmatpush1.msra.mxu0 %v615
      %1678 = vmatprep.subr.mxu0 %v614
      %1679 = vmatpush1.msra.mxu0 %v613
      %1680 = vmatprep.subr.mxu0 %v612
      %1681 = vmatpush1.msra.mxu0 %v611
      %1682 = vmatprep.subr.mxu0 %v610
      %1683 = vmatpush1.msra.mxu0 %v609
      %1684 = vmatprep.subr.mxu0 %v608
      %1685 = vmatpush1.msra.mxu0 %v607
      %1686 = vmatprep.subr.mxu0 %v606
      %1687 = vmatpush1.msra.mxu0 %v605
      %1688 = vmatprep.subr.mxu0 %v604
      %1689 = vmatpush1.msra.mxu0 %v603
      %1690 = vmatprep.subr.mxu0 %v602
      %1691 = vmatpush1.msra.mxu0 %v601
      %1692 = vmatprep.subr.mxu0 0.0
      %1693 = vmatpush2.msra.mxu0 0.0
      %1694 = vmatprep.subr.mxu0 0.0
      %1695 = vmatpush2.msra.mxu0 0.0
      %1696 = vmatprep.subr.mxu0 0.0
      %1697 = vmatpush2.msra.mxu0 0.0
      %1698 = vmatprep.subr.mxu0 0.0
      %1699 = vmatpush2.msra.mxu0 0.0
      %1700 = vmatprep.subr.mxu0 0.0
      %1701 = vmatpush2.msra.mxu0 0.0
      %1702 = vmatprep.subr.mxu0 0.0
      %1703 = vmatpush2.msra.mxu0 0.0
      %1704 = vmatprep.subr.mxu0 0.0
      %1705 = vmatpush2.msra.mxu0 0.0
      %1706 = vmatprep.subr.mxu0 0.0
      %1707 = vmatpush2.msra.mxu0 0.0
      %1708 = vmatprep.subr.mxu0 0.0
      %1709 = vmatpush2.msra.mxu0 0.0
      %1710 = vmatprep.subr.mxu0 0.0
      %1711 = vmatpush2.msra.mxu0 0.0
      %1712 = vmatprep.subr.mxu0 0.0
      %1713 = vmatpush2.msra.mxu0 0.0
      %1714 = vmatprep.subr.mxu0 0.0
      %1715 = vmatpush2.msra.mxu0 0.0
      %1716 = vmatprep.subr.mxu0 0.0
      %1717 = vmatpush2.msra.mxu0 0.0
      %1718 = vmatprep.subr.mxu0 0.0
      %1719 = vmatpush2.msra.mxu0 0.0
      %1720 = vmatprep.subr.mxu0 0.0
      %1721 = vmatpush2.msra.mxu0 0.0
      %1722 = vmatprep.subr.mxu0 0.0
      %1723 = vmatpush2.msra.mxu0 0.0
      %1724 = vmatprep.mubr.f32.mxu0 0.0
      %1725 = vmatmul.mubr.f32.gmra.mxu0 %v1653
      %v1726 = vpop.f32.mrf.mxu0
      %v1727 = vadd.f32 0.0, %v1726
      %v1728 = vpop.f32.mrf.mxu0
      %v1729 = vadd.f32 0.0, %v1728
      %1730 = vdwg.mxu0
      %v1731 = vadd.f32 %v1657, %v1727
      %v1732 = vxor.u32 %v1731, 2147483648
      %v1733 = vmul.f32 %v1732, 1.442695
      %v1734 = vpow.pop %v1733
      %v1735 = vadd.f32 %v1734, 1.0
      %v1736 = vrcp.pop %v1735
      %v1737 = vmul.f32 1.0, %v1736
      %v1738 = vadd.f32 %v1658, %v1729
      %v1739 = vxor.u32 %v1738, 2147483648
      %v1740 = vmul.f32 %v1739, 1.442695
      %v1741 = vpow.pop %v1740
      %v1742 = vadd.f32 %v1741, 1.0
      %v1743 = vrcp.pop %v1742
      %v1744 = vmul.f32 1.0, %v1743
      %v1745 = vmul.f32 %v1744, %v1653
      %1746 = vmatprep.subr.mxu0 0.0
      %1747 = vmatpush1.msra.mxu0 %v648
      %1748 = vmatprep.subr.mxu0 0.0
      %1749 = vmatpush1.msra.mxu0 %v647
      %1750 = vmatprep.subr.mxu0 0.0
      %1751 = vmatpush1.msra.mxu0 %v646
      %1752 = vmatprep.subr.mxu0 0.0
      %1753 = vmatpush1.msra.mxu0 %v645
      %1754 = vmatprep.subr.mxu0 0.0
      %1755 = vmatpush1.msra.mxu0 %v644
      %1756 = vmatprep.subr.mxu0 0.0
      %1757 = vmatpush1.msra.mxu0 %v643
      %1758 = vmatprep.subr.mxu0 0.0
      %1759 = vmatpush1.msra.mxu0 %v642
      %1760 = vmatprep.subr.mxu0 0.0
      %1761 = vmatpush1.msra.mxu0 %v641
      %1762 = vmatprep.subr.mxu0 0.0
      %1763 = vmatpush1.msra.mxu0 %v640
      %1764 = vmatprep.subr.mxu0 0.0
      %1765 = vmatpush1.msra.mxu0 %v639
      %1766 = vmatprep.subr.mxu0 0.0
      %1767 = vmatpush1.msra.mxu0 %v638
      %1768 = vmatprep.subr.mxu0 0.0
      %1769 = vmatpush1.msra.mxu0 %v637
      %1770 = vmatprep.subr.mxu0 0.0
      %1771 = vmatpush1.msra.mxu0 %v636
      %1772 = vmatprep.subr.mxu0 0.0
      %1773 = vmatpush1.msra.mxu0 %v635
      %1774 = vmatprep.subr.mxu0 0.0
      %1775 = vmatpush1.msra.mxu0 %v634
      %1776 = vmatprep.subr.mxu0 0.0
      %1777 = vmatpush1.msra.mxu0 %v633
      %1778 = vmatprep.subr.mxu0 0.0
      %1779 = vmatpush2.msra.mxu0 0.0
      %1780 = vmatprep.subr.mxu0 0.0
      %1781 = vmatpush2.msra.mxu0 0.0
      %1782 = vmatprep.subr.mxu0 0.0
      %1783 = vmatpush2.msra.mxu0 0.0
      %1784 = vmatprep.subr.mxu0 0.0
      %1785 = vmatpush2.msra.mxu0 0.0
      %1786 = vmatprep.subr.mxu0 0.0
      %1787 = vmatpush2.msra.mxu0 0.0
      %1788 = vmatprep.subr.mxu0 0.0
      %1789 = vmatpush2.msra.mxu0 0.0
      %1790 = vmatprep.subr.mxu0 0.0
      %1791 = vmatpush2.msra.mxu0 0.0
      %1792 = vmatprep.subr.mxu0 0.0
      %1793 = vmatpush2.msra.mxu0 0.0
      %1794 = vmatprep.subr.mxu0 0.0
      %1795 = vmatpush2.msra.mxu0 0.0
      %1796 = vmatprep.subr.mxu0 0.0
      %1797 = vmatpush2.msra.mxu0 0.0
      %1798 = vmatprep.subr.mxu0 0.0
      %1799 = vmatpush2.msra.mxu0 0.0
      %1800 = vmatprep.subr.mxu0 0.0
      %1801 = vmatpush2.msra.mxu0 0.0
      %1802 = vmatprep.subr.mxu0 0.0
      %1803 = vmatpush2.msra.mxu0 0.0
      %1804 = vmatprep.subr.mxu0 0.0
      %1805 = vmatpush2.msra.mxu0 0.0
      %1806 = vmatprep.subr.mxu0 0.0
      %1807 = vmatpush2.msra.mxu0 0.0
      %1808 = vmatprep.subr.mxu0 0.0
      %1809 = vmatpush2.msra.mxu0 0.0
      %1810 = vmatprep.mubr.f32.mxu0 0.0
      %1811 = vmatmul.mubr.f32.gmra.mxu0 %v1745
      %v1812 = vpop.f32.mrf.mxu0
      %v1813 = vadd.f32 0.0, %v1812
      %v1814 = vpop.f32.mrf.mxu0
      %1815 = vdwg.mxu0
      %v1816 = vadd.f32 %v1659, %v1813
      %v1817 = vtanh.pop %v1816
      %v1818 = vmul.f32 %v1737, %v1653
      %v1819 = vsub.f32 1.0, %v1737
      %v1820 = vmul.f32 %v1819, %v1817
      %v1821 = vadd.f32 %v1818, %v1820
      %s1822 = scalar_lea.vmem %s278, 48
      %1823 = vst [vmem:[%s1822] sm:$0xff] %v1821
      %s1824 = scalar_lea.vmem [#allocation3], 168
      %v1825 = vld [vmem:[%s1824] sm:$0xff]
      %v1826 = vld [vmem:[%s1824 + $0x8] sm:$0xff]
      %v1827 = vld [vmem:[%s1824 + $0x10] sm:$0xff]
      %1828 = vmatprep.subr.mxu0 %v632
      %1829 = vmatpush1.msra.mxu0 %v631
      %1830 = vmatprep.subr.mxu0 %v630
      %1831 = vmatpush1.msra.mxu0 %v629
      %1832 = vmatprep.subr.mxu0 %v628
      %1833 = vmatpush1.msra.mxu0 %v627
      %1834 = vmatprep.subr.mxu0 %v626
      %1835 = vmatpush1.msra.mxu0 %v625
      %1836 = vmatprep.subr.mxu0 %v624
      %1837 = vmatpush1.msra.mxu0 %v623
      %1838 = vmatprep.subr.mxu0 %v622
      %1839 = vmatpush1.msra.mxu0 %v621
      %1840 = vmatprep.subr.mxu0 %v620
      %1841 = vmatpush1.msra.mxu0 %v619
      %1842 = vmatprep.subr.mxu0 %v618
      %1843 = vmatpush1.msra.mxu0 %v617
      %1844 = vmatprep.subr.mxu0 %v616
      %1845 = vmatpush1.msra.mxu0 %v615
      %1846 = vmatprep.subr.mxu0 %v614
      %1847 = vmatpush1.msra.mxu0 %v613
      %1848 = vmatprep.subr.mxu0 %v612
      %1849 = vmatpush1.msra.mxu0 %v611
      %1850 = vmatprep.subr.mxu0 %v610
      %1851 = vmatpush1.msra.mxu0 %v609
      %1852 = vmatprep.subr.mxu0 %v608
      %1853 = vmatpush1.msra.mxu0 %v607
      %1854 = vmatprep.subr.mxu0 %v606
      %1855 = vmatpush1.msra.mxu0 %v605
      %1856 = vmatprep.subr.mxu0 %v604
      %1857 = vmatpush1.msra.mxu0 %v603
      %1858 = vmatprep.subr.mxu0 %v602
      %1859 = vmatpush1.msra.mxu0 %v601
      %1860 = vmatprep.subr.mxu0 0.0
      %1861 = vmatpush2.msra.mxu0 0.0
      %1862 = vmatprep.subr.mxu0 0.0
      %1863 = vmatpush2.msra.mxu0 0.0
      %1864 = vmatprep.subr.mxu0 0.0
      %1865 = vmatpush2.msra.mxu0 0.0
      %1866 = vmatprep.subr.mxu0 0.0
      %1867 = vmatpush2.msra.mxu0 0.0
      %1868 = vmatprep.subr.mxu0 0.0
      %1869 = vmatpush2.msra.mxu0 0.0
      %1870 = vmatprep.subr.mxu0 0.0
      %1871 = vmatpush2.msra.mxu0 0.0
      %1872 = vmatprep.subr.mxu0 0.0
      %1873 = vmatpush2.msra.mxu0 0.0
      %1874 = vmatprep.subr.mxu0 0.0
      %1875 = vmatpush2.msra.mxu0 0.0
      %1876 = vmatprep.subr.mxu0 0.0
      %1877 = vmatpush2.msra.mxu0 0.0
      %1878 = vmatprep.subr.mxu0 0.0
      %1879 = vmatpush2.msra.mxu0 0.0
      %1880 = vmatprep.subr.mxu0 0.0
      %1881 = vmatpush2.msra.mxu0 0.0
      %1882 = vmatprep.subr.mxu0 0.0
      %1883 = vmatpush2.msra.mxu0 0.0
      %1884 = vmatprep.subr.mxu0 0.0
      %1885 = vmatpush2.msra.mxu0 0.0
      %1886 = vmatprep.subr.mxu0 0.0
      %1887 = vmatpush2.msra.mxu0 0.0
      %1888 = vmatprep.subr.mxu0 0.0
      %1889 = vmatpush2.msra.mxu0 0.0
      %1890 = vmatprep.subr.mxu0 0.0
      %1891 = vmatpush2.msra.mxu0 0.0
      %1892 = vmatprep.mubr.f32.mxu0 0.0
      %1893 = vmatmul.mubr.f32.gmra.mxu0 %v1821
      %v1894 = vpop.f32.mrf.mxu0
      %v1895 = vadd.f32 0.0, %v1894
      %v1896 = vpop.f32.mrf.mxu0
      %v1897 = vadd.f32 0.0, %v1896
      %1898 = vdwg.mxu0
      %v1899 = vadd.f32 %v1825, %v1895
      %v1900 = vxor.u32 %v1899, 2147483648
      %v1901 = vmul.f32 %v1900, 1.442695
      %v1902 = vpow.pop %v1901
      %v1903 = vadd.f32 %v1902, 1.0
      %v1904 = vrcp.pop %v1903
      %v1905 = vmul.f32 1.0, %v1904
      %v1906 = vadd.f32 %v1826, %v1897
      %v1907 = vxor.u32 %v1906, 2147483648
      %v1908 = vmul.f32 %v1907, 1.442695
      %v1909 = vpow.pop %v1908
      %v1910 = vadd.f32 %v1909, 1.0
      %v1911 = vrcp.pop %v1910
      %v1912 = vmul.f32 1.0, %v1911
      %v1913 = vmul.f32 %v1912, %v1821
      %1914 = vmatprep.subr.mxu0 0.0
      %1915 = vmatpush1.msra.mxu0 %v648
      %1916 = vmatprep.subr.mxu0 0.0
      %1917 = vmatpush1.msra.mxu0 %v647
      %1918 = vmatprep.subr.mxu0 0.0
      %1919 = vmatpush1.msra.mxu0 %v646
      %1920 = vmatprep.subr.mxu0 0.0
      %1921 = vmatpush1.msra.mxu0 %v645
      %1922 = vmatprep.subr.mxu0 0.0
      %1923 = vmatpush1.msra.mxu0 %v644
      %1924 = vmatprep.subr.mxu0 0.0
      %1925 = vmatpush1.msra.mxu0 %v643
      %1926 = vmatprep.subr.mxu0 0.0
      %1927 = vmatpush1.msra.mxu0 %v642
      %1928 = vmatprep.subr.mxu0 0.0
      %1929 = vmatpush1.msra.mxu0 %v641
      %1930 = vmatprep.subr.mxu0 0.0
      %1931 = vmatpush1.msra.mxu0 %v640
      %1932 = vmatprep.subr.mxu0 0.0
      %1933 = vmatpush1.msra.mxu0 %v639
      %1934 = vmatprep.subr.mxu0 0.0
      %1935 = vmatpush1.msra.mxu0 %v638
      %1936 = vmatprep.subr.mxu0 0.0
      %1937 = vmatpush1.msra.mxu0 %v637
      %1938 = vmatprep.subr.mxu0 0.0
      %1939 = vmatpush1.msra.mxu0 %v636
      %1940 = vmatprep.subr.mxu0 0.0
      %1941 = vmatpush1.msra.mxu0 %v635
      %1942 = vmatprep.subr.mxu0 0.0
      %1943 = vmatpush1.msra.mxu0 %v634
      %1944 = vmatprep.subr.mxu0 0.0
      %1945 = vmatpush1.msra.mxu0 %v633
      %1946 = vmatprep.subr.mxu0 0.0
      %1947 = vmatpush2.msra.mxu0 0.0
      %1948 = vmatprep.subr.mxu0 0.0
      %1949 = vmatpush2.msra.mxu0 0.0
      %1950 = vmatprep.subr.mxu0 0.0
      %1951 = vmatpush2.msra.mxu0 0.0
      %1952 = vmatprep.subr.mxu0 0.0
      %1953 = vmatpush2.msra.mxu0 0.0
      %1954 = vmatprep.subr.mxu0 0.0
      %1955 = vmatpush2.msra.mxu0 0.0
      %1956 = vmatprep.subr.mxu0 0.0
      %1957 = vmatpush2.msra.mxu0 0.0
      %1958 = vmatprep.subr.mxu0 0.0
      %1959 = vmatpush2.msra.mxu0 0.0
      %1960 = vmatprep.subr.mxu0 0.0
      %1961 = vmatpush2.msra.mxu0 0.0
      %1962 = vmatprep.subr.mxu0 0.0
      %1963 = vmatpush2.msra.mxu0 0.0
      %1964 = vmatprep.subr.mxu0 0.0
      %1965 = vmatpush2.msra.mxu0 0.0
      %1966 = vmatprep.subr.mxu0 0.0
      %1967 = vmatpush2.msra.mxu0 0.0
      %1968 = vmatprep.subr.mxu0 0.0
      %1969 = vmatpush2.msra.mxu0 0.0
      %1970 = vmatprep.subr.mxu0 0.0
      %1971 = vmatpush2.msra.mxu0 0.0
      %1972 = vmatprep.subr.mxu0 0.0
      %1973 = vmatpush2.msra.mxu0 0.0
      %1974 = vmatprep.subr.mxu0 0.0
      %1975 = vmatpush2.msra.mxu0 0.0
      %1976 = vmatprep.subr.mxu0 0.0
      %1977 = vmatpush2.msra.mxu0 0.0
      %1978 = vmatprep.mubr.f32.mxu0 0.0
      %1979 = vmatmul.mubr.f32.gmra.mxu0 %v1913
      %v1980 = vpop.f32.mrf.mxu0
      %v1981 = vadd.f32 0.0, %v1980
      %v1982 = vpop.f32.mrf.mxu0
      %1983 = vdwg.mxu0
      %v1984 = vadd.f32 %v1827, %v1981
      %v1985 = vtanh.pop %v1984
      %v1986 = vmul.f32 %v1905, %v1821
      %v1987 = vsub.f32 1.0, %v1905
      %v1988 = vmul.f32 %v1987, %v1985
      %v1989 = vadd.f32 %v1986, %v1988
      %s1990 = scalar_lea.vmem %s278, 56
      %1991 = vst [vmem:[%s1990] sm:$0xff] %v1989
      %1992 = vst [vmem:[#allocation2] sm:$0xff] %v1989
      %p1993 = scmp.eq.s32.totalorder %s19, 1
      // Predicated region
      $region49: #{multilayer_gru_forward.2} parent=43 // pred_check
        %p1994 = pneg %p1993
      $region50: #{multilayer_gru_forward.2} parent=43 // pred_check_branch
        %1996 = sbr.rel (%p1994) target = $region52
      $region51: #{multilayer_gru_forward.2} parent=43 // pred_region
        %1997 = vst [vmem:[%s7] sm:$0xff] %v1989
      $region52: #{multilayer_gru_forward.2} parent=43 // pred_fallthru
        _
      %s1998 = smul.u32 8, %s19
      %p1999 = scmp.lt.s32.totalorder %s1998, 15
      %s2000 = scalar_select %p1999, %s1998, 15
      %s2001 = smul.addr %s2000, 8
      %s2002 = scalar_lea.vmem %s6, %s2001
      // Predicated region
      $region53: #{multilayer_gru_forward.2} parent=43 // pred_check
        %p2003 = pneg %p168
      $region54: #{multilayer_gru_forward.2} parent=43 // pred_check_branch
        %2005 = sbr.rel (%p2003) target = $region56
      $region55: #{multilayer_gru_forward.2} parent=43 // pred_region
        %s2006 = smul.u32 8, %s19
      $region56: #{multilayer_gru_forward.2} parent=43 // pred_fallthru
        _
      // Predicated region
      $region57: #{multilayer_gru_forward.2} parent=43 // pred_check
        %p2007 = pneg %p189
      $region58: #{multilayer_gru_forward.2} parent=43 // pred_check_branch
        %2009 = sbr.rel (%p2007) target = $region60
      $region59: #{multilayer_gru_forward.2} parent=43 // pred_region
        _
      $region60: #{multilayer_gru_forward.2} parent=43 // pred_fallthru
        _
      // Predicated region
      $region61: #{multilayer_gru_forward.2} parent=43 // pred_check
        %p2010 = pneg %p189
      $region62: #{multilayer_gru_forward.2} parent=43 // pred_check_branch
        %2012 = sbr.rel (%p2010) target = $region64
      $region63: #{multilayer_gru_forward.2} parent=43 // pred_region
        _
      $region64: #{multilayer_gru_forward.2} parent=43 // pred_fallthru
        _
    $region44: #{multilayer_gru_forward.2} parent=5 // pred_fallthru
      _
    %p2013 = scmp.le.s32.totalorder 2, %s14
    // Predicated region
    $region65: #{multilayer_gru_forward.2} parent=5 // pred_check
      %p2014 = pneg %p2013
    $region66: #{multilayer_gru_forward.2} parent=5 // pred_check_branch
      %2016 = sbr.rel (%p2014) target = $region68
    $region67: #{multilayer_gru_forward.2} parent=5 // pred_region
      %s2017 = ssub.s32 %s14, 2
      // Predicated region
      $region69: #{multilayer_gru_forward.2} parent=67 // pred_check
        %p2018 = pneg %p174
      $region70: #{multilayer_gru_forward.2} parent=67 // pred_check_branch
        %2020 = sbr.rel (%p2018) target = $region72
      $region71: #{multilayer_gru_forward.2} parent=67 // pred_region
        %s2021 = smul.u32 8, %s20
        %p2022 = scmp.lt.s32.totalorder %s2021, 15
        %s2023 = scalar_select %p2022, %s2021, 15
        %s2024 = smul.addr %s2023, 8
        %s2025 = scalar_lea.vmem %s6, %s2024
      $region72: #{multilayer_gru_forward.2} parent=67 // pred_fallthru
        _
    $region68: #{multilayer_gru_forward.2} parent=5 // pred_fallthru
      _
  $region6: #{multilayer_gru_forward.2} parent=0 // loop_footer
    %s18 = sadd.s32 1, %s14
  $region7: #{multilayer_gru_forward.2} parent=0 // loop_footer_branch
    %13 = sbr.rel target = $region3
  $region8: #{multilayer_gru_forward.2} parent=0 // loop_exit
    _

// kernel: multilayer_gru_forward.3
$region0: #{multilayer_gru_forward.3}
  #allocation0 [shape = 'u32[]', space=smem, size = 0x4, offset = 0x4, fixed_abs, tag = 'smem constant byte address 0x4 - core index']
  #allocation1 [shape = 'u32[144,128]{1,0:T(1,128)}', space=vmem, size = 0x12000, scoped, tag = 'internal scratch']
  #allocation2 [shape = 'f32[8,128]{1,0:T(8,128)}', space=vmem, size = 0x1000, scoped, tag = 'scratch operand']
  #allocation3 [shape = 'f32[8,8,384]{2,1,0:T(8,128)}', space=vmem, size = 0x18000, scoped, tag = 'scratch operand']
  #allocation4 [shape = 'f32[8,8,128]{2,1,0:T(8,128)}', space=vmem, size = 0x8000, scoped, tag = 'scratch operand']
  %s0 = inlined_call_operand.vmem [shape: f32[16,8,128], index: 0, kind: input, shape index: {}]
  %s1 = inlined_call_operand.vmem [shape: f32[8,128], index: 1, kind: input, shape index: {}]
  %s2 = inlined_call_operand.vmem [shape: f32[128,384], index: 2, kind: input, shape index: {}]
  %s3 = inlined_call_operand.vmem [shape: f32[128,256], index: 3, kind: input, shape index: {}]
  %s4 = inlined_call_operand.vmem [shape: f32[128,128], index: 4, kind: input, shape index: {}]
  %s5 = inlined_call_operand.vmem [shape: f32[1,384], index: 5, kind: input, shape index: {}]
  %s6 = inlined_call_operand.vmem [shape: f32[128,128], index: 6, kind: input, shape index: {}]
  %s7 = inlined_call_operand.vmem [shape: f32[1,128], index: 7, kind: input, shape index: {}]
  %s8 = inlined_call_operand.vmem [shape: f32[16,8,128], index: 8, kind: output, shape index: {0}]
  %s9 = inlined_call_operand.vmem [shape: f32[8,128], index: 9, kind: output, shape index: {1}]
  %10 = xla_tuple %s8, %s9
  %s11 = sld [smem:[#allocation0]]
  $region81: #{multilayer_gru_forward.3} parent=0
    _
  %s13 = ssub.s32 1, %s11
  %s14 = scalar_select 0, %s13, %s11
  loop: start=0, step=1, limit=4
  $region2: #{multilayer_gru_forward.3} parent=0 // loop_pre_header
    _
  $region3: #{multilayer_gru_forward.3} parent=0 // loop_header
    %s16 = sphi 0, %s20
    %p17 = scmp.ge.s32.totalorder %s16, 4
    %s26 = sphi 0, %s28
    %s29 = sphi 0, %s26
    %s30 = sphi 0, %s29
    %s46 = sphi 0, %s30
    %s50 = sphi 0, %s50
    %s52 = sphi 0, %s50
    %s53 = sphi 0, %s52
    %s67 = sphi 0, %s53
    %s71 = sphi 0, %s71
    %s73 = sphi 0, %s71
    %s74 = sphi 0, %s73
    %s88 = sphi 0, %s74
    %s92 = sphi 0, %s92
    %s94 = sphi 0, %s92
    %s95 = sphi 0, %s94
    %s109 = sphi 0, %s95
    %s113 = sphi 0, %s113
    %s115 = sphi 0, %s113
    %s116 = sphi 0, %s115
    %s130 = sphi 0, %s116
    %s134 = sphi 0, %s134
    %s136 = sphi 0, %s134
    %s137 = sphi 0, %s136
    %s151 = sphi 0, %s137
    %s155 = sphi 0, %s155
    %s157 = sphi 0, %s155
    %s158 = sphi 0, %s157
    %s172 = sphi 0, %s158
    %s176 = sphi 0, %s176
    %s178 = sphi 0, %s176
    %s179 = sphi 0, %s178
    %s193 = sphi 0, %s179
    %s199 = sphi 0, %s201
    %s202 = sphi 0, %s199
    %s203 = sphi 0, %s202
    %s219 = sphi 0, %s203
    %s223 = sphi 0, %s223
    %s225 = sphi 0, %s223
    %s226 = sphi 0, %s225
    %s240 = sphi 0, %s226
  $region4: #{multilayer_gru_forward.3} parent=0 // loop_header_branch
    %19 = sbr.rel (%p17) target = $region8
  $region5: #{multilayer_gru_forward.3} parent=0 // loop_body
    %s21 = ssub.s32 %s16, 1
    %s22 = ssub.s32 %s16, 2
    %s23 = sadd.s32 %s16, 1
    %s24 = ssub.s32 %s16, %s23
    %p25 = scmp.eq.s32.totalorder %s24, 0
    %s27 = sadd.s32 %s26, 1
    %s28 = scalar_select %p25, %s26, %s27
    %p31 = pneg %p25
    %p32 = scmp.eq.s32.totalorder %s16, 1
    %p33 = por %p31, %p32
    %p34 = scmp.ne.s32.totalorder %s26, %s29
    %p35 = scmp.eq.s32.totalorder %s16, 0
    %p36 = por %p34, %p35
    %p37 = scmp.ne.s32.totalorder %s26, %s29
    %p38 = scmp.eq.s32.totalorder %s21, 1
    %p39 = por %p37, %p38
    %p40 = scmp.ne.s32.totalorder %s29, %s30
    %p41 = scmp.eq.s32.totalorder %s21, 0
    %p42 = por %p40, %p41
    %p43 = scmp.ne.s32.totalorder %s29, %s30
    %p44 = scmp.eq.s32.totalorder %s22, 1
    %p45 = por %p43, %p44
    %p47 = scmp.ne.s32.totalorder %s30, %s46
    %p48 = scmp.eq.s32.totalorder %s22, 0
    %p49 = por %p47, %p48
    %s51 = sadd.s32 %s50, 1
    %p54 = scmp.eq.s32.totalorder %s16, 1
    %p55 = scmp.ne.s32.totalorder %s50, %s52
    %p56 = scmp.eq.s32.totalorder %s16, 0
    %p57 = por %p55, %p56
    %p58 = scmp.ne.s32.totalorder %s50, %s52
    %p59 = scmp.eq.s32.totalorder %s21, 1
    %p60 = por %p58, %p59
    %p61 = scmp.ne.s32.totalorder %s52, %s53
    %p62 = scmp.eq.s32.totalorder %s21, 0
    %p63 = por %p61, %p62
    %p64 = scmp.ne.s32.totalorder %s52, %s53
    %p65 = scmp.eq.s32.totalorder %s22, 1
    %p66 = por %p64, %p65
    %p68 = scmp.ne.s32.totalorder %s53, %s67
    %p69 = scmp.eq.s32.totalorder %s22, 0
    %p70 = por %p68, %p69
    %s72 = sadd.s32 %s71, 1
    %p75 = scmp.eq.s32.totalorder %s16, 1
    %p76 = scmp.ne.s32.totalorder %s71, %s73
    %p77 = scmp.eq.s32.totalorder %s16, 0
    %p78 = por %p76, %p77
    %p79 = scmp.ne.s32.totalorder %s71, %s73
    %p80 = scmp.eq.s32.totalorder %s21, 1
    %p81 = por %p79, %p80
    %p82 = scmp.ne.s32.totalorder %s73, %s74
    %p83 = scmp.eq.s32.totalorder %s21, 0
    %p84 = por %p82, %p83
    %p85 = scmp.ne.s32.totalorder %s73, %s74
    %p86 = scmp.eq.s32.totalorder %s22, 1
    %p87 = por %p85, %p86
    %p89 = scmp.ne.s32.totalorder %s74, %s88
    %p90 = scmp.eq.s32.totalorder %s22, 0
    %p91 = por %p89, %p90
    %s93 = sadd.s32 %s92, 1
    %p96 = scmp.eq.s32.totalorder %s16, 1
    %p97 = scmp.ne.s32.totalorder %s92, %s94
    %p98 = scmp.eq.s32.totalorder %s16, 0
    %p99 = por %p97, %p98
    %p100 = scmp.ne.s32.totalorder %s92, %s94
    %p101 = scmp.eq.s32.totalorder %s21, 1
    %p102 = por %p100, %p101
    %p103 = scmp.ne.s32.totalorder %s94, %s95
    %p104 = scmp.eq.s32.totalorder %s21, 0
    %p105 = por %p103, %p104
    %p106 = scmp.ne.s32.totalorder %s94, %s95
    %p107 = scmp.eq.s32.totalorder %s22, 1
    %p108 = por %p106, %p107
    %p110 = scmp.ne.s32.totalorder %s95, %s109
    %p111 = scmp.eq.s32.totalorder %s22, 0
    %p112 = por %p110, %p111
    %s114 = sadd.s32 %s113, 1
    %p117 = scmp.eq.s32.totalorder %s16, 1
    %p118 = scmp.ne.s32.totalorder %s113, %s115
    %p119 = scmp.eq.s32.totalorder %s16, 0
    %p120 = por %p118, %p119
    %p121 = scmp.ne.s32.totalorder %s113, %s115
    %p122 = scmp.eq.s32.totalorder %s21, 1
    %p123 = por %p121, %p122
    %p124 = scmp.ne.s32.totalorder %s115, %s116
    %p125 = scmp.eq.s32.totalorder %s21, 0
    %p126 = por %p124, %p125
    %p127 = scmp.ne.s32.totalorder %s115, %s116
    %p128 = scmp.eq.s32.totalorder %s22, 1
    %p129 = por %p127, %p128
    %p131 = scmp.ne.s32.totalorder %s116, %s130
    %p132 = scmp.eq.s32.totalorder %s22, 0
    %p133 = por %p131, %p132
    %s135 = sadd.s32 %s134, 1
    %p138 = scmp.eq.s32.totalorder %s16, 1
    %p139 = scmp.ne.s32.totalorder %s134, %s136
    %p140 = scmp.eq.s32.totalorder %s16, 0
    %p141 = por %p139, %p140
    %p142 = scmp.ne.s32.totalorder %s134, %s136
    %p143 = scmp.eq.s32.totalorder %s21, 1
    %p144 = por %p142, %p143
    %p145 = scmp.ne.s32.totalorder %s136, %s137
    %p146 = scmp.eq.s32.totalorder %s21, 0
    %p147 = por %p145, %p146
    %p148 = scmp.ne.s32.totalorder %s136, %s137
    %p149 = scmp.eq.s32.totalorder %s22, 1
    %p150 = por %p148, %p149
    %p152 = scmp.ne.s32.totalorder %s137, %s151
    %p153 = scmp.eq.s32.totalorder %s22, 0
    %p154 = por %p152, %p153
    %s156 = sadd.s32 %s155, 1
    %p159 = scmp.eq.s32.totalorder %s16, 1
    %p160 = scmp.ne.s32.totalorder %s155, %s157
    %p161 = scmp.eq.s32.totalorder %s16, 0
    %p162 = por %p160, %p161
    %p163 = scmp.ne.s32.totalorder %s155, %s157
    %p164 = scmp.eq.s32.totalorder %s21, 1
    %p165 = por %p163, %p164
    %p166 = scmp.ne.s32.totalorder %s157, %s158
    %p167 = scmp.eq.s32.totalorder %s21, 0
    %p168 = por %p166, %p167
    %p169 = scmp.ne.s32.totalorder %s157, %s158
    %p170 = scmp.eq.s32.totalorder %s22, 1
    %p171 = por %p169, %p170
    %p173 = scmp.ne.s32.totalorder %s158, %s172
    %p174 = scmp.eq.s32.totalorder %s22, 0
    %p175 = por %p173, %p174
    %s177 = sadd.s32 %s176, 1
    %p180 = scmp.eq.s32.totalorder %s16, 1
    %p181 = scmp.ne.s32.totalorder %s176, %s178
    %p182 = scmp.eq.s32.totalorder %s16, 0
    %p183 = por %p181, %p182
    %p184 = scmp.ne.s32.totalorder %s176, %s178
    %p185 = scmp.eq.s32.totalorder %s21, 1
    %p186 = por %p184, %p185
    %p187 = scmp.ne.s32.totalorder %s178, %s179
    %p188 = scmp.eq.s32.totalorder %s21, 0
    %p189 = por %p187, %p188
    %p190 = scmp.ne.s32.totalorder %s178, %s179
    %p191 = scmp.eq.s32.totalorder %s22, 1
    %p192 = por %p190, %p191
    %p194 = scmp.ne.s32.totalorder %s179, %s193
    %p195 = scmp.eq.s32.totalorder %s22, 0
    %p196 = por %p194, %p195
    %s197 = ssub.s32 %s16, %s23
    %p198 = scmp.eq.s32.totalorder %s197, 0
    %s200 = sadd.s32 %s199, 1
    %s201 = scalar_select %p198, %s199, %s200
    %p204 = pneg %p198
    %p205 = scmp.eq.s32.totalorder %s16, 1
    %p206 = por %p204, %p205
    %p207 = scmp.ne.s32.totalorder %s199, %s202
    %p208 = scmp.eq.s32.totalorder %s16, 0
    %p209 = por %p207, %p208
    %p210 = scmp.ne.s32.totalorder %s199, %s202
    %p211 = scmp.eq.s32.totalorder %s21, 1
    %p212 = por %p210, %p211
    %p213 = scmp.ne.s32.totalorder %s202, %s203
    %p214 = scmp.eq.s32.totalorder %s21, 0
    %p215 = por %p213, %p214
    %p216 = scmp.ne.s32.totalorder %s202, %s203
    %p217 = scmp.eq.s32.totalorder %s22, 1
    %p218 = por %p216, %p217
    %p220 = scmp.ne.s32.totalorder %s203, %s219
    %p221 = scmp.eq.s32.totalorder %s22, 0
    %p222 = por %p220, %p221
    %s224 = sadd.s32 %s223, 1
    %p227 = scmp.eq.s32.totalorder %s16, 1
    %p228 = scmp.ne.s32.totalorder %s223, %s225
    %p229 = scmp.eq.s32.totalorder %s16, 0
    %p230 = por %p228, %p229
    %p231 = scmp.ne.s32.totalorder %s223, %s225
    %p232 = scmp.eq.s32.totalorder %s21, 1
    %p233 = por %p231, %p232
    %p234 = scmp.ne.s32.totalorder %s225, %s226
    %p235 = scmp.eq.s32.totalorder %s21, 0
    %p236 = por %p234, %p235
    %p237 = scmp.ne.s32.totalorder %s225, %s226
    %p238 = scmp.eq.s32.totalorder %s22, 1
    %p239 = por %p237, %p238
    %p241 = scmp.ne.s32.totalorder %s226, %s240
    %p242 = scmp.eq.s32.totalorder %s22, 0
    %p243 = por %p241, %p242
    %p244 = scmp.le.s32.totalorder 1, %s16
    %p245 = scmp.lt.s32.totalorder %s16, 3
    %p246 = pnand %p244, %p245
    %p247 = pneg %p246
    // Predicated region
    $region9: #{multilayer_gru_forward.3} parent=5 // pred_check
      _
    $region10: #{multilayer_gru_forward.3} parent=5 // pred_check_branch
      %249 = sbr.rel (%p246) target = $region12
    $region11: #{multilayer_gru_forward.3} parent=5 // pred_region
      %s250 = ssub.s32 %s16, 1
      // Predicated region
      $region13: #{multilayer_gru_forward.3} parent=11 // pred_check
        %p251 = pneg %p63
      $region14: #{multilayer_gru_forward.3} parent=11 // pred_check_branch
        %253 = sbr.rel (%p251) target = $region16
      $region15: #{multilayer_gru_forward.3} parent=11 // pred_region
        _
      $region16: #{multilayer_gru_forward.3} parent=11 // pred_fallthru
        _
      // Predicated region
      $region17: #{multilayer_gru_forward.3} parent=11 // pred_check
        %p254 = pneg %p84
      $region18: #{multilayer_gru_forward.3} parent=11 // pred_check_branch
        %256 = sbr.rel (%p254) target = $region20
      $region19: #{multilayer_gru_forward.3} parent=11 // pred_region
        _
      $region20: #{multilayer_gru_forward.3} parent=11 // pred_fallthru
        _
      // Predicated region
      $region21: #{multilayer_gru_forward.3} parent=11 // pred_check
        %p257 = pneg %p105
      $region22: #{multilayer_gru_forward.3} parent=11 // pred_check_branch
        %259 = sbr.rel (%p257) target = $region24
      $region23: #{multilayer_gru_forward.3} parent=11 // pred_region
        _
      $region24: #{multilayer_gru_forward.3} parent=11 // pred_fallthru
        _
      // Predicated region
      $region25: #{multilayer_gru_forward.3} parent=11 // pred_check
        %p260 = pneg %p126
      $region26: #{multilayer_gru_forward.3} parent=11 // pred_check_branch
        %262 = sbr.rel (%p260) target = $region28
      $region27: #{multilayer_gru_forward.3} parent=11 // pred_region
        _
      $region28: #{multilayer_gru_forward.3} parent=11 // pred_fallthru
        _
      // Predicated region
      $region29: #{multilayer_gru_forward.3} parent=11 // pred_check
        %p263 = pneg %p147
      $region30: #{multilayer_gru_forward.3} parent=11 // pred_check_branch
        %265 = sbr.rel (%p263) target = $region32
      $region31: #{multilayer_gru_forward.3} parent=11 // pred_region
        _
      $region32: #{multilayer_gru_forward.3} parent=11 // pred_fallthru
        _
      // Predicated region
      $region33: #{multilayer_gru_forward.3} parent=11 // pred_check
        %p266 = pneg %p168
      $region34: #{multilayer_gru_forward.3} parent=11 // pred_check_branch
        %268 = sbr.rel (%p266) target = $region36
      $region35: #{multilayer_gru_forward.3} parent=11 // pred_region
        _
      $region36: #{multilayer_gru_forward.3} parent=11 // pred_fallthru
        _
      // Predicated region
      $region37: #{multilayer_gru_forward.3} parent=11 // pred_check
        %p269 = pneg %p189
      $region38: #{multilayer_gru_forward.3} parent=11 // pred_check_branch
        %271 = sbr.rel (%p269) target = $region40
      $region39: #{multilayer_gru_forward.3} parent=11 // pred_region
        _
      $region40: #{multilayer_gru_forward.3} parent=11 // pred_fallthru
        _
    $region12: #{multilayer_gru_forward.3} parent=5 // pred_fallthru
      _
    %p272 = scmp.lt.s32.totalorder %s16, 2
    // Predicated region
    $region41: #{multilayer_gru_forward.3} parent=5 // pred_check
      %p273 = pneg %p272
    $region42: #{multilayer_gru_forward.3} parent=5 // pred_check_branch
      %275 = sbr.rel (%p273) target = $region44
    $region43: #{multilayer_gru_forward.3} parent=5 // pred_region
      // Predicated region
      $region45: #{multilayer_gru_forward.3} parent=43 // pred_check
        %p276 = pneg %p36
      $region46: #{multilayer_gru_forward.3} parent=43 // pred_check_branch
        %278 = sbr.rel (%p276) target = $region48
      $region47: #{multilayer_gru_forward.3} parent=43 // pred_region
        %s279 = smul.u32 8, %s16
        %p280 = scmp.lt.s32.totalorder %s279, 15
        %s281 = scalar_select %p280, %s279, 15
        %s282 = smul.addr %s281, 8
        %s283 = scalar_lea.vmem %s0, %s282
        %s284 = smul.u32 8, %s16
      $region48: #{multilayer_gru_forward.3} parent=43 // pred_fallthru
        _
    $region44: #{multilayer_gru_forward.3} parent=5 // pred_fallthru
      _
    %p285 = scmp.le.s32.totalorder 1, %s16
    %p286 = scmp.lt.s32.totalorder %s16, 3
    %p287 = pnand %p285, %p286
    %p288 = pneg %p287
    // Predicated region
    $region49: #{multilayer_gru_forward.3} parent=5 // pred_check
      _
    $region50: #{multilayer_gru_forward.3} parent=5 // pred_check_branch
      %290 = sbr.rel (%p287) target = $region52
    $region51: #{multilayer_gru_forward.3} parent=5 // pred_region
      %s291 = ssub.s32 %s16, 1
      %s292 = smul.u32 8, %s21
      %p293 = scmp.lt.s32.totalorder %s292, 15
      %s294 = scalar_select %p293, %s292, 15
      %s295 = smul.addr %s294, 8
      %s296 = scalar_lea.vmem %s0, %s295
      %p297 = pneg %p42
      %p298 = pneg %p39
      %p299 = pneg %p63
      %p300 = pneg %p60
      %p301 = pneg %p84
      %p302 = pneg %p81
      %p303 = pneg %p105
      %p304 = pneg %p102
      %p305 = pneg %p126
      %p306 = pneg %p123
      %p307 = pneg %p147
      %p308 = pneg %p144
      %p309 = pneg %p168
      %p310 = pneg %p165
      %p311 = pneg %p189
      %p312 = pneg %p186
      %p313 = pneg %p215
      %p314 = pneg %p212
      %s315 = smul.u32 8, %s21
      %p316 = scmp.lt.s32.totalorder %s315, 15
      %s317 = scalar_select %p316, %s315, 15
      %s318 = smul.addr %s317, 8
      %s319 = scalar_lea.vmem %s8, %s318
      %p320 = pneg %p236
      %p321 = pneg %p233
      %s322 = smul.u32 8, %s21
      %p323 = scmp.lt.s32.totalorder %s322, 15
      %s324 = scalar_select %p323, %s322, 15
      %s325 = smul.addr %s324, 8
      %s326 = scalar_lea.vmem %s0, %s325
      %s327 = smul.u32 8, %s21
      %s328 = smul.u32 8, %s21
      %p329 = scmp.lt.s32.totalorder %s328, 15
      %s330 = scalar_select %p329, %s328, 15
      %s331 = smul.addr %s330, 8
      %s332 = scalar_lea.vmem %s8, %s331
      %s333 = smul.u32 8, %s21
      %p334 = scmp.eq.s32.totalorder %s21, 0
      // Predicated region
      $region53: #{multilayer_gru_forward.3} parent=51 // pred_check
        %p335 = pneg %p334
      $region54: #{multilayer_gru_forward.3} parent=51 // pred_check_branch
        %337 = sbr.rel (%p335) target = $region56
      $region55: #{multilayer_gru_forward.3} parent=51 // pred_region
        %v338 = vld [vmem:[%s1] sm:$0xff]
        %339 = vst [vmem:[#allocation2] sm:$0xff] %v338
      $region56: #{multilayer_gru_forward.3} parent=51 // pred_fallthru
        _
      %v340 = vld [vmem:[%s326] sm:$0xff]
      %v341 = vld [vmem:[%s326 + $0x8] sm:$0xff]
      %v342 = vld [vmem:[%s326 + $0x10] sm:$0xff]
      %v343 = vld [vmem:[%s326 + $0x18] sm:$0xff]
      %v344 = vld [vmem:[%s326 + $0x20] sm:$0xff]
      %v345 = vld [vmem:[%s326 + $0x28] sm:$0xff]
      %v346 = vld [vmem:[%s326 + $0x30] sm:$0xff]
      %v347 = vld [vmem:[%s326 + $0x38] sm:$0xff]
      %v348 = vld [vmem:[%s2] sm:$0xff]
      %v349 = vld [vmem:[%s2 + $0x8] sm:$0xff]
      %v350 = vld [vmem:[%s2 + $0x10] sm:$0xff]
      %v351 = vld [vmem:[%s2 + $0x18] sm:$0xff]
      %v352 = vld [vmem:[%s2 + $0x20] sm:$0xff]
      %v353 = vld [vmem:[%s2 + $0x28] sm:$0xff]
      %v354 = vld [vmem:[%s2 + $0x30] sm:$0xff]
      %v355 = vld [vmem:[%s2 + $0x38] sm:$0xff]
      %v356 = vld [vmem:[%s2 + $0x40] sm:$0xff]
      %v357 = vld [vmem:[%s2 + $0x48] sm:$0xff]
      %v358 = vld [vmem:[%s2 + $0x50] sm:$0xff]
      %v359 = vld [vmem:[%s2 + $0x58] sm:$0xff]
      %v360 = vld [vmem:[%s2 + $0x60] sm:$0xff]
      %v361 = vld [vmem:[%s2 + $0x68] sm:$0xff]
      %v362 = vld [vmem:[%s2 + $0x70] sm:$0xff]
      %v363 = vld [vmem:[%s2 + $0x78] sm:$0xff]
      %v364 = vld [vmem:[%s2 + $0x80] sm:$0xff]
      %v365 = vld [vmem:[%s2 + $0x88] sm:$0xff]
      %v366 = vld [vmem:[%s2 + $0x90] sm:$0xff]
      %v367 = vld [vmem:[%s2 + $0x98] sm:$0xff]
      %v368 = vld [vmem:[%s2 + $0xa0] sm:$0xff]
      %v369 = vld [vmem:[%s2 + $0xa8] sm:$0xff]
      %v370 = vld [vmem:[%s2 + $0xb0] sm:$0xff]
      %v371 = vld [vmem:[%s2 + $0xb8] sm:$0xff]
      %v372 = vld [vmem:[%s2 + $0xc0] sm:$0xff]
      %v373 = vld [vmem:[%s2 + $0xc8] sm:$0xff]
      %v374 = vld [vmem:[%s2 + $0xd0] sm:$0xff]
      %v375 = vld [vmem:[%s2 + $0xd8] sm:$0xff]
      %v376 = vld [vmem:[%s2 + $0xe0] sm:$0xff]
      %v377 = vld [vmem:[%s2 + $0xe8] sm:$0xff]
      %v378 = vld [vmem:[%s2 + $0xf0] sm:$0xff]
      %v379 = vld [vmem:[%s2 + $0xf8] sm:$0xff]
      %v380 = vld [vmem:[%s2 + $0x100] sm:$0xff]
      %v381 = vld [vmem:[%s2 + $0x108] sm:$0xff]
      %v382 = vld [vmem:[%s2 + $0x110] sm:$0xff]
      %v383 = vld [vmem:[%s2 + $0x118] sm:$0xff]
      %v384 = vld [vmem:[%s2 + $0x120] sm:$0xff]
      %v385 = vld [vmem:[%s2 + $0x128] sm:$0xff]
      %v386 = vld [vmem:[%s2 + $0x130] sm:$0xff]
      %v387 = vld [vmem:[%s2 + $0x138] sm:$0xff]
      %v388 = vld [vmem:[%s2 + $0x140] sm:$0xff]
      %v389 = vld [vmem:[%s2 + $0x148] sm:$0xff]
      %v390 = vld [vmem:[%s2 + $0x150] sm:$0xff]
      %v391 = vld [vmem:[%s2 + $0x158] sm:$0xff]
      %v392 = vld [vmem:[%s2 + $0x160] sm:$0xff]
      %v393 = vld [vmem:[%s2 + $0x168] sm:$0xff]
      %v394 = vld [vmem:[%s2 + $0x170] sm:$0xff]
      %v395 = vld [vmem:[%s2 + $0x178] sm:$0xff]
      %v396 = vld [vmem:[%s5] sm:$0x7]
      %v398 = vlaneseq
      %v399 = vshrl.u32 %v398, 7
      %v400 = vsub.s32 0, %v399
      %v401 = vrot.slane %v396, %v400
      %v402 = vlaneseq
      %v403 = vshrl.u32 %v402, 7
      %v404 = vsub.s32 1, %v403
      %v405 = vrot.slane %v396, %v404
      %v406 = vlaneseq
      %v407 = vshrl.u32 %v406, 7
      %v408 = vsub.s32 2, %v407
      %v409 = vrot.slane %v396, %v408
      %413 = vmatprep.subr.mxu0 %v394
      %414 = vmatpush1.msra.mxu0 %v393
      %415 = vmatprep.subr.mxu0 %v391
      %416 = vmatpush1.msra.mxu0 %v390
      %417 = vmatprep.subr.mxu0 %v388
      %418 = vmatpush1.msra.mxu0 %v387
      %419 = vmatprep.subr.mxu0 %v385
      %420 = vmatpush1.msra.mxu0 %v384
      %421 = vmatprep.subr.mxu0 %v382
      %422 = vmatpush1.msra.mxu0 %v381
      %423 = vmatprep.subr.mxu0 %v379
      %424 = vmatpush1.msra.mxu0 %v378
      %425 = vmatprep.subr.mxu0 %v376
      %426 = vmatpush1.msra.mxu0 %v375
      %427 = vmatprep.subr.mxu0 %v373
      %428 = vmatpush1.msra.mxu0 %v372
      %429 = vmatprep.subr.mxu0 %v370
      %430 = vmatpush1.msra.mxu0 %v369
      %431 = vmatprep.subr.mxu0 %v367
      %432 = vmatpush1.msra.mxu0 %v366
      %433 = vmatprep.subr.mxu0 %v364
      %434 = vmatpush1.msra.mxu0 %v363
      %435 = vmatprep.subr.mxu0 %v361
      %436 = vmatpush1.msra.mxu0 %v360
      %437 = vmatprep.subr.mxu0 %v358
      %438 = vmatpush1.msra.mxu0 %v357
      %439 = vmatprep.subr.mxu0 %v355
      %440 = vmatpush1.msra.mxu0 %v354
      %441 = vmatprep.subr.mxu0 %v352
      %442 = vmatpush1.msra.mxu0 %v351
      %443 = vmatprep.subr.mxu0 %v349
      %444 = vmatpush1.msra.mxu0 %v348
      %445 = vmatprep.subr.mxu0 0.0
      %446 = vmatpush2.msra.mxu0 0.0
      %447 = vmatprep.subr.mxu0 0.0
      %448 = vmatpush2.msra.mxu0 0.0
      %449 = vmatprep.subr.mxu0 0.0
      %450 = vmatpush2.msra.mxu0 0.0
      %451 = vmatprep.subr.mxu0 0.0
      %452 = vmatpush2.msra.mxu0 0.0
      %453 = vmatprep.subr.mxu0 0.0
      %454 = vmatpush2.msra.mxu0 0.0
      %455 = vmatprep.subr.mxu0 0.0
      %456 = vmatpush2.msra.mxu0 0.0
      %457 = vmatprep.subr.mxu0 0.0
      %458 = vmatpush2.msra.mxu0 0.0
      %459 = vmatprep.subr.mxu0 0.0
      %460 = vmatpush2.msra.mxu0 0.0
      %461 = vmatprep.subr.mxu0 0.0
      %462 = vmatpush2.msra.mxu0 0.0
      %463 = vmatprep.subr.mxu0 0.0
      %464 = vmatpush2.msra.mxu0 0.0
      %465 = vmatprep.subr.mxu0 0.0
      %466 = vmatpush2.msra.mxu0 0.0
      %467 = vmatprep.subr.mxu0 0.0
      %468 = vmatpush2.msra.mxu0 0.0
      %469 = vmatprep.subr.mxu0 0.0
      %470 = vmatpush2.msra.mxu0 0.0
      %471 = vmatprep.subr.mxu0 0.0
      %472 = vmatpush2.msra.mxu0 0.0
      %473 = vmatprep.subr.mxu0 0.0
      %474 = vmatpush2.msra.mxu0 0.0
      %475 = vmatprep.subr.mxu0 0.0
      %476 = vmatpush2.msra.mxu0 0.0
      %477 = vmatprep.mubr.f32.mxu0 0.0
      %478 = vmatmul.mubr.f32.gmra.mxu0 %v340
      %v479 = vpop.f32.mrf.mxu0
      %v480 = vadd.f32 %v401, %v479
      %v481 = vpop.f32.mrf.mxu0
      %v482 = vadd.f32 %v405, %v481
      %483 = vmatprep.mubr.f32.mxu0 0.0
      %484 = vmatmul.mubr.f32.gmra.mxu0 %v341
      %v485 = vpop.f32.mrf.mxu0
      %v486 = vadd.f32 %v401, %v485
      %v487 = vpop.f32.mrf.mxu0
      %v488 = vadd.f32 %v405, %v487
      %489 = vmatprep.mubr.f32.mxu0 0.0
      %490 = vmatmul.mubr.f32.gmra.mxu0 %v342
      %v491 = vpop.f32.mrf.mxu0
      %v492 = vadd.f32 %v401, %v491
      %v493 = vpop.f32.mrf.mxu0
      %v494 = vadd.f32 %v405, %v493
      %495 = vmatprep.mubr.f32.mxu0 0.0
      %496 = vmatmul.mubr.f32.gmra.mxu0 %v343
      %v497 = vpop.f32.mrf.mxu0
      %v498 = vadd.f32 %v401, %v497
      %v499 = vpop.f32.mrf.mxu0
      %v500 = vadd.f32 %v405, %v499
      %501 = vmatprep.mubr.f32.mxu0 0.0
      %502 = vmatmul.mubr.f32.gmra.mxu0 %v344
      %v503 = vpop.f32.mrf.mxu0
      %v504 = vadd.f32 %v401, %v503
      %v505 = vpop.f32.mrf.mxu0
      %v506 = vadd.f32 %v405, %v505
      %507 = vmatprep.mubr.f32.mxu0 0.0
      %508 = vmatmul.mubr.f32.gmra.mxu0 %v345
      %v509 = vpop.f32.mrf.mxu0
      %v510 = vadd.f32 %v401, %v509
      %v511 = vpop.f32.mrf.mxu0
      %v512 = vadd.f32 %v405, %v511
      %513 = vmatprep.mubr.f32.mxu0 0.0
      %514 = vmatmul.mubr.f32.gmra.mxu0 %v346
      %v515 = vpop.f32.mrf.mxu0
      %v516 = vadd.f32 %v401, %v515
      %v517 = vpop.f32.mrf.mxu0
      %v518 = vadd.f32 %v405, %v517
      %519 = vmatprep.mubr.f32.mxu0 0.0
      %520 = vmatmul.mubr.f32.gmra.mxu0 %v347
      %v521 = vpop.f32.mrf.mxu0
      %v522 = vadd.f32 %v401, %v521
      %v523 = vpop.f32.mrf.mxu0
      %v524 = vadd.f32 %v405, %v523
      %525 = vdwg.mxu0
      %526 = vmatprep.subr.mxu0 0.0
      %527 = vmatpush1.msra.mxu0 %v395
      %528 = vmatprep.subr.mxu0 0.0
      %529 = vmatpush1.msra.mxu0 %v392
      %530 = vmatprep.subr.mxu0 0.0
      %531 = vmatpush1.msra.mxu0 %v389
      %532 = vmatprep.subr.mxu0 0.0
      %533 = vmatpush1.msra.mxu0 %v386
      %534 = vmatprep.subr.mxu0 0.0
      %535 = vmatpush1.msra.mxu0 %v383
      %536 = vmatprep.subr.mxu0 0.0
      %537 = vmatpush1.msra.mxu0 %v380
      %538 = vmatprep.subr.mxu0 0.0
      %539 = vmatpush1.msra.mxu0 %v377
      %540 = vmatprep.subr.mxu0 0.0
      %541 = vmatpush1.msra.mxu0 %v374
      %542 = vmatprep.subr.mxu0 0.0
      %543 = vmatpush1.msra.mxu0 %v371
      %544 = vmatprep.subr.mxu0 0.0
      %545 = vmatpush1.msra.mxu0 %v368
      %546 = vmatprep.subr.mxu0 0.0
      %547 = vmatpush1.msra.mxu0 %v365
      %548 = vmatprep.subr.mxu0 0.0
      %549 = vmatpush1.msra.mxu0 %v362
      %550 = vmatprep.subr.mxu0 0.0
      %551 = vmatpush1.msra.mxu0 %v359
      %552 = vmatprep.subr.mxu0 0.0
      %553 = vmatpush1.msra.mxu0 %v356
      %554 = vmatprep.subr.mxu0 0.0
      %555 = vmatpush1.msra.mxu0 %v353
      %556 = vmatprep.subr.mxu0 0.0
      %557 = vmatpush1.msra.mxu0 %v350
      %558 = vmatprep.subr.mxu0 0.0
      %559 = vmatpush2.msra.mxu0 0.0
      %560 = vmatprep.subr.mxu0 0.0
      %561 = vmatpush2.msra.mxu0 0.0
      %562 = vmatprep.subr.mxu0 0.0
      %563 = vmatpush2.msra.mxu0 0.0
      %564 = vmatprep.subr.mxu0 0.0
      %565 = vmatpush2.msra.mxu0 0.0
      %566 = vmatprep.subr.mxu0 0.0
      %567 = vmatpush2.msra.mxu0 0.0
      %568 = vmatprep.subr.mxu0 0.0
      %569 = vmatpush2.msra.mxu0 0.0
      %570 = vmatprep.subr.mxu0 0.0
      %571 = vmatpush2.msra.mxu0 0.0
      %572 = vmatprep.subr.mxu0 0.0
      %573 = vmatpush2.msra.mxu0 0.0
      %574 = vmatprep.subr.mxu0 0.0
      %575 = vmatpush2.msra.mxu0 0.0
      %576 = vmatprep.subr.mxu0 0.0
      %577 = vmatpush2.msra.mxu0 0.0
      %578 = vmatprep.subr.mxu0 0.0
      %579 = vmatpush2.msra.mxu0 0.0
      %580 = vmatprep.subr.mxu0 0.0
      %581 = vmatpush2.msra.mxu0 0.0
      %582 = vmatprep.subr.mxu0 0.0
      %583 = vmatpush2.msra.mxu0 0.0
      %584 = vmatprep.subr.mxu0 0.0
      %585 = vmatpush2.msra.mxu0 0.0
      %586 = vmatprep.subr.mxu0 0.0
      %587 = vmatpush2.msra.mxu0 0.0
      %588 = vmatprep.subr.mxu0 0.0
      %589 = vmatpush2.msra.mxu0 0.0
      %590 = vmatprep.mubr.f32.mxu0 0.0
      %591 = vmatmul.mubr.f32.gmra.mxu0 %v340
      %v592 = vpop.f32.mrf.mxu0
      %v593 = vadd.f32 %v409, %v592
      %v594 = vpop.f32.mrf.mxu0
      %595 = vmatprep.mubr.f32.mxu0 0.0
      %596 = vmatmul.mubr.f32.gmra.mxu0 %v341
      %v597 = vpop.f32.mrf.mxu0
      %v598 = vadd.f32 %v409, %v597
      %v599 = vpop.f32.mrf.mxu0
      %600 = vmatprep.mubr.f32.mxu0 0.0
      %601 = vmatmul.mubr.f32.gmra.mxu0 %v342
      %v602 = vpop.f32.mrf.mxu0
      %v603 = vadd.f32 %v409, %v602
      %v604 = vpop.f32.mrf.mxu0
      %605 = vmatprep.mubr.f32.mxu0 0.0
      %606 = vmatmul.mubr.f32.gmra.mxu0 %v343
      %v607 = vpop.f32.mrf.mxu0
      %v608 = vadd.f32 %v409, %v607
      %v609 = vpop.f32.mrf.mxu0
      %610 = vmatprep.mubr.f32.mxu0 0.0
      %611 = vmatmul.mubr.f32.gmra.mxu0 %v344
      %v612 = vpop.f32.mrf.mxu0
      %v613 = vadd.f32 %v409, %v612
      %v614 = vpop.f32.mrf.mxu0
      %615 = vmatprep.mubr.f32.mxu0 0.0
      %616 = vmatmul.mubr.f32.gmra.mxu0 %v345
      %v617 = vpop.f32.mrf.mxu0
      %v618 = vadd.f32 %v409, %v617
      %v619 = vpop.f32.mrf.mxu0
      %620 = vmatprep.mubr.f32.mxu0 0.0
      %621 = vmatmul.mubr.f32.gmra.mxu0 %v346
      %v622 = vpop.f32.mrf.mxu0
      %v623 = vadd.f32 %v409, %v622
      %v624 = vpop.f32.mrf.mxu0
      %625 = vmatprep.mubr.f32.mxu0 0.0
      %626 = vmatmul.mubr.f32.gmra.mxu0 %v347
      %v627 = vpop.f32.mrf.mxu0
      %v628 = vadd.f32 %v409, %v627
      %v629 = vpop.f32.mrf.mxu0
      %630 = vdwg.mxu0
      %631 = vst [vmem:[#allocation3] sm:$0xff] %v480
      %632 = vst [vmem:[#allocation3 + $0x8] sm:$0xff] %v482
      %633 = vst [vmem:[#allocation3 + $0x10] sm:$0xff] %v593
      %634 = vst [vmem:[#allocation3 + $0x18] sm:$0xff] %v486
      %635 = vst [vmem:[#allocation3 + $0x20] sm:$0xff] %v488
      %636 = vst [vmem:[#allocation3 + $0x28] sm:$0xff] %v598
      %637 = vst [vmem:[#allocation3 + $0x30] sm:$0xff] %v492
      %638 = vst [vmem:[#allocation3 + $0x38] sm:$0xff] %v494
      %639 = vst [vmem:[#allocation3 + $0x40] sm:$0xff] %v603
      %640 = vst [vmem:[#allocation3 + $0x48] sm:$0xff] %v498
      %641 = vst [vmem:[#allocation3 + $0x50] sm:$0xff] %v500
      %642 = vst [vmem:[#allocation3 + $0x58] sm:$0xff] %v608
      %643 = vst [vmem:[#allocation3 + $0x60] sm:$0xff] %v504
      %644 = vst [vmem:[#allocation3 + $0x68] sm:$0xff] %v506
      %645 = vst [vmem:[#allocation3 + $0x70] sm:$0xff] %v613
      %646 = vst [vmem:[#allocation3 + $0x78] sm:$0xff] %v510
      %647 = vst [vmem:[#allocation3 + $0x80] sm:$0xff] %v512
      %648 = vst [vmem:[#allocation3 + $0x88] sm:$0xff] %v618
      %649 = vst [vmem:[#allocation3 + $0x90] sm:$0xff] %v516
      %650 = vst [vmem:[#allocation3 + $0x98] sm:$0xff] %v518
      %651 = vst [vmem:[#allocation3 + $0xa0] sm:$0xff] %v623
      %652 = vst [vmem:[#allocation3 + $0xa8] sm:$0xff] %v522
      %653 = vst [vmem:[#allocation3 + $0xb0] sm:$0xff] %v524
      %654 = vst [vmem:[#allocation3 + $0xb8] sm:$0xff] %v628
      %v655 = vld [vmem:[%s3] sm:$0xff]
      %v656 = vld [vmem:[%s3 + $0x8] sm:$0xff]
      %v657 = vld [vmem:[%s3 + $0x10] sm:$0xff]
      %v658 = vld [vmem:[%s3 + $0x18] sm:$0xff]
      %v659 = vld [vmem:[%s3 + $0x20] sm:$0xff]
      %v660 = vld [vmem:[%s3 + $0x28] sm:$0xff]
      %v661 = vld [vmem:[%s3 + $0x30] sm:$0xff]
      %v662 = vld [vmem:[%s3 + $0x38] sm:$0xff]
      %v663 = vld [vmem:[%s3 + $0x40] sm:$0xff]
      %v664 = vld [vmem:[%s3 + $0x48] sm:$0xff]
      %v665 = vld [vmem:[%s3 + $0x50] sm:$0xff]
      %v666 = vld [vmem:[%s3 + $0x58] sm:$0xff]
      %v667 = vld [vmem:[%s3 + $0x60] sm:$0xff]
      %v668 = vld [vmem:[%s3 + $0x68] sm:$0xff]
      %v669 = vld [vmem:[%s3 + $0x70] sm:$0xff]
      %v670 = vld [vmem:[%s3 + $0x78] sm:$0xff]
      %v671 = vld [vmem:[%s3 + $0x80] sm:$0xff]
      %v672 = vld [vmem:[%s3 + $0x88] sm:$0xff]
      %v673 = vld [vmem:[%s3 + $0x90] sm:$0xff]
      %v674 = vld [vmem:[%s3 + $0x98] sm:$0xff]
      %v675 = vld [vmem:[%s3 + $0xa0] sm:$0xff]
      %v676 = vld [vmem:[%s3 + $0xa8] sm:$0xff]
      %v677 = vld [vmem:[%s3 + $0xb0] sm:$0xff]
      %v678 = vld [vmem:[%s3 + $0xb8] sm:$0xff]
      %v679 = vld [vmem:[%s3 + $0xc0] sm:$0xff]
      %v680 = vld [vmem:[%s3 + $0xc8] sm:$0xff]
      %v681 = vld [vmem:[%s3 + $0xd0] sm:$0xff]
      %v682 = vld [vmem:[%s3 + $0xd8] sm:$0xff]
      %v683 = vld [vmem:[%s3 + $0xe0] sm:$0xff]
      %v684 = vld [vmem:[%s3 + $0xe8] sm:$0xff]
      %v685 = vld [vmem:[%s3 + $0xf0] sm:$0xff]
      %v686 = vld [vmem:[%s3 + $0xf8] sm:$0xff]
      %v687 = vld [vmem:[%s4] sm:$0xff]
      %v688 = vld [vmem:[%s4 + $0x8] sm:$0xff]
      %v689 = vld [vmem:[%s4 + $0x10] sm:$0xff]
      %v690 = vld [vmem:[%s4 + $0x18] sm:$0xff]
      %v691 = vld [vmem:[%s4 + $0x20] sm:$0xff]
      %v692 = vld [vmem:[%s4 + $0x28] sm:$0xff]
      %v693 = vld [vmem:[%s4 + $0x30] sm:$0xff]
      %v694 = vld [vmem:[%s4 + $0x38] sm:$0xff]
      %v695 = vld [vmem:[%s4 + $0x40] sm:$0xff]
      %v696 = vld [vmem:[%s4 + $0x48] sm:$0xff]
      %v697 = vld [vmem:[%s4 + $0x50] sm:$0xff]
      %v698 = vld [vmem:[%s4 + $0x58] sm:$0xff]
      %v699 = vld [vmem:[%s4 + $0x60] sm:$0xff]
      %v700 = vld [vmem:[%s4 + $0x68] sm:$0xff]
      %v701 = vld [vmem:[%s4 + $0x70] sm:$0xff]
      %v702 = vld [vmem:[%s4 + $0x78] sm:$0xff]
      %v703 = vld [vmem:[#allocation2] sm:$0xff]
      %v704 = vld [vmem:[#allocation3] sm:$0xff]
      %v705 = vld [vmem:[#allocation3 + $0x8] sm:$0xff]
      %v706 = vld [vmem:[#allocation3 + $0x10] sm:$0xff]
      %707 = vmatprep.subr.mxu0 %v686
      %708 = vmatpush1.msra.mxu0 %v685
      %709 = vmatprep.subr.mxu0 %v684
      %710 = vmatpush1.msra.mxu0 %v683
      %711 = vmatprep.subr.mxu0 %v682
      %712 = vmatpush1.msra.mxu0 %v681
      %713 = vmatprep.subr.mxu0 %v680
      %714 = vmatpush1.msra.mxu0 %v679
      %715 = vmatprep.subr.mxu0 %v678
      %716 = vmatpush1.msra.mxu0 %v677
      %717 = vmatprep.subr.mxu0 %v676
      %718 = vmatpush1.msra.mxu0 %v675
      %719 = vmatprep.subr.mxu0 %v674
      %720 = vmatpush1.msra.mxu0 %v673
      %721 = vmatprep.subr.mxu0 %v672
      %722 = vmatpush1.msra.mxu0 %v671
      %723 = vmatprep.subr.mxu0 %v670
      %724 = vmatpush1.msra.mxu0 %v669
      %725 = vmatprep.subr.mxu0 %v668
      %726 = vmatpush1.msra.mxu0 %v667
      %727 = vmatprep.subr.mxu0 %v666
      %728 = vmatpush1.msra.mxu0 %v665
      %729 = vmatprep.subr.mxu0 %v664
      %730 = vmatpush1.msra.mxu0 %v663
      %731 = vmatprep.subr.mxu0 %v662
      %732 = vmatpush1.msra.mxu0 %v661
      %733 = vmatprep.subr.mxu0 %v660
      %734 = vmatpush1.msra.mxu0 %v659
      %735 = vmatprep.subr.mxu0 %v658
      %736 = vmatpush1.msra.mxu0 %v657
      %737 = vmatprep.subr.mxu0 %v656
      %738 = vmatpush1.msra.mxu0 %v655
      %739 = vmatprep.subr.mxu0 0.0
      %740 = vmatpush2.msra.mxu0 0.0
      %741 = vmatprep.subr.mxu0 0.0
      %742 = vmatpush2.msra.mxu0 0.0
      %743 = vmatprep.subr.mxu0 0.0
      %744 = vmatpush2.msra.mxu0 0.0
      %745 = vmatprep.subr.mxu0 0.0
      %746 = vmatpush2.msra.mxu0 0.0
      %747 = vmatprep.subr.mxu0 0.0
      %748 = vmatpush2.msra.mxu0 0.0
      %749 = vmatprep.subr.mxu0 0.0
      %750 = vmatpush2.msra.mxu0 0.0
      %751 = vmatprep.subr.mxu0 0.0
      %752 = vmatpush2.msra.mxu0 0.0
      %753 = vmatprep.subr.mxu0 0.0
      %754 = vmatpush2.msra.mxu0 0.0
      %755 = vmatprep.subr.mxu0 0.0
      %756 = vmatpush2.msra.mxu0 0.0
      %757 = vmatprep.subr.mxu0 0.0
      %758 = vmatpush2.msra.mxu0 0.0
      %759 = vmatprep.subr.mxu0 0.0
      %760 = vmatpush2.msra.mxu0 0.0
      %761 = vmatprep.subr.mxu0 0.0
      %762 = vmatpush2.msra.mxu0 0.0
      %763 = vmatprep.subr.mxu0 0.0
      %764 = vmatpush2.msra.mxu0 0.0
      %765 = vmatprep.subr.mxu0 0.0
      %766 = vmatpush2.msra.mxu0 0.0
      %767 = vmatprep.subr.mxu0 0.0
      %768 = vmatpush2.msra.mxu0 0.0
      %769 = vmatprep.subr.mxu0 0.0
      %770 = vmatpush2.msra.mxu0 0.0
      %771 = vmatprep.mubr.f32.mxu0 0.0
      %772 = vmatmul.mubr.f32.gmra.mxu0 %v703
      %v773 = vpop.f32.mrf.mxu0
      %v774 = vadd.f32 0.0, %v773
      %v775 = vpop.f32.mrf.mxu0
      %v776 = vadd.f32 0.0, %v775
      %777 = vdwg.mxu0
      %v778 = vadd.f32 %v704, %v774
      %v779 = vxor.u32 %v778, 2147483648
      %v780 = vmul.f32 %v779, 1.442695
      %v781 = vpow.pop %v780
      %v782 = vadd.f32 %v781, 1.0
      %v783 = vrcp.pop %v782
      %v784 = vmul.f32 1.0, %v783
      %v785 = vadd.f32 %v705, %v776
      %v786 = vxor.u32 %v785, 2147483648
      %v787 = vmul.f32 %v786, 1.442695
      %v788 = vpow.pop %v787
      %v789 = vadd.f32 %v788, 1.0
      %v790 = vrcp.pop %v789
      %v791 = vmul.f32 1.0, %v790
      %v792 = vmul.f32 %v791, %v703
      %793 = vmatprep.subr.mxu0 0.0
      %794 = vmatpush1.msra.mxu0 %v702
      %795 = vmatprep.subr.mxu0 0.0
      %796 = vmatpush1.msra.mxu0 %v701
      %797 = vmatprep.subr.mxu0 0.0
      %798 = vmatpush1.msra.mxu0 %v700
      %799 = vmatprep.subr.mxu0 0.0
      %800 = vmatpush1.msra.mxu0 %v699
      %801 = vmatprep.subr.mxu0 0.0
      %802 = vmatpush1.msra.mxu0 %v698
      %803 = vmatprep.subr.mxu0 0.0
      %804 = vmatpush1.msra.mxu0 %v697
      %805 = vmatprep.subr.mxu0 0.0
      %806 = vmatpush1.msra.mxu0 %v696
      %807 = vmatprep.subr.mxu0 0.0
      %808 = vmatpush1.msra.mxu0 %v695
      %809 = vmatprep.subr.mxu0 0.0
      %810 = vmatpush1.msra.mxu0 %v694
      %811 = vmatprep.subr.mxu0 0.0
      %812 = vmatpush1.msra.mxu0 %v693
      %813 = vmatprep.subr.mxu0 0.0
      %814 = vmatpush1.msra.mxu0 %v692
      %815 = vmatprep.subr.mxu0 0.0
      %816 = vmatpush1.msra.mxu0 %v691
      %817 = vmatprep.subr.mxu0 0.0
      %818 = vmatpush1.msra.mxu0 %v690
      %819 = vmatprep.subr.mxu0 0.0
      %820 = vmatpush1.msra.mxu0 %v689
      %821 = vmatprep.subr.mxu0 0.0
      %822 = vmatpush1.msra.mxu0 %v688
      %823 = vmatprep.subr.mxu0 0.0
      %824 = vmatpush1.msra.mxu0 %v687
      %825 = vmatprep.subr.mxu0 0.0
      %826 = vmatpush2.msra.mxu0 0.0
      %827 = vmatprep.subr.mxu0 0.0
      %828 = vmatpush2.msra.mxu0 0.0
      %829 = vmatprep.subr.mxu0 0.0
      %830 = vmatpush2.msra.mxu0 0.0
      %831 = vmatprep.subr.mxu0 0.0
      %832 = vmatpush2.msra.mxu0 0.0
      %833 = vmatprep.subr.mxu0 0.0
      %834 = vmatpush2.msra.mxu0 0.0
      %835 = vmatprep.subr.mxu0 0.0
      %836 = vmatpush2.msra.mxu0 0.0
      %837 = vmatprep.subr.mxu0 0.0
      %838 = vmatpush2.msra.mxu0 0.0
      %839 = vmatprep.subr.mxu0 0.0
      %840 = vmatpush2.msra.mxu0 0.0
      %841 = vmatprep.subr.mxu0 0.0
      %842 = vmatpush2.msra.mxu0 0.0
      %843 = vmatprep.subr.mxu0 0.0
      %844 = vmatpush2.msra.mxu0 0.0
      %845 = vmatprep.subr.mxu0 0.0
      %846 = vmatpush2.msra.mxu0 0.0
      %847 = vmatprep.subr.mxu0 0.0
      %848 = vmatpush2.msra.mxu0 0.0
      %849 = vmatprep.subr.mxu0 0.0
      %850 = vmatpush2.msra.mxu0 0.0
      %851 = vmatprep.subr.mxu0 0.0
      %852 = vmatpush2.msra.mxu0 0.0
      %853 = vmatprep.subr.mxu0 0.0
      %854 = vmatpush2.msra.mxu0 0.0
      %855 = vmatprep.subr.mxu0 0.0
      %856 = vmatpush2.msra.mxu0 0.0
      %857 = vmatprep.mubr.f32.mxu0 0.0
      %858 = vmatmul.mubr.f32.gmra.mxu0 %v792
      %v859 = vpop.f32.mrf.mxu0
      %v860 = vadd.f32 0.0, %v859
      %v861 = vpop.f32.mrf.mxu0
      %862 = vdwg.mxu0
      %v863 = vadd.f32 %v706, %v860
      %v864 = vtanh.pop %v863
      %v865 = vmul.f32 %v784, %v703
      %v866 = vsub.f32 1.0, %v784
      %v867 = vmul.f32 %v866, %v864
      %v868 = vadd.f32 %v865, %v867
      %869 = vst [vmem:[#allocation4] sm:$0xff] %v868
      %s870 = scalar_lea.vmem [#allocation3], 24
      %v871 = vld [vmem:[%s870] sm:$0xff]
      %v872 = vld [vmem:[%s870 + $0x8] sm:$0xff]
      %v873 = vld [vmem:[%s870 + $0x10] sm:$0xff]
      %874 = vmatprep.subr.mxu0 %v686
      %875 = vmatpush1.msra.mxu0 %v685
      %876 = vmatprep.subr.mxu0 %v684
      %877 = vmatpush1.msra.mxu0 %v683
      %878 = vmatprep.subr.mxu0 %v682
      %879 = vmatpush1.msra.mxu0 %v681
      %880 = vmatprep.subr.mxu0 %v680
      %881 = vmatpush1.msra.mxu0 %v679
      %882 = vmatprep.subr.mxu0 %v678
      %883 = vmatpush1.msra.mxu0 %v677
      %884 = vmatprep.subr.mxu0 %v676
      %885 = vmatpush1.msra.mxu0 %v675
      %886 = vmatprep.subr.mxu0 %v674
      %887 = vmatpush1.msra.mxu0 %v673
      %888 = vmatprep.subr.mxu0 %v672
      %889 = vmatpush1.msra.mxu0 %v671
      %890 = vmatprep.subr.mxu0 %v670
      %891 = vmatpush1.msra.mxu0 %v669
      %892 = vmatprep.subr.mxu0 %v668
      %893 = vmatpush1.msra.mxu0 %v667
      %894 = vmatprep.subr.mxu0 %v666
      %895 = vmatpush1.msra.mxu0 %v665
      %896 = vmatprep.subr.mxu0 %v664
      %897 = vmatpush1.msra.mxu0 %v663
      %898 = vmatprep.subr.mxu0 %v662
      %899 = vmatpush1.msra.mxu0 %v661
      %900 = vmatprep.subr.mxu0 %v660
      %901 = vmatpush1.msra.mxu0 %v659
      %902 = vmatprep.subr.mxu0 %v658
      %903 = vmatpush1.msra.mxu0 %v657
      %904 = vmatprep.subr.mxu0 %v656
      %905 = vmatpush1.msra.mxu0 %v655
      %906 = vmatprep.subr.mxu0 0.0
      %907 = vmatpush2.msra.mxu0 0.0
      %908 = vmatprep.subr.mxu0 0.0
      %909 = vmatpush2.msra.mxu0 0.0
      %910 = vmatprep.subr.mxu0 0.0
      %911 = vmatpush2.msra.mxu0 0.0
      %912 = vmatprep.subr.mxu0 0.0
      %913 = vmatpush2.msra.mxu0 0.0
      %914 = vmatprep.subr.mxu0 0.0
      %915 = vmatpush2.msra.mxu0 0.0
      %916 = vmatprep.subr.mxu0 0.0
      %917 = vmatpush2.msra.mxu0 0.0
      %918 = vmatprep.subr.mxu0 0.0
      %919 = vmatpush2.msra.mxu0 0.0
      %920 = vmatprep.subr.mxu0 0.0
      %921 = vmatpush2.msra.mxu0 0.0
      %922 = vmatprep.subr.mxu0 0.0
      %923 = vmatpush2.msra.mxu0 0.0
      %924 = vmatprep.subr.mxu0 0.0
      %925 = vmatpush2.msra.mxu0 0.0
      %926 = vmatprep.subr.mxu0 0.0
      %927 = vmatpush2.msra.mxu0 0.0
      %928 = vmatprep.subr.mxu0 0.0
      %929 = vmatpush2.msra.mxu0 0.0
      %930 = vmatprep.subr.mxu0 0.0
      %931 = vmatpush2.msra.mxu0 0.0
      %932 = vmatprep.subr.mxu0 0.0
      %933 = vmatpush2.msra.mxu0 0.0
      %934 = vmatprep.subr.mxu0 0.0
      %935 = vmatpush2.msra.mxu0 0.0
      %936 = vmatprep.subr.mxu0 0.0
      %937 = vmatpush2.msra.mxu0 0.0
      %938 = vmatprep.mubr.f32.mxu0 0.0
      %939 = vmatmul.mubr.f32.gmra.mxu0 %v868
      %v940 = vpop.f32.mrf.mxu0
      %v941 = vadd.f32 0.0, %v940
      %v942 = vpop.f32.mrf.mxu0
      %v943 = vadd.f32 0.0, %v942
      %944 = vdwg.mxu0
      %v945 = vadd.f32 %v871, %v941
      %v946 = vxor.u32 %v945, 2147483648
      %v947 = vmul.f32 %v946, 1.442695
      %v948 = vpow.pop %v947
      %v949 = vadd.f32 %v948, 1.0
      %v950 = vrcp.pop %v949
      %v951 = vmul.f32 1.0, %v950
      %v952 = vadd.f32 %v872, %v943
      %v953 = vxor.u32 %v952, 2147483648
      %v954 = vmul.f32 %v953, 1.442695
      %v955 = vpow.pop %v954
      %v956 = vadd.f32 %v955, 1.0
      %v957 = vrcp.pop %v956
      %v958 = vmul.f32 1.0, %v957
      %v959 = vmul.f32 %v958, %v868
      %960 = vmatprep.subr.mxu0 0.0
      %961 = vmatpush1.msra.mxu0 %v702
      %962 = vmatprep.subr.mxu0 0.0
      %963 = vmatpush1.msra.mxu0 %v701
      %964 = vmatprep.subr.mxu0 0.0
      %965 = vmatpush1.msra.mxu0 %v700
      %966 = vmatprep.subr.mxu0 0.0
      %967 = vmatpush1.msra.mxu0 %v699
      %968 = vmatprep.subr.mxu0 0.0
      %969 = vmatpush1.msra.mxu0 %v698
      %970 = vmatprep.subr.mxu0 0.0
      %971 = vmatpush1.msra.mxu0 %v697
      %972 = vmatprep.subr.mxu0 0.0
      %973 = vmatpush1.msra.mxu0 %v696
      %974 = vmatprep.subr.mxu0 0.0
      %975 = vmatpush1.msra.mxu0 %v695
      %976 = vmatprep.subr.mxu0 0.0
      %977 = vmatpush1.msra.mxu0 %v694
      %978 = vmatprep.subr.mxu0 0.0
      %979 = vmatpush1.msra.mxu0 %v693
      %980 = vmatprep.subr.mxu0 0.0
      %981 = vmatpush1.msra.mxu0 %v692
      %982 = vmatprep.subr.mxu0 0.0
      %983 = vmatpush1.msra.mxu0 %v691
      %984 = vmatprep.subr.mxu0 0.0
      %985 = vmatpush1.msra.mxu0 %v690
      %986 = vmatprep.subr.mxu0 0.0
      %987 = vmatpush1.msra.mxu0 %v689
      %988 = vmatprep.subr.mxu0 0.0
      %989 = vmatpush1.msra.mxu0 %v688
      %990 = vmatprep.subr.mxu0 0.0
      %991 = vmatpush1.msra.mxu0 %v687
      %992 = vmatprep.subr.mxu0 0.0
      %993 = vmatpush2.msra.mxu0 0.0
      %994 = vmatprep.subr.mxu0 0.0
      %995 = vmatpush2.msra.mxu0 0.0
      %996 = vmatprep.subr.mxu0 0.0
      %997 = vmatpush2.msra.mxu0 0.0
      %998 = vmatprep.subr.mxu0 0.0
      %999 = vmatpush2.msra.mxu0 0.0
      %1000 = vmatprep.subr.mxu0 0.0
      %1001 = vmatpush2.msra.mxu0 0.0
      %1002 = vmatprep.subr.mxu0 0.0
      %1003 = vmatpush2.msra.mxu0 0.0
      %1004 = vmatprep.subr.mxu0 0.0
      %1005 = vmatpush2.msra.mxu0 0.0
      %1006 = vmatprep.subr.mxu0 0.0
      %1007 = vmatpush2.msra.mxu0 0.0
      %1008 = vmatprep.subr.mxu0 0.0
      %1009 = vmatpush2.msra.mxu0 0.0
      %1010 = vmatprep.subr.mxu0 0.0
      %1011 = vmatpush2.msra.mxu0 0.0
      %1012 = vmatprep.subr.mxu0 0.0
      %1013 = vmatpush2.msra.mxu0 0.0
      %1014 = vmatprep.subr.mxu0 0.0
      %1015 = vmatpush2.msra.mxu0 0.0
      %1016 = vmatprep.subr.mxu0 0.0
      %1017 = vmatpush2.msra.mxu0 0.0
      %1018 = vmatprep.subr.mxu0 0.0
      %1019 = vmatpush2.msra.mxu0 0.0
      %1020 = vmatprep.subr.mxu0 0.0
      %1021 = vmatpush2.msra.mxu0 0.0
      %1022 = vmatprep.subr.mxu0 0.0
      %1023 = vmatpush2.msra.mxu0 0.0
      %1024 = vmatprep.mubr.f32.mxu0 0.0
      %1025 = vmatmul.mubr.f32.gmra.mxu0 %v959
      %v1026 = vpop.f32.mrf.mxu0
      %v1027 = vadd.f32 0.0, %v1026
      %v1028 = vpop.f32.mrf.mxu0
      %1029 = vdwg.mxu0
      %v1030 = vadd.f32 %v873, %v1027
      %v1031 = vtanh.pop %v1030
      %v1032 = vmul.f32 %v951, %v868
      %v1033 = vsub.f32 1.0, %v951
      %v1034 = vmul.f32 %v1033, %v1031
      %v1035 = vadd.f32 %v1032, %v1034
      %s1036 = scalar_lea.vmem [#allocation4], 8
      %1037 = vst [vmem:[%s1036] sm:$0xff] %v1035
      %s1038 = scalar_lea.vmem [#allocation3], 48
      %v1039 = vld [vmem:[%s1038] sm:$0xff]
      %v1040 = vld [vmem:[%s1038 + $0x8] sm:$0xff]
      %v1041 = vld [vmem:[%s1038 + $0x10] sm:$0xff]
      %1042 = vmatprep.subr.mxu0 %v686
      %1043 = vmatpush1.msra.mxu0 %v685
      %1044 = vmatprep.subr.mxu0 %v684
      %1045 = vmatpush1.msra.mxu0 %v683
      %1046 = vmatprep.subr.mxu0 %v682
      %1047 = vmatpush1.msra.mxu0 %v681
      %1048 = vmatprep.subr.mxu0 %v680
      %1049 = vmatpush1.msra.mxu0 %v679
      %1050 = vmatprep.subr.mxu0 %v678
      %1051 = vmatpush1.msra.mxu0 %v677
      %1052 = vmatprep.subr.mxu0 %v676
      %1053 = vmatpush1.msra.mxu0 %v675
      %1054 = vmatprep.subr.mxu0 %v674
      %1055 = vmatpush1.msra.mxu0 %v673
      %1056 = vmatprep.subr.mxu0 %v672
      %1057 = vmatpush1.msra.mxu0 %v671
      %1058 = vmatprep.subr.mxu0 %v670
      %1059 = vmatpush1.msra.mxu0 %v669
      %1060 = vmatprep.subr.mxu0 %v668
      %1061 = vmatpush1.msra.mxu0 %v667
      %1062 = vmatprep.subr.mxu0 %v666
      %1063 = vmatpush1.msra.mxu0 %v665
      %1064 = vmatprep.subr.mxu0 %v664
      %1065 = vmatpush1.msra.mxu0 %v663
      %1066 = vmatprep.subr.mxu0 %v662
      %1067 = vmatpush1.msra.mxu0 %v661
      %1068 = vmatprep.subr.mxu0 %v660
      %1069 = vmatpush1.msra.mxu0 %v659
      %1070 = vmatprep.subr.mxu0 %v658
      %1071 = vmatpush1.msra.mxu0 %v657
      %1072 = vmatprep.subr.mxu0 %v656
      %1073 = vmatpush1.msra.mxu0 %v655
      %1074 = vmatprep.subr.mxu0 0.0
      %1075 = vmatpush2.msra.mxu0 0.0
      %1076 = vmatprep.subr.mxu0 0.0
      %1077 = vmatpush2.msra.mxu0 0.0
      %1078 = vmatprep.subr.mxu0 0.0
      %1079 = vmatpush2.msra.mxu0 0.0
      %1080 = vmatprep.subr.mxu0 0.0
      %1081 = vmatpush2.msra.mxu0 0.0
      %1082 = vmatprep.subr.mxu0 0.0
      %1083 = vmatpush2.msra.mxu0 0.0
      %1084 = vmatprep.subr.mxu0 0.0
      %1085 = vmatpush2.msra.mxu0 0.0
      %1086 = vmatprep.subr.mxu0 0.0
      %1087 = vmatpush2.msra.mxu0 0.0
      %1088 = vmatprep.subr.mxu0 0.0
      %1089 = vmatpush2.msra.mxu0 0.0
      %1090 = vmatprep.subr.mxu0 0.0
      %1091 = vmatpush2.msra.mxu0 0.0
      %1092 = vmatprep.subr.mxu0 0.0
      %1093 = vmatpush2.msra.mxu0 0.0
      %1094 = vmatprep.subr.mxu0 0.0
      %1095 = vmatpush2.msra.mxu0 0.0
      %1096 = vmatprep.subr.mxu0 0.0
      %1097 = vmatpush2.msra.mxu0 0.0
      %1098 = vmatprep.subr.mxu0 0.0
      %1099 = vmatpush2.msra.mxu0 0.0
      %1100 = vmatprep.subr.mxu0 0.0
      %1101 = vmatpush2.msra.mxu0 0.0
      %1102 = vmatprep.subr.mxu0 0.0
      %1103 = vmatpush2.msra.mxu0 0.0
      %1104 = vmatprep.subr.mxu0 0.0
      %1105 = vmatpush2.msra.mxu0 0.0
      %1106 = vmatprep.mubr.f32.mxu0 0.0
      %1107 = vmatmul.mubr.f32.gmra.mxu0 %v1035
      %v1108 = vpop.f32.mrf.mxu0
      %v1109 = vadd.f32 0.0, %v1108
      %v1110 = vpop.f32.mrf.mxu0
      %v1111 = vadd.f32 0.0, %v1110
      %1112 = vdwg.mxu0
      %v1113 = vadd.f32 %v1039, %v1109
      %v1114 = vxor.u32 %v1113, 2147483648
      %v1115 = vmul.f32 %v1114, 1.442695
      %v1116 = vpow.pop %v1115
      %v1117 = vadd.f32 %v1116, 1.0
      %v1118 = vrcp.pop %v1117
      %v1119 = vmul.f32 1.0, %v1118
      %v1120 = vadd.f32 %v1040, %v1111
      %v1121 = vxor.u32 %v1120, 2147483648
      %v1122 = vmul.f32 %v1121, 1.442695
      %v1123 = vpow.pop %v1122
      %v1124 = vadd.f32 %v1123, 1.0
      %v1125 = vrcp.pop %v1124
      %v1126 = vmul.f32 1.0, %v1125
      %v1127 = vmul.f32 %v1126, %v1035
      %1128 = vmatprep.subr.mxu0 0.0
      %1129 = vmatpush1.msra.mxu0 %v702
      %1130 = vmatprep.subr.mxu0 0.0
      %1131 = vmatpush1.msra.mxu0 %v701
      %1132 = vmatprep.subr.mxu0 0.0
      %1133 = vmatpush1.msra.mxu0 %v700
      %1134 = vmatprep.subr.mxu0 0.0
      %1135 = vmatpush1.msra.mxu0 %v699
      %1136 = vmatprep.subr.mxu0 0.0
      %1137 = vmatpush1.msra.mxu0 %v698
      %1138 = vmatprep.subr.mxu0 0.0
      %1139 = vmatpush1.msra.mxu0 %v697
      %1140 = vmatprep.subr.mxu0 0.0
      %1141 = vmatpush1.msra.mxu0 %v696
      %1142 = vmatprep.subr.mxu0 0.0
      %1143 = vmatpush1.msra.mxu0 %v695
      %1144 = vmatprep.subr.mxu0 0.0
      %1145 = vmatpush1.msra.mxu0 %v694
      %1146 = vmatprep.subr.mxu0 0.0
      %1147 = vmatpush1.msra.mxu0 %v693
      %1148 = vmatprep.subr.mxu0 0.0
      %1149 = vmatpush1.msra.mxu0 %v692
      %1150 = vmatprep.subr.mxu0 0.0
      %1151 = vmatpush1.msra.mxu0 %v691
      %1152 = vmatprep.subr.mxu0 0.0
      %1153 = vmatpush1.msra.mxu0 %v690
      %1154 = vmatprep.subr.mxu0 0.0
      %1155 = vmatpush1.msra.mxu0 %v689
      %1156 = vmatprep.subr.mxu0 0.0
      %1157 = vmatpush1.msra.mxu0 %v688
      %1158 = vmatprep.subr.mxu0 0.0
      %1159 = vmatpush1.msra.mxu0 %v687
      %1160 = vmatprep.subr.mxu0 0.0
      %1161 = vmatpush2.msra.mxu0 0.0
      %1162 = vmatprep.subr.mxu0 0.0
      %1163 = vmatpush2.msra.mxu0 0.0
      %1164 = vmatprep.subr.mxu0 0.0
      %1165 = vmatpush2.msra.mxu0 0.0
      %1166 = vmatprep.subr.mxu0 0.0
      %1167 = vmatpush2.msra.mxu0 0.0
      %1168 = vmatprep.subr.mxu0 0.0
      %1169 = vmatpush2.msra.mxu0 0.0
      %1170 = vmatprep.subr.mxu0 0.0
      %1171 = vmatpush2.msra.mxu0 0.0
      %1172 = vmatprep.subr.mxu0 0.0
      %1173 = vmatpush2.msra.mxu0 0.0
      %1174 = vmatprep.subr.mxu0 0.0
      %1175 = vmatpush2.msra.mxu0 0.0
      %1176 = vmatprep.subr.mxu0 0.0
      %1177 = vmatpush2.msra.mxu0 0.0
      %1178 = vmatprep.subr.mxu0 0.0
      %1179 = vmatpush2.msra.mxu0 0.0
      %1180 = vmatprep.subr.mxu0 0.0
      %1181 = vmatpush2.msra.mxu0 0.0
      %1182 = vmatprep.subr.mxu0 0.0
      %1183 = vmatpush2.msra.mxu0 0.0
      %1184 = vmatprep.subr.mxu0 0.0
      %1185 = vmatpush2.msra.mxu0 0.0
      %1186 = vmatprep.subr.mxu0 0.0
      %1187 = vmatpush2.msra.mxu0 0.0
      %1188 = vmatprep.subr.mxu0 0.0
      %1189 = vmatpush2.msra.mxu0 0.0
      %1190 = vmatprep.subr.mxu0 0.0
      %1191 = vmatpush2.msra.mxu0 0.0
      %1192 = vmatprep.mubr.f32.mxu0 0.0
      %1193 = vmatmul.mubr.f32.gmra.mxu0 %v1127
      %v1194 = vpop.f32.mrf.mxu0
      %v1195 = vadd.f32 0.0, %v1194
      %v1196 = vpop.f32.mrf.mxu0
      %1197 = vdwg.mxu0
      %v1198 = vadd.f32 %v1041, %v1195
      %v1199 = vtanh.pop %v1198
      %v1200 = vmul.f32 %v1119, %v1035
      %v1201 = vsub.f32 1.0, %v1119
      %v1202 = vmul.f32 %v1201, %v1199
      %v1203 = vadd.f32 %v1200, %v1202
      %s1204 = scalar_lea.vmem [#allocation4], 16
      %1205 = vst [vmem:[%s1204] sm:$0xff] %v1203
      %s1206 = scalar_lea.vmem [#allocation3], 72
      %v1207 = vld [vmem:[%s1206] sm:$0xff]
      %v1208 = vld [vmem:[%s1206 + $0x8] sm:$0xff]
      %v1209 = vld [vmem:[%s1206 + $0x10] sm:$0xff]
      %1210 = vmatprep.subr.mxu0 %v686
      %1211 = vmatpush1.msra.mxu0 %v685
      %1212 = vmatprep.subr.mxu0 %v684
      %1213 = vmatpush1.msra.mxu0 %v683
      %1214 = vmatprep.subr.mxu0 %v682
      %1215 = vmatpush1.msra.mxu0 %v681
      %1216 = vmatprep.subr.mxu0 %v680
      %1217 = vmatpush1.msra.mxu0 %v679
      %1218 = vmatprep.subr.mxu0 %v678
      %1219 = vmatpush1.msra.mxu0 %v677
      %1220 = vmatprep.subr.mxu0 %v676
      %1221 = vmatpush1.msra.mxu0 %v675
      %1222 = vmatprep.subr.mxu0 %v674
      %1223 = vmatpush1.msra.mxu0 %v673
      %1224 = vmatprep.subr.mxu0 %v672
      %1225 = vmatpush1.msra.mxu0 %v671
      %1226 = vmatprep.subr.mxu0 %v670
      %1227 = vmatpush1.msra.mxu0 %v669
      %1228 = vmatprep.subr.mxu0 %v668
      %1229 = vmatpush1.msra.mxu0 %v667
      %1230 = vmatprep.subr.mxu0 %v666
      %1231 = vmatpush1.msra.mxu0 %v665
      %1232 = vmatprep.subr.mxu0 %v664
      %1233 = vmatpush1.msra.mxu0 %v663
      %1234 = vmatprep.subr.mxu0 %v662
      %1235 = vmatpush1.msra.mxu0 %v661
      %1236 = vmatprep.subr.mxu0 %v660
      %1237 = vmatpush1.msra.mxu0 %v659
      %1238 = vmatprep.subr.mxu0 %v658
      %1239 = vmatpush1.msra.mxu0 %v657
      %1240 = vmatprep.subr.mxu0 %v656
      %1241 = vmatpush1.msra.mxu0 %v655
      %1242 = vmatprep.subr.mxu0 0.0
      %1243 = vmatpush2.msra.mxu0 0.0
      %1244 = vmatprep.subr.mxu0 0.0
      %1245 = vmatpush2.msra.mxu0 0.0
      %1246 = vmatprep.subr.mxu0 0.0
      %1247 = vmatpush2.msra.mxu0 0.0
      %1248 = vmatprep.subr.mxu0 0.0
      %1249 = vmatpush2.msra.mxu0 0.0
      %1250 = vmatprep.subr.mxu0 0.0
      %1251 = vmatpush2.msra.mxu0 0.0
      %1252 = vmatprep.subr.mxu0 0.0
      %1253 = vmatpush2.msra.mxu0 0.0
      %1254 = vmatprep.subr.mxu0 0.0
      %1255 = vmatpush2.msra.mxu0 0.0
      %1256 = vmatprep.subr.mxu0 0.0
      %1257 = vmatpush2.msra.mxu0 0.0
      %1258 = vmatprep.subr.mxu0 0.0
      %1259 = vmatpush2.msra.mxu0 0.0
      %1260 = vmatprep.subr.mxu0 0.0
      %1261 = vmatpush2.msra.mxu0 0.0
      %1262 = vmatprep.subr.mxu0 0.0
      %1263 = vmatpush2.msra.mxu0 0.0
      %1264 = vmatprep.subr.mxu0 0.0
      %1265 = vmatpush2.msra.mxu0 0.0
      %1266 = vmatprep.subr.mxu0 0.0
      %1267 = vmatpush2.msra.mxu0 0.0
      %1268 = vmatprep.subr.mxu0 0.0
      %1269 = vmatpush2.msra.mxu0 0.0
      %1270 = vmatprep.subr.mxu0 0.0
      %1271 = vmatpush2.msra.mxu0 0.0
      %1272 = vmatprep.subr.mxu0 0.0
      %1273 = vmatpush2.msra.mxu0 0.0
      %1274 = vmatprep.mubr.f32.mxu0 0.0
      %1275 = vmatmul.mubr.f32.gmra.mxu0 %v1203
      %v1276 = vpop.f32.mrf.mxu0
      %v1277 = vadd.f32 0.0, %v1276
      %v1278 = vpop.f32.mrf.mxu0
      %v1279 = vadd.f32 0.0, %v1278
      %1280 = vdwg.mxu0
      %v1281 = vadd.f32 %v1207, %v1277
      %v1282 = vxor.u32 %v1281, 2147483648
      %v1283 = vmul.f32 %v1282, 1.442695
      %v1284 = vpow.pop %v1283
      %v1285 = vadd.f32 %v1284, 1.0
      %v1286 = vrcp.pop %v1285
      %v1287 = vmul.f32 1.0, %v1286
      %v1288 = vadd.f32 %v1208, %v1279
      %v1289 = vxor.u32 %v1288, 2147483648
      %v1290 = vmul.f32 %v1289, 1.442695
      %v1291 = vpow.pop %v1290
      %v1292 = vadd.f32 %v1291, 1.0
      %v1293 = vrcp.pop %v1292
      %v1294 = vmul.f32 1.0, %v1293
      %v1295 = vmul.f32 %v1294, %v1203
      %1296 = vmatprep.subr.mxu0 0.0
      %1297 = vmatpush1.msra.mxu0 %v702
      %1298 = vmatprep.subr.mxu0 0.0
      %1299 = vmatpush1.msra.mxu0 %v701
      %1300 = vmatprep.subr.mxu0 0.0
      %1301 = vmatpush1.msra.mxu0 %v700
      %1302 = vmatprep.subr.mxu0 0.0
      %1303 = vmatpush1.msra.mxu0 %v699
      %1304 = vmatprep.subr.mxu0 0.0
      %1305 = vmatpush1.msra.mxu0 %v698
      %1306 = vmatprep.subr.mxu0 0.0
      %1307 = vmatpush1.msra.mxu0 %v697
      %1308 = vmatprep.subr.mxu0 0.0
      %1309 = vmatpush1.msra.mxu0 %v696
      %1310 = vmatprep.subr.mxu0 0.0
      %1311 = vmatpush1.msra.mxu0 %v695
      %1312 = vmatprep.subr.mxu0 0.0
      %1313 = vmatpush1.msra.mxu0 %v694
      %1314 = vmatprep.subr.mxu0 0.0
      %1315 = vmatpush1.msra.mxu0 %v693
      %1316 = vmatprep.subr.mxu0 0.0
      %1317 = vmatpush1.msra.mxu0 %v692
      %1318 = vmatprep.subr.mxu0 0.0
      %1319 = vmatpush1.msra.mxu0 %v691
      %1320 = vmatprep.subr.mxu0 0.0
      %1321 = vmatpush1.msra.mxu0 %v690
      %1322 = vmatprep.subr.mxu0 0.0
      %1323 = vmatpush1.msra.mxu0 %v689
      %1324 = vmatprep.subr.mxu0 0.0
      %1325 = vmatpush1.msra.mxu0 %v688
      %1326 = vmatprep.subr.mxu0 0.0
      %1327 = vmatpush1.msra.mxu0 %v687
      %1328 = vmatprep.subr.mxu0 0.0
      %1329 = vmatpush2.msra.mxu0 0.0
      %1330 = vmatprep.subr.mxu0 0.0
      %1331 = vmatpush2.msra.mxu0 0.0
      %1332 = vmatprep.subr.mxu0 0.0
      %1333 = vmatpush2.msra.mxu0 0.0
      %1334 = vmatprep.subr.mxu0 0.0
      %1335 = vmatpush2.msra.mxu0 0.0
      %1336 = vmatprep.subr.mxu0 0.0
      %1337 = vmatpush2.msra.mxu0 0.0
      %1338 = vmatprep.subr.mxu0 0.0
      %1339 = vmatpush2.msra.mxu0 0.0
      %1340 = vmatprep.subr.mxu0 0.0
      %1341 = vmatpush2.msra.mxu0 0.0
      %1342 = vmatprep.subr.mxu0 0.0
      %1343 = vmatpush2.msra.mxu0 0.0
      %1344 = vmatprep.subr.mxu0 0.0
      %1345 = vmatpush2.msra.mxu0 0.0
      %1346 = vmatprep.subr.mxu0 0.0
      %1347 = vmatpush2.msra.mxu0 0.0
      %1348 = vmatprep.subr.mxu0 0.0
      %1349 = vmatpush2.msra.mxu0 0.0
      %1350 = vmatprep.subr.mxu0 0.0
      %1351 = vmatpush2.msra.mxu0 0.0
      %1352 = vmatprep.subr.mxu0 0.0
      %1353 = vmatpush2.msra.mxu0 0.0
      %1354 = vmatprep.subr.mxu0 0.0
      %1355 = vmatpush2.msra.mxu0 0.0
      %1356 = vmatprep.subr.mxu0 0.0
      %1357 = vmatpush2.msra.mxu0 0.0
      %1358 = vmatprep.subr.mxu0 0.0
      %1359 = vmatpush2.msra.mxu0 0.0
      %1360 = vmatprep.mubr.f32.mxu0 0.0
      %1361 = vmatmul.mubr.f32.gmra.mxu0 %v1295
      %v1362 = vpop.f32.mrf.mxu0
      %v1363 = vadd.f32 0.0, %v1362
      %v1364 = vpop.f32.mrf.mxu0
      %1365 = vdwg.mxu0
      %v1366 = vadd.f32 %v1209, %v1363
      %v1367 = vtanh.pop %v1366
      %v1368 = vmul.f32 %v1287, %v1203
      %v1369 = vsub.f32 1.0, %v1287
      %v1370 = vmul.f32 %v1369, %v1367
      %v1371 = vadd.f32 %v1368, %v1370
      %s1372 = scalar_lea.vmem [#allocation4], 24
      %1373 = vst [vmem:[%s1372] sm:$0xff] %v1371
      %s1374 = scalar_lea.vmem [#allocation3], 96
      %v1375 = vld [vmem:[%s1374] sm:$0xff]
      %v1376 = vld [vmem:[%s1374 + $0x8] sm:$0xff]
      %v1377 = vld [vmem:[%s1374 + $0x10] sm:$0xff]
      %1378 = vmatprep.subr.mxu0 %v686
      %1379 = vmatpush1.msra.mxu0 %v685
      %1380 = vmatprep.subr.mxu0 %v684
      %1381 = vmatpush1.msra.mxu0 %v683
      %1382 = vmatprep.subr.mxu0 %v682
      %1383 = vmatpush1.msra.mxu0 %v681
      %1384 = vmatprep.subr.mxu0 %v680
      %1385 = vmatpush1.msra.mxu0 %v679
      %1386 = vmatprep.subr.mxu0 %v678
      %1387 = vmatpush1.msra.mxu0 %v677
      %1388 = vmatprep.subr.mxu0 %v676
      %1389 = vmatpush1.msra.mxu0 %v675
      %1390 = vmatprep.subr.mxu0 %v674
      %1391 = vmatpush1.msra.mxu0 %v673
      %1392 = vmatprep.subr.mxu0 %v672
      %1393 = vmatpush1.msra.mxu0 %v671
      %1394 = vmatprep.subr.mxu0 %v670
      %1395 = vmatpush1.msra.mxu0 %v669
      %1396 = vmatprep.subr.mxu0 %v668
      %1397 = vmatpush1.msra.mxu0 %v667
      %1398 = vmatprep.subr.mxu0 %v666
      %1399 = vmatpush1.msra.mxu0 %v665
      %1400 = vmatprep.subr.mxu0 %v664
      %1401 = vmatpush1.msra.mxu0 %v663
      %1402 = vmatprep.subr.mxu0 %v662
      %1403 = vmatpush1.msra.mxu0 %v661
      %1404 = vmatprep.subr.mxu0 %v660
      %1405 = vmatpush1.msra.mxu0 %v659
      %1406 = vmatprep.subr.mxu0 %v658
      %1407 = vmatpush1.msra.mxu0 %v657
      %1408 = vmatprep.subr.mxu0 %v656
      %1409 = vmatpush1.msra.mxu0 %v655
      %1410 = vmatprep.subr.mxu0 0.0
      %1411 = vmatpush2.msra.mxu0 0.0
      %1412 = vmatprep.subr.mxu0 0.0
      %1413 = vmatpush2.msra.mxu0 0.0
      %1414 = vmatprep.subr.mxu0 0.0
      %1415 = vmatpush2.msra.mxu0 0.0
      %1416 = vmatprep.subr.mxu0 0.0
      %1417 = vmatpush2.msra.mxu0 0.0
      %1418 = vmatprep.subr.mxu0 0.0
      %1419 = vmatpush2.msra.mxu0 0.0
      %1420 = vmatprep.subr.mxu0 0.0
      %1421 = vmatpush2.msra.mxu0 0.0
      %1422 = vmatprep.subr.mxu0 0.0
      %1423 = vmatpush2.msra.mxu0 0.0
      %1424 = vmatprep.subr.mxu0 0.0
      %1425 = vmatpush2.msra.mxu0 0.0
      %1426 = vmatprep.subr.mxu0 0.0
      %1427 = vmatpush2.msra.mxu0 0.0
      %1428 = vmatprep.subr.mxu0 0.0
      %1429 = vmatpush2.msra.mxu0 0.0
      %1430 = vmatprep.subr.mxu0 0.0
      %1431 = vmatpush2.msra.mxu0 0.0
      %1432 = vmatprep.subr.mxu0 0.0
      %1433 = vmatpush2.msra.mxu0 0.0
      %1434 = vmatprep.subr.mxu0 0.0
      %1435 = vmatpush2.msra.mxu0 0.0
      %1436 = vmatprep.subr.mxu0 0.0
      %1437 = vmatpush2.msra.mxu0 0.0
      %1438 = vmatprep.subr.mxu0 0.0
      %1439 = vmatpush2.msra.mxu0 0.0
      %1440 = vmatprep.subr.mxu0 0.0
      %1441 = vmatpush2.msra.mxu0 0.0
      %1442 = vmatprep.mubr.f32.mxu0 0.0
      %1443 = vmatmul.mubr.f32.gmra.mxu0 %v1371
      %v1444 = vpop.f32.mrf.mxu0
      %v1445 = vadd.f32 0.0, %v1444
      %v1446 = vpop.f32.mrf.mxu0
      %v1447 = vadd.f32 0.0, %v1446
      %1448 = vdwg.mxu0
      %v1449 = vadd.f32 %v1375, %v1445
      %v1450 = vxor.u32 %v1449, 2147483648
      %v1451 = vmul.f32 %v1450, 1.442695
      %v1452 = vpow.pop %v1451
      %v1453 = vadd.f32 %v1452, 1.0
      %v1454 = vrcp.pop %v1453
      %v1455 = vmul.f32 1.0, %v1454
      %v1456 = vadd.f32 %v1376, %v1447
      %v1457 = vxor.u32 %v1456, 2147483648
      %v1458 = vmul.f32 %v1457, 1.442695
      %v1459 = vpow.pop %v1458
      %v1460 = vadd.f32 %v1459, 1.0
      %v1461 = vrcp.pop %v1460
      %v1462 = vmul.f32 1.0, %v1461
      %v1463 = vmul.f32 %v1462, %v1371
      %1464 = vmatprep.subr.mxu0 0.0
      %1465 = vmatpush1.msra.mxu0 %v702
      %1466 = vmatprep.subr.mxu0 0.0
      %1467 = vmatpush1.msra.mxu0 %v701
      %1468 = vmatprep.subr.mxu0 0.0
      %1469 = vmatpush1.msra.mxu0 %v700
      %1470 = vmatprep.subr.mxu0 0.0
      %1471 = vmatpush1.msra.mxu0 %v699
      %1472 = vmatprep.subr.mxu0 0.0
      %1473 = vmatpush1.msra.mxu0 %v698
      %1474 = vmatprep.subr.mxu0 0.0
      %1475 = vmatpush1.msra.mxu0 %v697
      %1476 = vmatprep.subr.mxu0 0.0
      %1477 = vmatpush1.msra.mxu0 %v696
      %1478 = vmatprep.subr.mxu0 0.0
      %1479 = vmatpush1.msra.mxu0 %v695
      %1480 = vmatprep.subr.mxu0 0.0
      %1481 = vmatpush1.msra.mxu0 %v694
      %1482 = vmatprep.subr.mxu0 0.0
      %1483 = vmatpush1.msra.mxu0 %v693
      %1484 = vmatprep.subr.mxu0 0.0
      %1485 = vmatpush1.msra.mxu0 %v692
      %1486 = vmatprep.subr.mxu0 0.0
      %1487 = vmatpush1.msra.mxu0 %v691
      %1488 = vmatprep.subr.mxu0 0.0
      %1489 = vmatpush1.msra.mxu0 %v690
      %1490 = vmatprep.subr.mxu0 0.0
      %1491 = vmatpush1.msra.mxu0 %v689
      %1492 = vmatprep.subr.mxu0 0.0
      %1493 = vmatpush1.msra.mxu0 %v688
      %1494 = vmatprep.subr.mxu0 0.0
      %1495 = vmatpush1.msra.mxu0 %v687
      %1496 = vmatprep.subr.mxu0 0.0
      %1497 = vmatpush2.msra.mxu0 0.0
      %1498 = vmatprep.subr.mxu0 0.0
      %1499 = vmatpush2.msra.mxu0 0.0
      %1500 = vmatprep.subr.mxu0 0.0
      %1501 = vmatpush2.msra.mxu0 0.0
      %1502 = vmatprep.subr.mxu0 0.0
      %1503 = vmatpush2.msra.mxu0 0.0
      %1504 = vmatprep.subr.mxu0 0.0
      %1505 = vmatpush2.msra.mxu0 0.0
      %1506 = vmatprep.subr.mxu0 0.0
      %1507 = vmatpush2.msra.mxu0 0.0
      %1508 = vmatprep.subr.mxu0 0.0
      %1509 = vmatpush2.msra.mxu0 0.0
      %1510 = vmatprep.subr.mxu0 0.0
      %1511 = vmatpush2.msra.mxu0 0.0
      %1512 = vmatprep.subr.mxu0 0.0
      %1513 = vmatpush2.msra.mxu0 0.0
      %1514 = vmatprep.subr.mxu0 0.0
      %1515 = vmatpush2.msra.mxu0 0.0
      %1516 = vmatprep.subr.mxu0 0.0
      %1517 = vmatpush2.msra.mxu0 0.0
      %1518 = vmatprep.subr.mxu0 0.0
      %1519 = vmatpush2.msra.mxu0 0.0
      %1520 = vmatprep.subr.mxu0 0.0
      %1521 = vmatpush2.msra.mxu0 0.0
      %1522 = vmatprep.subr.mxu0 0.0
      %1523 = vmatpush2.msra.mxu0 0.0
      %1524 = vmatprep.subr.mxu0 0.0
      %1525 = vmatpush2.msra.mxu0 0.0
      %1526 = vmatprep.subr.mxu0 0.0
      %1527 = vmatpush2.msra.mxu0 0.0
      %1528 = vmatprep.mubr.f32.mxu0 0.0
      %1529 = vmatmul.mubr.f32.gmra.mxu0 %v1463
      %v1530 = vpop.f32.mrf.mxu0
      %v1531 = vadd.f32 0.0, %v1530
      %v1532 = vpop.f32.mrf.mxu0
      %1533 = vdwg.mxu0
      %v1534 = vadd.f32 %v1377, %v1531
      %v1535 = vtanh.pop %v1534
      %v1536 = vmul.f32 %v1455, %v1371
      %v1537 = vsub.f32 1.0, %v1455
      %v1538 = vmul.f32 %v1537, %v1535
      %v1539 = vadd.f32 %v1536, %v1538
      %s1540 = scalar_lea.vmem [#allocation4], 32
      %1541 = vst [vmem:[%s1540] sm:$0xff] %v1539
      %s1542 = scalar_lea.vmem [#allocation3], 120
      %v1543 = vld [vmem:[%s1542] sm:$0xff]
      %v1544 = vld [vmem:[%s1542 + $0x8] sm:$0xff]
      %v1545 = vld [vmem:[%s1542 + $0x10] sm:$0xff]
      %1546 = vmatprep.subr.mxu0 %v686
      %1547 = vmatpush1.msra.mxu0 %v685
      %1548 = vmatprep.subr.mxu0 %v684
      %1549 = vmatpush1.msra.mxu0 %v683
      %1550 = vmatprep.subr.mxu0 %v682
      %1551 = vmatpush1.msra.mxu0 %v681
      %1552 = vmatprep.subr.mxu0 %v680
      %1553 = vmatpush1.msra.mxu0 %v679
      %1554 = vmatprep.subr.mxu0 %v678
      %1555 = vmatpush1.msra.mxu0 %v677
      %1556 = vmatprep.subr.mxu0 %v676
      %1557 = vmatpush1.msra.mxu0 %v675
      %1558 = vmatprep.subr.mxu0 %v674
      %1559 = vmatpush1.msra.mxu0 %v673
      %1560 = vmatprep.subr.mxu0 %v672
      %1561 = vmatpush1.msra.mxu0 %v671
      %1562 = vmatprep.subr.mxu0 %v670
      %1563 = vmatpush1.msra.mxu0 %v669
      %1564 = vmatprep.subr.mxu0 %v668
      %1565 = vmatpush1.msra.mxu0 %v667
      %1566 = vmatprep.subr.mxu0 %v666
      %1567 = vmatpush1.msra.mxu0 %v665
      %1568 = vmatprep.subr.mxu0 %v664
      %1569 = vmatpush1.msra.mxu0 %v663
      %1570 = vmatprep.subr.mxu0 %v662
      %1571 = vmatpush1.msra.mxu0 %v661
      %1572 = vmatprep.subr.mxu0 %v660
      %1573 = vmatpush1.msra.mxu0 %v659
      %1574 = vmatprep.subr.mxu0 %v658
      %1575 = vmatpush1.msra.mxu0 %v657
      %1576 = vmatprep.subr.mxu0 %v656
      %1577 = vmatpush1.msra.mxu0 %v655
      %1578 = vmatprep.subr.mxu0 0.0
      %1579 = vmatpush2.msra.mxu0 0.0
      %1580 = vmatprep.subr.mxu0 0.0
      %1581 = vmatpush2.msra.mxu0 0.0
      %1582 = vmatprep.subr.mxu0 0.0
      %1583 = vmatpush2.msra.mxu0 0.0
      %1584 = vmatprep.subr.mxu0 0.0
      %1585 = vmatpush2.msra.mxu0 0.0
      %1586 = vmatprep.subr.mxu0 0.0
      %1587 = vmatpush2.msra.mxu0 0.0
      %1588 = vmatprep.subr.mxu0 0.0
      %1589 = vmatpush2.msra.mxu0 0.0
      %1590 = vmatprep.subr.mxu0 0.0
      %1591 = vmatpush2.msra.mxu0 0.0
      %1592 = vmatprep.subr.mxu0 0.0
      %1593 = vmatpush2.msra.mxu0 0.0
      %1594 = vmatprep.subr.mxu0 0.0
      %1595 = vmatpush2.msra.mxu0 0.0
      %1596 = vmatprep.subr.mxu0 0.0
      %1597 = vmatpush2.msra.mxu0 0.0
      %1598 = vmatprep.subr.mxu0 0.0
      %1599 = vmatpush2.msra.mxu0 0.0
      %1600 = vmatprep.subr.mxu0 0.0
      %1601 = vmatpush2.msra.mxu0 0.0
      %1602 = vmatprep.subr.mxu0 0.0
      %1603 = vmatpush2.msra.mxu0 0.0
      %1604 = vmatprep.subr.mxu0 0.0
      %1605 = vmatpush2.msra.mxu0 0.0
      %1606 = vmatprep.subr.mxu0 0.0
      %1607 = vmatpush2.msra.mxu0 0.0
      %1608 = vmatprep.subr.mxu0 0.0
      %1609 = vmatpush2.msra.mxu0 0.0
      %1610 = vmatprep.mubr.f32.mxu0 0.0
      %1611 = vmatmul.mubr.f32.gmra.mxu0 %v1539
      %v1612 = vpop.f32.mrf.mxu0
      %v1613 = vadd.f32 0.0, %v1612
      %v1614 = vpop.f32.mrf.mxu0
      %v1615 = vadd.f32 0.0, %v1614
      %1616 = vdwg.mxu0
      %v1617 = vadd.f32 %v1543, %v1613
      %v1618 = vxor.u32 %v1617, 2147483648
      %v1619 = vmul.f32 %v1618, 1.442695
      %v1620 = vpow.pop %v1619
      %v1621 = vadd.f32 %v1620, 1.0
      %v1622 = vrcp.pop %v1621
      %v1623 = vmul.f32 1.0, %v1622
      %v1624 = vadd.f32 %v1544, %v1615
      %v1625 = vxor.u32 %v1624, 2147483648
      %v1626 = vmul.f32 %v1625, 1.442695
      %v1627 = vpow.pop %v1626
      %v1628 = vadd.f32 %v1627, 1.0
      %v1629 = vrcp.pop %v1628
      %v1630 = vmul.f32 1.0, %v1629
      %v1631 = vmul.f32 %v1630, %v1539
      %1632 = vmatprep.subr.mxu0 0.0
      %1633 = vmatpush1.msra.mxu0 %v702
      %1634 = vmatprep.subr.mxu0 0.0
      %1635 = vmatpush1.msra.mxu0 %v701
      %1636 = vmatprep.subr.mxu0 0.0
      %1637 = vmatpush1.msra.mxu0 %v700
      %1638 = vmatprep.subr.mxu0 0.0
      %1639 = vmatpush1.msra.mxu0 %v699
      %1640 = vmatprep.subr.mxu0 0.0
      %1641 = vmatpush1.msra.mxu0 %v698
      %1642 = vmatprep.subr.mxu0 0.0
      %1643 = vmatpush1.msra.mxu0 %v697
      %1644 = vmatprep.subr.mxu0 0.0
      %1645 = vmatpush1.msra.mxu0 %v696
      %1646 = vmatprep.subr.mxu0 0.0
      %1647 = vmatpush1.msra.mxu0 %v695
      %1648 = vmatprep.subr.mxu0 0.0
      %1649 = vmatpush1.msra.mxu0 %v694
      %1650 = vmatprep.subr.mxu0 0.0
      %1651 = vmatpush1.msra.mxu0 %v693
      %1652 = vmatprep.subr.mxu0 0.0
      %1653 = vmatpush1.msra.mxu0 %v692
      %1654 = vmatprep.subr.mxu0 0.0
      %1655 = vmatpush1.msra.mxu0 %v691
      %1656 = vmatprep.subr.mxu0 0.0
      %1657 = vmatpush1.msra.mxu0 %v690
      %1658 = vmatprep.subr.mxu0 0.0
      %1659 = vmatpush1.msra.mxu0 %v689
      %1660 = vmatprep.subr.mxu0 0.0
      %1661 = vmatpush1.msra.mxu0 %v688
      %1662 = vmatprep.subr.mxu0 0.0
      %1663 = vmatpush1.msra.mxu0 %v687
      %1664 = vmatprep.subr.mxu0 0.0
      %1665 = vmatpush2.msra.mxu0 0.0
      %1666 = vmatprep.subr.mxu0 0.0
      %1667 = vmatpush2.msra.mxu0 0.0
      %1668 = vmatprep.subr.mxu0 0.0
      %1669 = vmatpush2.msra.mxu0 0.0
      %1670 = vmatprep.subr.mxu0 0.0
      %1671 = vmatpush2.msra.mxu0 0.0
      %1672 = vmatprep.subr.mxu0 0.0
      %1673 = vmatpush2.msra.mxu0 0.0
      %1674 = vmatprep.subr.mxu0 0.0
      %1675 = vmatpush2.msra.mxu0 0.0
      %1676 = vmatprep.subr.mxu0 0.0
      %1677 = vmatpush2.msra.mxu0 0.0
      %1678 = vmatprep.subr.mxu0 0.0
      %1679 = vmatpush2.msra.mxu0 0.0
      %1680 = vmatprep.subr.mxu0 0.0
      %1681 = vmatpush2.msra.mxu0 0.0
      %1682 = vmatprep.subr.mxu0 0.0
      %1683 = vmatpush2.msra.mxu0 0.0
      %1684 = vmatprep.subr.mxu0 0.0
      %1685 = vmatpush2.msra.mxu0 0.0
      %1686 = vmatprep.subr.mxu0 0.0
      %1687 = vmatpush2.msra.mxu0 0.0
      %1688 = vmatprep.subr.mxu0 0.0
      %1689 = vmatpush2.msra.mxu0 0.0
      %1690 = vmatprep.subr.mxu0 0.0
      %1691 = vmatpush2.msra.mxu0 0.0
      %1692 = vmatprep.subr.mxu0 0.0
      %1693 = vmatpush2.msra.mxu0 0.0
      %1694 = vmatprep.subr.mxu0 0.0
      %1695 = vmatpush2.msra.mxu0 0.0
      %1696 = vmatprep.mubr.f32.mxu0 0.0
      %1697 = vmatmul.mubr.f32.gmra.mxu0 %v1631
      %v1698 = vpop.f32.mrf.mxu0
      %v1699 = vadd.f32 0.0, %v1698
      %v1700 = vpop.f32.mrf.mxu0
      %1701 = vdwg.mxu0
      %v1702 = vadd.f32 %v1545, %v1699
      %v1703 = vtanh.pop %v1702
      %v1704 = vmul.f32 %v1623, %v1539
      %v1705 = vsub.f32 1.0, %v1623
      %v1706 = vmul.f32 %v1705, %v1703
      %v1707 = vadd.f32 %v1704, %v1706
      %s1708 = scalar_lea.vmem [#allocation4], 40
      %1709 = vst [vmem:[%s1708] sm:$0xff] %v1707
      %s1710 = scalar_lea.vmem [#allocation3], 144
      %v1711 = vld [vmem:[%s1710] sm:$0xff]
      %v1712 = vld [vmem:[%s1710 + $0x8] sm:$0xff]
      %v1713 = vld [vmem:[%s1710 + $0x10] sm:$0xff]
      %1714 = vmatprep.subr.mxu0 %v686
      %1715 = vmatpush1.msra.mxu0 %v685
      %1716 = vmatprep.subr.mxu0 %v684
      %1717 = vmatpush1.msra.mxu0 %v683
      %1718 = vmatprep.subr.mxu0 %v682
      %1719 = vmatpush1.msra.mxu0 %v681
      %1720 = vmatprep.subr.mxu0 %v680
      %1721 = vmatpush1.msra.mxu0 %v679
      %1722 = vmatprep.subr.mxu0 %v678
      %1723 = vmatpush1.msra.mxu0 %v677
      %1724 = vmatprep.subr.mxu0 %v676
      %1725 = vmatpush1.msra.mxu0 %v675
      %1726 = vmatprep.subr.mxu0 %v674
      %1727 = vmatpush1.msra.mxu0 %v673
      %1728 = vmatprep.subr.mxu0 %v672
      %1729 = vmatpush1.msra.mxu0 %v671
      %1730 = vmatprep.subr.mxu0 %v670
      %1731 = vmatpush1.msra.mxu0 %v669
      %1732 = vmatprep.subr.mxu0 %v668
      %1733 = vmatpush1.msra.mxu0 %v667
      %1734 = vmatprep.subr.mxu0 %v666
      %1735 = vmatpush1.msra.mxu0 %v665
      %1736 = vmatprep.subr.mxu0 %v664
      %1737 = vmatpush1.msra.mxu0 %v663
      %1738 = vmatprep.subr.mxu0 %v662
      %1739 = vmatpush1.msra.mxu0 %v661
      %1740 = vmatprep.subr.mxu0 %v660
      %1741 = vmatpush1.msra.mxu0 %v659
      %1742 = vmatprep.subr.mxu0 %v658
      %1743 = vmatpush1.msra.mxu0 %v657
      %1744 = vmatprep.subr.mxu0 %v656
      %1745 = vmatpush1.msra.mxu0 %v655
      %1746 = vmatprep.subr.mxu0 0.0
      %1747 = vmatpush2.msra.mxu0 0.0
      %1748 = vmatprep.subr.mxu0 0.0
      %1749 = vmatpush2.msra.mxu0 0.0
      %1750 = vmatprep.subr.mxu0 0.0
      %1751 = vmatpush2.msra.mxu0 0.0
      %1752 = vmatprep.subr.mxu0 0.0
      %1753 = vmatpush2.msra.mxu0 0.0
      %1754 = vmatprep.subr.mxu0 0.0
      %1755 = vmatpush2.msra.mxu0 0.0
      %1756 = vmatprep.subr.mxu0 0.0
      %1757 = vmatpush2.msra.mxu0 0.0
      %1758 = vmatprep.subr.mxu0 0.0
      %1759 = vmatpush2.msra.mxu0 0.0
      %1760 = vmatprep.subr.mxu0 0.0
      %1761 = vmatpush2.msra.mxu0 0.0
      %1762 = vmatprep.subr.mxu0 0.0
      %1763 = vmatpush2.msra.mxu0 0.0
      %1764 = vmatprep.subr.mxu0 0.0
      %1765 = vmatpush2.msra.mxu0 0.0
      %1766 = vmatprep.subr.mxu0 0.0
      %1767 = vmatpush2.msra.mxu0 0.0
      %1768 = vmatprep.subr.mxu0 0.0
      %1769 = vmatpush2.msra.mxu0 0.0
      %1770 = vmatprep.subr.mxu0 0.0
      %1771 = vmatpush2.msra.mxu0 0.0
      %1772 = vmatprep.subr.mxu0 0.0
      %1773 = vmatpush2.msra.mxu0 0.0
      %1774 = vmatprep.subr.mxu0 0.0
      %1775 = vmatpush2.msra.mxu0 0.0
      %1776 = vmatprep.subr.mxu0 0.0
      %1777 = vmatpush2.msra.mxu0 0.0
      %1778 = vmatprep.mubr.f32.mxu0 0.0
      %1779 = vmatmul.mubr.f32.gmra.mxu0 %v1707
      %v1780 = vpop.f32.mrf.mxu0
      %v1781 = vadd.f32 0.0, %v1780
      %v1782 = vpop.f32.mrf.mxu0
      %v1783 = vadd.f32 0.0, %v1782
      %1784 = vdwg.mxu0
      %v1785 = vadd.f32 %v1711, %v1781
      %v1786 = vxor.u32 %v1785, 2147483648
      %v1787 = vmul.f32 %v1786, 1.442695
      %v1788 = vpow.pop %v1787
      %v1789 = vadd.f32 %v1788, 1.0
      %v1790 = vrcp.pop %v1789
      %v1791 = vmul.f32 1.0, %v1790
      %v1792 = vadd.f32 %v1712, %v1783
      %v1793 = vxor.u32 %v1792, 2147483648
      %v1794 = vmul.f32 %v1793, 1.442695
      %v1795 = vpow.pop %v1794
      %v1796 = vadd.f32 %v1795, 1.0
      %v1797 = vrcp.pop %v1796
      %v1798 = vmul.f32 1.0, %v1797
      %v1799 = vmul.f32 %v1798, %v1707
      %1800 = vmatprep.subr.mxu0 0.0
      %1801 = vmatpush1.msra.mxu0 %v702
      %1802 = vmatprep.subr.mxu0 0.0
      %1803 = vmatpush1.msra.mxu0 %v701
      %1804 = vmatprep.subr.mxu0 0.0
      %1805 = vmatpush1.msra.mxu0 %v700
      %1806 = vmatprep.subr.mxu0 0.0
      %1807 = vmatpush1.msra.mxu0 %v699
      %1808 = vmatprep.subr.mxu0 0.0
      %1809 = vmatpush1.msra.mxu0 %v698
      %1810 = vmatprep.subr.mxu0 0.0
      %1811 = vmatpush1.msra.mxu0 %v697
      %1812 = vmatprep.subr.mxu0 0.0
      %1813 = vmatpush1.msra.mxu0 %v696
      %1814 = vmatprep.subr.mxu0 0.0
      %1815 = vmatpush1.msra.mxu0 %v695
      %1816 = vmatprep.subr.mxu0 0.0
      %1817 = vmatpush1.msra.mxu0 %v694
      %1818 = vmatprep.subr.mxu0 0.0
      %1819 = vmatpush1.msra.mxu0 %v693
      %1820 = vmatprep.subr.mxu0 0.0
      %1821 = vmatpush1.msra.mxu0 %v692
      %1822 = vmatprep.subr.mxu0 0.0
      %1823 = vmatpush1.msra.mxu0 %v691
      %1824 = vmatprep.subr.mxu0 0.0
      %1825 = vmatpush1.msra.mxu0 %v690
      %1826 = vmatprep.subr.mxu0 0.0
      %1827 = vmatpush1.msra.mxu0 %v689
      %1828 = vmatprep.subr.mxu0 0.0
      %1829 = vmatpush1.msra.mxu0 %v688
      %1830 = vmatprep.subr.mxu0 0.0
      %1831 = vmatpush1.msra.mxu0 %v687
      %1832 = vmatprep.subr.mxu0 0.0
      %1833 = vmatpush2.msra.mxu0 0.0
      %1834 = vmatprep.subr.mxu0 0.0
      %1835 = vmatpush2.msra.mxu0 0.0
      %1836 = vmatprep.subr.mxu0 0.0
      %1837 = vmatpush2.msra.mxu0 0.0
      %1838 = vmatprep.subr.mxu0 0.0
      %1839 = vmatpush2.msra.mxu0 0.0
      %1840 = vmatprep.subr.mxu0 0.0
      %1841 = vmatpush2.msra.mxu0 0.0
      %1842 = vmatprep.subr.mxu0 0.0
      %1843 = vmatpush2.msra.mxu0 0.0
      %1844 = vmatprep.subr.mxu0 0.0
      %1845 = vmatpush2.msra.mxu0 0.0
      %1846 = vmatprep.subr.mxu0 0.0
      %1847 = vmatpush2.msra.mxu0 0.0
      %1848 = vmatprep.subr.mxu0 0.0
      %1849 = vmatpush2.msra.mxu0 0.0
      %1850 = vmatprep.subr.mxu0 0.0
      %1851 = vmatpush2.msra.mxu0 0.0
      %1852 = vmatprep.subr.mxu0 0.0
      %1853 = vmatpush2.msra.mxu0 0.0
      %1854 = vmatprep.subr.mxu0 0.0
      %1855 = vmatpush2.msra.mxu0 0.0
      %1856 = vmatprep.subr.mxu0 0.0
      %1857 = vmatpush2.msra.mxu0 0.0
      %1858 = vmatprep.subr.mxu0 0.0
      %1859 = vmatpush2.msra.mxu0 0.0
      %1860 = vmatprep.subr.mxu0 0.0
      %1861 = vmatpush2.msra.mxu0 0.0
      %1862 = vmatprep.subr.mxu0 0.0
      %1863 = vmatpush2.msra.mxu0 0.0
      %1864 = vmatprep.mubr.f32.mxu0 0.0
      %1865 = vmatmul.mubr.f32.gmra.mxu0 %v1799
      %v1866 = vpop.f32.mrf.mxu0
      %v1867 = vadd.f32 0.0, %v1866
      %v1868 = vpop.f32.mrf.mxu0
      %1869 = vdwg.mxu0
      %v1870 = vadd.f32 %v1713, %v1867
      %v1871 = vtanh.pop %v1870
      %v1872 = vmul.f32 %v1791, %v1707
      %v1873 = vsub.f32 1.0, %v1791
      %v1874 = vmul.f32 %v1873, %v1871
      %v1875 = vadd.f32 %v1872, %v1874
      %s1876 = scalar_lea.vmem [#allocation4], 48
      %1877 = vst [vmem:[%s1876] sm:$0xff] %v1875
      %s1878 = scalar_lea.vmem [#allocation3], 168
      %v1879 = vld [vmem:[%s1878] sm:$0xff]
      %v1880 = vld [vmem:[%s1878 + $0x8] sm:$0xff]
      %v1881 = vld [vmem:[%s1878 + $0x10] sm:$0xff]
      %1882 = vmatprep.subr.mxu0 %v686
      %1883 = vmatpush1.msra.mxu0 %v685
      %1884 = vmatprep.subr.mxu0 %v684
      %1885 = vmatpush1.msra.mxu0 %v683
      %1886 = vmatprep.subr.mxu0 %v682
      %1887 = vmatpush1.msra.mxu0 %v681
      %1888 = vmatprep.subr.mxu0 %v680
      %1889 = vmatpush1.msra.mxu0 %v679
      %1890 = vmatprep.subr.mxu0 %v678
      %1891 = vmatpush1.msra.mxu0 %v677
      %1892 = vmatprep.subr.mxu0 %v676
      %1893 = vmatpush1.msra.mxu0 %v675
      %1894 = vmatprep.subr.mxu0 %v674
      %1895 = vmatpush1.msra.mxu0 %v673
      %1896 = vmatprep.subr.mxu0 %v672
      %1897 = vmatpush1.msra.mxu0 %v671
      %1898 = vmatprep.subr.mxu0 %v670
      %1899 = vmatpush1.msra.mxu0 %v669
      %1900 = vmatprep.subr.mxu0 %v668
      %1901 = vmatpush1.msra.mxu0 %v667
      %1902 = vmatprep.subr.mxu0 %v666
      %1903 = vmatpush1.msra.mxu0 %v665
      %1904 = vmatprep.subr.mxu0 %v664
      %1905 = vmatpush1.msra.mxu0 %v663
      %1906 = vmatprep.subr.mxu0 %v662
      %1907 = vmatpush1.msra.mxu0 %v661
      %1908 = vmatprep.subr.mxu0 %v660
      %1909 = vmatpush1.msra.mxu0 %v659
      %1910 = vmatprep.subr.mxu0 %v658
      %1911 = vmatpush1.msra.mxu0 %v657
      %1912 = vmatprep.subr.mxu0 %v656
      %1913 = vmatpush1.msra.mxu0 %v655
      %1914 = vmatprep.subr.mxu0 0.0
      %1915 = vmatpush2.msra.mxu0 0.0
      %1916 = vmatprep.subr.mxu0 0.0
      %1917 = vmatpush2.msra.mxu0 0.0
      %1918 = vmatprep.subr.mxu0 0.0
      %1919 = vmatpush2.msra.mxu0 0.0
      %1920 = vmatprep.subr.mxu0 0.0
      %1921 = vmatpush2.msra.mxu0 0.0
      %1922 = vmatprep.subr.mxu0 0.0
      %1923 = vmatpush2.msra.mxu0 0.0
      %1924 = vmatprep.subr.mxu0 0.0
      %1925 = vmatpush2.msra.mxu0 0.0
      %1926 = vmatprep.subr.mxu0 0.0
      %1927 = vmatpush2.msra.mxu0 0.0
      %1928 = vmatprep.subr.mxu0 0.0
      %1929 = vmatpush2.msra.mxu0 0.0
      %1930 = vmatprep.subr.mxu0 0.0
      %1931 = vmatpush2.msra.mxu0 0.0
      %1932 = vmatprep.subr.mxu0 0.0
      %1933 = vmatpush2.msra.mxu0 0.0
      %1934 = vmatprep.subr.mxu0 0.0
      %1935 = vmatpush2.msra.mxu0 0.0
      %1936 = vmatprep.subr.mxu0 0.0
      %1937 = vmatpush2.msra.mxu0 0.0
      %1938 = vmatprep.subr.mxu0 0.0
      %1939 = vmatpush2.msra.mxu0 0.0
      %1940 = vmatprep.subr.mxu0 0.0
      %1941 = vmatpush2.msra.mxu0 0.0
      %1942 = vmatprep.subr.mxu0 0.0
      %1943 = vmatpush2.msra.mxu0 0.0
      %1944 = vmatprep.subr.mxu0 0.0
      %1945 = vmatpush2.msra.mxu0 0.0
      %1946 = vmatprep.mubr.f32.mxu0 0.0
      %1947 = vmatmul.mubr.f32.gmra.mxu0 %v1875
      %v1948 = vpop.f32.mrf.mxu0
      %v1949 = vadd.f32 0.0, %v1948
      %v1950 = vpop.f32.mrf.mxu0
      %v1951 = vadd.f32 0.0, %v1950
      %1952 = vdwg.mxu0
      %v1953 = vadd.f32 %v1879, %v1949
      %v1954 = vxor.u32 %v1953, 2147483648
      %v1955 = vmul.f32 %v1954, 1.442695
      %v1956 = vpow.pop %v1955
      %v1957 = vadd.f32 %v1956, 1.0
      %v1958 = vrcp.pop %v1957
      %v1959 = vmul.f32 1.0, %v1958
      %v1960 = vadd.f32 %v1880, %v1951
      %v1961 = vxor.u32 %v1960, 2147483648
      %v1962 = vmul.f32 %v1961, 1.442695
      %v1963 = vpow.pop %v1962
      %v1964 = vadd.f32 %v1963, 1.0
      %v1965 = vrcp.pop %v1964
      %v1966 = vmul.f32 1.0, %v1965
      %v1967 = vmul.f32 %v1966, %v1875
      %1968 = vmatprep.subr.mxu0 0.0
      %1969 = vmatpush1.msra.mxu0 %v702
      %1970 = vmatprep.subr.mxu0 0.0
      %1971 = vmatpush1.msra.mxu0 %v701
      %1972 = vmatprep.subr.mxu0 0.0
      %1973 = vmatpush1.msra.mxu0 %v700
      %1974 = vmatprep.subr.mxu0 0.0
      %1975 = vmatpush1.msra.mxu0 %v699
      %1976 = vmatprep.subr.mxu0 0.0
      %1977 = vmatpush1.msra.mxu0 %v698
      %1978 = vmatprep.subr.mxu0 0.0
      %1979 = vmatpush1.msra.mxu0 %v697
      %1980 = vmatprep.subr.mxu0 0.0
      %1981 = vmatpush1.msra.mxu0 %v696
      %1982 = vmatprep.subr.mxu0 0.0
      %1983 = vmatpush1.msra.mxu0 %v695
      %1984 = vmatprep.subr.mxu0 0.0
      %1985 = vmatpush1.msra.mxu0 %v694
      %1986 = vmatprep.subr.mxu0 0.0
      %1987 = vmatpush1.msra.mxu0 %v693
      %1988 = vmatprep.subr.mxu0 0.0
      %1989 = vmatpush1.msra.mxu0 %v692
      %1990 = vmatprep.subr.mxu0 0.0
      %1991 = vmatpush1.msra.mxu0 %v691
      %1992 = vmatprep.subr.mxu0 0.0
      %1993 = vmatpush1.msra.mxu0 %v690
      %1994 = vmatprep.subr.mxu0 0.0
      %1995 = vmatpush1.msra.mxu0 %v689
      %1996 = vmatprep.subr.mxu0 0.0
      %1997 = vmatpush1.msra.mxu0 %v688
      %1998 = vmatprep.subr.mxu0 0.0
      %1999 = vmatpush1.msra.mxu0 %v687
      %2000 = vmatprep.subr.mxu0 0.0
      %2001 = vmatpush2.msra.mxu0 0.0
      %2002 = vmatprep.subr.mxu0 0.0
      %2003 = vmatpush2.msra.mxu0 0.0
      %2004 = vmatprep.subr.mxu0 0.0
      %2005 = vmatpush2.msra.mxu0 0.0
      %2006 = vmatprep.subr.mxu0 0.0
      %2007 = vmatpush2.msra.mxu0 0.0
      %2008 = vmatprep.subr.mxu0 0.0
      %2009 = vmatpush2.msra.mxu0 0.0
      %2010 = vmatprep.subr.mxu0 0.0
      %2011 = vmatpush2.msra.mxu0 0.0
      %2012 = vmatprep.subr.mxu0 0.0
      %2013 = vmatpush2.msra.mxu0 0.0
      %2014 = vmatprep.subr.mxu0 0.0
      %2015 = vmatpush2.msra.mxu0 0.0
      %2016 = vmatprep.subr.mxu0 0.0
      %2017 = vmatpush2.msra.mxu0 0.0
      %2018 = vmatprep.subr.mxu0 0.0
      %2019 = vmatpush2.msra.mxu0 0.0
      %2020 = vmatprep.subr.mxu0 0.0
      %2021 = vmatpush2.msra.mxu0 0.0
      %2022 = vmatprep.subr.mxu0 0.0
      %2023 = vmatpush2.msra.mxu0 0.0
      %2024 = vmatprep.subr.mxu0 0.0
      %2025 = vmatpush2.msra.mxu0 0.0
      %2026 = vmatprep.subr.mxu0 0.0
      %2027 = vmatpush2.msra.mxu0 0.0
      %2028 = vmatprep.subr.mxu0 0.0
      %2029 = vmatpush2.msra.mxu0 0.0
      %2030 = vmatprep.subr.mxu0 0.0
      %2031 = vmatpush2.msra.mxu0 0.0
      %2032 = vmatprep.mubr.f32.mxu0 0.0
      %2033 = vmatmul.mubr.f32.gmra.mxu0 %v1967
      %v2034 = vpop.f32.mrf.mxu0
      %v2035 = vadd.f32 0.0, %v2034
      %v2036 = vpop.f32.mrf.mxu0
      %2037 = vdwg.mxu0
      %v2038 = vadd.f32 %v1881, %v2035
      %v2039 = vtanh.pop %v2038
      %v2040 = vmul.f32 %v1959, %v1875
      %v2041 = vsub.f32 1.0, %v1959
      %v2042 = vmul.f32 %v2041, %v2039
      %v2043 = vadd.f32 %v2040, %v2042
      %s2044 = scalar_lea.vmem [#allocation4], 56
      %2045 = vst [vmem:[%s2044] sm:$0xff] %v2043
      %2046 = vst [vmem:[#allocation2] sm:$0xff] %v2043
      %p2047 = scmp.eq.s32.totalorder %s21, 1
      // Predicated region
      $region57: #{multilayer_gru_forward.3} parent=51 // pred_check
        %p2048 = pneg %p2047
      $region58: #{multilayer_gru_forward.3} parent=51 // pred_check_branch
        %2050 = sbr.rel (%p2048) target = $region60
      $region59: #{multilayer_gru_forward.3} parent=51 // pred_region
        %2051 = vst [vmem:[%s9] sm:$0xff] %v2043
      $region60: #{multilayer_gru_forward.3} parent=51 // pred_fallthru
        _
      %v2052 = vld [vmem:[#allocation4] sm:$0xff]
      %v2053 = vld [vmem:[#allocation4 + $0x8] sm:$0xff]
      %v2054 = vld [vmem:[#allocation4 + $0x10] sm:$0xff]
      %v2055 = vld [vmem:[#allocation4 + $0x18] sm:$0xff]
      %v2056 = vld [vmem:[#allocation4 + $0x20] sm:$0xff]
      %v2057 = vld [vmem:[#allocation4 + $0x28] sm:$0xff]
      %v2058 = vld [vmem:[#allocation4 + $0x30] sm:$0xff]
      %v2059 = vld [vmem:[#allocation4 + $0x38] sm:$0xff]
      %v2060 = vld [vmem:[%s6] sm:$0xff]
      %v2061 = vld [vmem:[%s6 + $0x8] sm:$0xff]
      %v2062 = vld [vmem:[%s6 + $0x10] sm:$0xff]
      %v2063 = vld [vmem:[%s6 + $0x18] sm:$0xff]
      %v2064 = vld [vmem:[%s6 + $0x20] sm:$0xff]
      %v2065 = vld [vmem:[%s6 + $0x28] sm:$0xff]
      %v2066 = vld [vmem:[%s6 + $0x30] sm:$0xff]
      %v2067 = vld [vmem:[%s6 + $0x38] sm:$0xff]
      %v2068 = vld [vmem:[%s6 + $0x40] sm:$0xff]
      %v2069 = vld [vmem:[%s6 + $0x48] sm:$0xff]
      %v2070 = vld [vmem:[%s6 + $0x50] sm:$0xff]
      %v2071 = vld [vmem:[%s6 + $0x58] sm:$0xff]
      %v2072 = vld [vmem:[%s6 + $0x60] sm:$0xff]
      %v2073 = vld [vmem:[%s6 + $0x68] sm:$0xff]
      %v2074 = vld [vmem:[%s6 + $0x70] sm:$0xff]
      %v2075 = vld [vmem:[%s6 + $0x78] sm:$0xff]
      %v2076 = vld [vmem:[%s7] sm:$0x1]
      %v2078 = vlaneseq
      %v2079 = vshrl.u32 %v2078, 7
      %v2080 = vsub.s32 0, %v2079
      %v2081 = vrot.slane %v2076, %v2080
      %2083 = vmatprep.subr.mxu0 0.0
      %2084 = vmatpush1.msra.mxu0 %v2075
      %2085 = vmatprep.subr.mxu0 0.0
      %2086 = vmatpush1.msra.mxu0 %v2074
      %2087 = vmatprep.subr.mxu0 0.0
      %2088 = vmatpush1.msra.mxu0 %v2073
      %2089 = vmatprep.subr.mxu0 0.0
      %2090 = vmatpush1.msra.mxu0 %v2072
      %2091 = vmatprep.subr.mxu0 0.0
      %2092 = vmatpush1.msra.mxu0 %v2071
      %2093 = vmatprep.subr.mxu0 0.0
      %2094 = vmatpush1.msra.mxu0 %v2070
      %2095 = vmatprep.subr.mxu0 0.0
      %2096 = vmatpush1.msra.mxu0 %v2069
      %2097 = vmatprep.subr.mxu0 0.0
      %2098 = vmatpush1.msra.mxu0 %v2068
      %2099 = vmatprep.subr.mxu0 0.0
      %2100 = vmatpush1.msra.mxu0 %v2067
      %2101 = vmatprep.subr.mxu0 0.0
      %2102 = vmatpush1.msra.mxu0 %v2066
      %2103 = vmatprep.subr.mxu0 0.0
      %2104 = vmatpush1.msra.mxu0 %v2065
      %2105 = vmatprep.subr.mxu0 0.0
      %2106 = vmatpush1.msra.mxu0 %v2064
      %2107 = vmatprep.subr.mxu0 0.0
      %2108 = vmatpush1.msra.mxu0 %v2063
      %2109 = vmatprep.subr.mxu0 0.0
      %2110 = vmatpush1.msra.mxu0 %v2062
      %2111 = vmatprep.subr.mxu0 0.0
      %2112 = vmatpush1.msra.mxu0 %v2061
      %2113 = vmatprep.subr.mxu0 0.0
      %2114 = vmatpush1.msra.mxu0 %v2060
      %2115 = vmatprep.subr.mxu0 0.0
      %2116 = vmatpush2.msra.mxu0 0.0
      %2117 = vmatprep.subr.mxu0 0.0
      %2118 = vmatpush2.msra.mxu0 0.0
      %2119 = vmatprep.subr.mxu0 0.0
      %2120 = vmatpush2.msra.mxu0 0.0
      %2121 = vmatprep.subr.mxu0 0.0
      %2122 = vmatpush2.msra.mxu0 0.0
      %2123 = vmatprep.subr.mxu0 0.0
      %2124 = vmatpush2.msra.mxu0 0.0
      %2125 = vmatprep.subr.mxu0 0.0
      %2126 = vmatpush2.msra.mxu0 0.0
      %2127 = vmatprep.subr.mxu0 0.0
      %2128 = vmatpush2.msra.mxu0 0.0
      %2129 = vmatprep.subr.mxu0 0.0
      %2130 = vmatpush2.msra.mxu0 0.0
      %2131 = vmatprep.subr.mxu0 0.0
      %2132 = vmatpush2.msra.mxu0 0.0
      %2133 = vmatprep.subr.mxu0 0.0
      %2134 = vmatpush2.msra.mxu0 0.0
      %2135 = vmatprep.subr.mxu0 0.0
      %2136 = vmatpush2.msra.mxu0 0.0
      %2137 = vmatprep.subr.mxu0 0.0
      %2138 = vmatpush2.msra.mxu0 0.0
      %2139 = vmatprep.subr.mxu0 0.0
      %2140 = vmatpush2.msra.mxu0 0.0
      %2141 = vmatprep.subr.mxu0 0.0
      %2142 = vmatpush2.msra.mxu0 0.0
      %2143 = vmatprep.subr.mxu0 0.0
      %2144 = vmatpush2.msra.mxu0 0.0
      %2145 = vmatprep.subr.mxu0 0.0
      %2146 = vmatpush2.msra.mxu0 0.0
      %2147 = vmatprep.mubr.f32.mxu0 0.0
      %2148 = vmatmul.mubr.f32.gmra.mxu0 %v2052
      %v2149 = vpop.f32.mrf.mxu0
      %v2150 = vadd.f32 %v2081, %v2149
      %v2151 = vpop.f32.mrf.mxu0
      %2152 = vmatprep.mubr.f32.mxu0 0.0
      %2153 = vmatmul.mubr.f32.gmra.mxu0 %v2053
      %v2154 = vpop.f32.mrf.mxu0
      %v2155 = vadd.f32 %v2081, %v2154
      %v2156 = vpop.f32.mrf.mxu0
      %2157 = vmatprep.mubr.f32.mxu0 0.0
      %2158 = vmatmul.mubr.f32.gmra.mxu0 %v2054
      %v2159 = vpop.f32.mrf.mxu0
      %v2160 = vadd.f32 %v2081, %v2159
      %v2161 = vpop.f32.mrf.mxu0
      %2162 = vmatprep.mubr.f32.mxu0 0.0
      %2163 = vmatmul.mubr.f32.gmra.mxu0 %v2055
      %v2164 = vpop.f32.mrf.mxu0
      %v2165 = vadd.f32 %v2081, %v2164
      %v2166 = vpop.f32.mrf.mxu0
      %2167 = vmatprep.mubr.f32.mxu0 0.0
      %2168 = vmatmul.mubr.f32.gmra.mxu0 %v2056
      %v2169 = vpop.f32.mrf.mxu0
      %v2170 = vadd.f32 %v2081, %v2169
      %v2171 = vpop.f32.mrf.mxu0
      %2172 = vmatprep.mubr.f32.mxu0 0.0
      %2173 = vmatmul.mubr.f32.gmra.mxu0 %v2057
      %v2174 = vpop.f32.mrf.mxu0
      %v2175 = vadd.f32 %v2081, %v2174
      %v2176 = vpop.f32.mrf.mxu0
      %2177 = vmatprep.mubr.f32.mxu0 0.0
      %2178 = vmatmul.mubr.f32.gmra.mxu0 %v2058
      %v2179 = vpop.f32.mrf.mxu0
      %v2180 = vadd.f32 %v2081, %v2179
      %v2181 = vpop.f32.mrf.mxu0
      %2182 = vmatprep.mubr.f32.mxu0 0.0
      %2183 = vmatmul.mubr.f32.gmra.mxu0 %v2059
      %v2184 = vpop.f32.mrf.mxu0
      %v2185 = vadd.f32 %v2081, %v2184
      %v2186 = vpop.f32.mrf.mxu0
      %2187 = vdwg.mxu0
      %2188 = vst [vmem:[%s332] sm:$0xff] %v2150
      %2189 = vst [vmem:[%s332 + $0x8] sm:$0xff] %v2155
      %2190 = vst [vmem:[%s332 + $0x10] sm:$0xff] %v2160
      %2191 = vst [vmem:[%s332 + $0x18] sm:$0xff] %v2165
      %2192 = vst [vmem:[%s332 + $0x20] sm:$0xff] %v2170
      %2193 = vst [vmem:[%s332 + $0x28] sm:$0xff] %v2175
      %2194 = vst [vmem:[%s332 + $0x30] sm:$0xff] %v2180
      %2195 = vst [vmem:[%s332 + $0x38] sm:$0xff] %v2185
      %s2196 = smul.u32 8, %s21
      %p2197 = scmp.lt.s32.totalorder %s2196, 15
      %s2198 = scalar_select %p2197, %s2196, 15
      %s2199 = smul.addr %s2198, 8
      %s2200 = scalar_lea.vmem %s8, %s2199
      // Predicated region
      $region61: #{multilayer_gru_forward.3} parent=51 // pred_check
        %p2201 = pneg %p212
      $region62: #{multilayer_gru_forward.3} parent=51 // pred_check_branch
        %2203 = sbr.rel (%p2201) target = $region64
      $region63: #{multilayer_gru_forward.3} parent=51 // pred_region
        %s2204 = smul.u32 8, %s21
      $region64: #{multilayer_gru_forward.3} parent=51 // pred_fallthru
        _
      // Predicated region
      $region65: #{multilayer_gru_forward.3} parent=51 // pred_check
        %p2205 = pneg %p233
      $region66: #{multilayer_gru_forward.3} parent=51 // pred_check_branch
        %2207 = sbr.rel (%p2205) target = $region68
      $region67: #{multilayer_gru_forward.3} parent=51 // pred_region
        _
      $region68: #{multilayer_gru_forward.3} parent=51 // pred_fallthru
        _
      // Predicated region
      $region69: #{multilayer_gru_forward.3} parent=51 // pred_check
        %p2208 = pneg %p233
      $region70: #{multilayer_gru_forward.3} parent=51 // pred_check_branch
        %2210 = sbr.rel (%p2208) target = $region72
      $region71: #{multilayer_gru_forward.3} parent=51 // pred_region
        _
      $region72: #{multilayer_gru_forward.3} parent=51 // pred_fallthru
        _
    $region52: #{multilayer_gru_forward.3} parent=5 // pred_fallthru
      _
    %p2211 = scmp.le.s32.totalorder 2, %s16
    // Predicated region
    $region73: #{multilayer_gru_forward.3} parent=5 // pred_check
      %p2212 = pneg %p2211
    $region74: #{multilayer_gru_forward.3} parent=5 // pred_check_branch
      %2214 = sbr.rel (%p2212) target = $region76
    $region75: #{multilayer_gru_forward.3} parent=5 // pred_region
      %s2215 = ssub.s32 %s16, 2
      // Predicated region
      $region77: #{multilayer_gru_forward.3} parent=75 // pred_check
        %p2216 = pneg %p218
      $region78: #{multilayer_gru_forward.3} parent=75 // pred_check_branch
        %2218 = sbr.rel (%p2216) target = $region80
      $region79: #{multilayer_gru_forward.3} parent=75 // pred_region
        %s2219 = smul.u32 8, %s22
        %p2220 = scmp.lt.s32.totalorder %s2219, 15
        %s2221 = scalar_select %p2220, %s2219, 15
        %s2222 = smul.addr %s2221, 8
        %s2223 = scalar_lea.vmem %s8, %s2222
      $region80: #{multilayer_gru_forward.3} parent=75 // pred_fallthru
        _
    $region76: #{multilayer_gru_forward.3} parent=5 // pred_fallthru
      _
  $region6: #{multilayer_gru_forward.3} parent=0 // loop_footer
    %s20 = sadd.s32 1, %s16
  $region7: #{multilayer_gru_forward.3} parent=0 // loop_footer_branch
    %15 = sbr.rel target = $region3
  $region8: #{multilayer_gru_forward.3} parent=0 // loop_exit
    _

</llo_original>
